<compile_context>
chip_gen: v7x
topology: tpu7x:2x2x1
jax: 0.10.0
libtpu: 0.0.40
codegen_flags: <defaults>
</compile_context>

<pallas_src>
import functools

import jax
import jax.numpy as jnp
import numpy as np
from jax import lax
from jax.experimental import pallas as pl
from jax.experimental.pallas import tpu as pltpu


def _round_up(x, m):
    return ((x + m - 1) // m) * m


# ----------------------------------------------------------------------------
# Fused decoder kernel:
#   (encoder head: Linear -> Linear -> BatchNorm1d) + multi-layer LSTM over the
#   whole [features ; embeddings] sequence.  Outputs the last layer's hidden
#   states for all (T+1)*Bp time-major rows (bf16).
# ----------------------------------------------------------------------------
def decoder_kernel(*refs, num_layers, batch, bpad, nsteps, hdim):
    (pooled_ref, pw_ref, pb_ref, ew_ref, eb_ref, gamma_ref, beta_ref,
     emb_ref) = refs[:8]
    idx = 8
    layers = []
    for _ in range(num_layers):
        layers.append((refs[idx], refs[idx + 1], refs[idx + 2]))
        idx += 3
    h_out_ref = refs[idx]                  # [(T+1)*Bp, H] bf16 output
    gx, h_all = refs[idx + 1], refs[idx + 2]

    # --- CNNModel head: Linear -> Linear -> BatchNorm1d (training-mode stats) ---
    x = pooled_ref[...]                                                  # [Bp, C]
    r = jnp.dot(x, pw_ref[...], preferred_element_type=jnp.float32) + pb_ref[...]
    e = jnp.dot(r, ew_ref[...], preferred_element_type=jnp.float32) + eb_ref[...]

    # Batch statistics over the real rows only (biased variance, eps=1e-5);
    # padded rows (>= batch) excluded via mask.
    row = lax.broadcasted_iota(jnp.int32, e.shape, 0)
    mask = (row < batch).astype(jnp.float32)
    inv_b = 1.0 / float(batch)
    mean = jnp.sum(e * mask, axis=0, keepdims=True) * inv_b
    diff = (e - mean) * mask
    var = jnp.sum(diff * diff, axis=0, keepdims=True) * inv_b
    feat = ((e - mean) * lax.rsqrt(var + 1e-5)) * gamma_ref[...] + beta_ref[...]
    feat_bf = feat.astype(jnp.bfloat16)                                  # [Bp, E]

    # --- LSTM layers (all layers / timesteps stay resident in VMEM) ---
    # NOTE: hdim must be a multiple of 128 so the four gate slices stay
    #       lane-tile aligned (no per-step XLU shuffles on the serial path).
    for l, (wih_ref, whh_ref, b_ref) in enumerate(layers):
        wih = wih_ref[...]                 # bf16 [in, 4H], loaded once
        b = b_ref[...]                     # f32  [1, 4H]  (b_ih + b_hh)

        # Hoisted input projection: whole sequence in one/two batched matmuls,
        # written straight into gx (no [features ; embeddings] copy).
        if l == 0:
            gx[0:bpad, :] = (
                jnp.dot(feat_bf, wih, preferred_element_type=jnp.float32) + b)
            gx[bpad:nsteps * bpad, :] = (
                jnp.dot(emb_ref[...], wih, preferred_element_type=jnp.float32) + b)
        else:
            gx[...] = (
                jnp.dot(h_all[...], wih, preferred_element_type=jnp.float32) + b)

        whh = whh_ref[...]                 # bf16 [H, 4H], resident across steps
        dst = h_out_ref if l == num_layers - 1 else h_all

        def step(t, carry, whh=whh, dst=dst):
            h, c = carry                   # f32 carries for gate math
            off = pl.multiple_of(t * bpad, bpad)
            g = gx[pl.ds(off, bpad), :] + jnp.dot(
                h.astype(jnp.bfloat16), whh, preferred_element_type=jnp.float32)
            # PyTorch gate order: i, f, g, o
            i = jax.nn.sigmoid(g[:, 0 * hdim:1 * hdim])
            f = jax.nn.sigmoid(g[:, 1 * hdim:2 * hdim])
            gg = jnp.tanh(g[:, 2 * hdim:3 * hdim])
            o = jax.nn.sigmoid(g[:, 3 * hdim:4 * hdim])
            c = f * c + i * gg
            h = o * jnp.tanh(c)
            dst[pl.ds(off, bpad), :] = h.astype(dst.dtype)
            return (h, c)

        h0 = jnp.zeros((bpad, hdim), jnp.float32)
        c0 = jnp.zeros((bpad, hdim), jnp.float32)
        lax.fori_loop(0, nsteps, step, (h0, c0), unroll=True)


def decode(pooled_pad, emb_flat, params, batch, nsteps, hdim):
    bpad = pooled_pad.shape[0]
    num_layers = len(params["lstm"])
    rows = nsteps * bpad

    args = [pooled_pad,
            params["proj_w_t"], params["proj_b"].reshape(1, -1),
            params["enc_w_t"], params["enc_b"].reshape(1, -1),
            params["bn_gamma"].reshape(1, -1), params["bn_beta"].reshape(1, -1),
            emb_flat]
    for layer in params["lstm"]:
        args += [layer["wih_t"], layer["whh_t"], layer["b"].reshape(1, -1)]

    return pl.pallas_call(
        functools.partial(decoder_kernel, num_layers=num_layers, batch=batch,
                          bpad=bpad, nsteps=nsteps, hdim=hdim),
        out_shape=jax.ShapeDtypeStruct((rows, hdim), jnp.bfloat16),
        scratch_shapes=[
            pltpu.VMEM((rows, 4 * hdim), jnp.float32),    # gx (hoisted gates)
            pltpu.VMEM((rows, hdim), jnp.bfloat16),       # h_all (layer output)
        ],
    )(*args)


# ----------------------------------------------------------------------------
# Output projection on the packed (valid) rows only, tiled over the vocab axis.
# ----------------------------------------------------------------------------
def proj_kernel(h_ref, w_ref, b_ref, o_ref):
    o_ref[...] = (jnp.dot(h_ref[...], w_ref[...],
                          preferred_element_type=jnp.float32)
                  + b_ref[...]).astype(o_ref.dtype)


def project(h_packed, w_t, b_row):
    rpad, hdim = h_packed.shape
    vocab = w_t.shape[1]
    tn = 128
    for cand in (1024, 512, 256, 128):
        if vocab % cand == 0:
            tn = cand
            break
    else:
        tn = vocab  # TODO(synk): pad vocab to a multiple of 128 for odd sizes
    grid = (vocab // tn,)
    return pl.pallas_call(
        proj_kernel,
        out_shape=jax.ShapeDtypeStruct((rpad, vocab), jnp.float32),
        grid_spec=pltpu.PrefetchScalarGridSpec(
            num_scalar_prefetch=0, grid=grid,
            in_specs=[pl.BlockSpec((rpad, hdim), lambda j: (0, 0)),
                      pl.BlockSpec((hdim, tn), lambda j: (0, j)),
                      pl.BlockSpec((1, tn), lambda j: (0, j))],
            out_specs=pl.BlockSpec((rpad, tn), lambda j: (0, j))),
        compiler_params=pltpu.CompilerParams(
            dimension_semantics=("parallel",)),
    )(h_packed, w_t, b_row)


# ----------------------------------------------------------------------------
# Model wrapper
# ----------------------------------------------------------------------------
def conv_lstm_forward(params, images, caps, lens_list):
    """Forward pass of CONV_LSTM_Model.

    images: [B, C, H, W] float32 (NCHW), caps: [B, T] int32,
    lens_list: python list of ints, sorted descending, each <= T+1.
    Returns packed-sequence logits [sum(lens), vocab] (float32).
    """
    B = images.shape[0]
    T = caps.shape[1]
    bpad = max(16, _round_up(B, 16))       # full bf16 sublane packing
    E = params["enc_w_t"].shape[1]
    Hd = params["out_w_t"].shape[0]
    nsteps = T + 1

    # --- CNNModel.forward ---
    # TODO(synk): resnet152 backbone stand-in: global average pool + projection
    #             (projection runs inside the fused kernel).
    pooled = jnp.mean(images, axis=(2, 3))                                # [B, C]
    pooled_pad = jnp.zeros((bpad, pooled.shape[1]), jnp.float32).at[:B].set(pooled)

    # --- LSTMModel.forward: embedding lookup, time-major rows (bf16) ---
    # TODO(synk): at large T*B move this gather into the kernel via
    #             PrefetchScalarGridSpec + pl.Element row gather.
    caps_pad = jnp.zeros((bpad, T), jnp.int32).at[:B].set(caps)           # [Bp, T]
    emb_tm = jnp.take(params["embed"], caps_pad.T, axis=0)                # [T, Bp, E]
    emb_flat = emb_tm.reshape(T * bpad, E)                                # bf16 rows

    # Fused encoder head + multi-layer LSTM: last-layer hidden states.
    h_all = decode(pooled_pad, emb_flat, params, B, nsteps, Hd)  # [(T+1)*Bp, H] bf16

    # pack_padded_sequence(batch_first=True) data ordering (static indices),
    # applied to the hidden states BEFORE the output projection.
    # (Valid only for a unidirectional LSTM: padded-time rows never feed
    #  earlier valid rows.)
    rows = np.array(
        [t * bpad + b
         for t in range(max(lens_list))
         for b in range(B) if lens_list[b] > t],
        dtype=np.int32)
    npack = int(rows.shape[0])
    rpad = _round_up(max(npack, 16), 16)
    h_packed = jnp.zeros((rpad, Hd), h_all.dtype).at[:npack].set(h_all[rows])

    # Output projection only over the valid (packed) rows, tiled over vocab.
    logits = project(h_packed, params["out_w_t"], params["out_b"].reshape(1, -1))
    return logits[:npack]                                                 # [sum(lens), V]


# ----------------------------------------------------------------------------
# Deterministic parameter init (MXU-facing weights stored in bf16)
# ----------------------------------------------------------------------------
def init_params(key, in_channels, res_feat, embed_dim, hidden, vocab, num_layers):
    keys = jax.random.split(key, 16)
    k = iter(keys)

    def rnd(shape, scale=0.05, dtype=jnp.float32):
        return (scale * jax.random.normal(next(k), shape)).astype(dtype)

    params = {
        "proj_w_t": rnd((in_channels, res_feat)),
        "proj_b": rnd((res_feat,)),
        "enc_w_t": rnd((res_feat, embed_dim)),
        "enc_b": rnd((embed_dim,)),
        "bn_gamma": jnp.ones((embed_dim,), jnp.float32),
        "bn_beta": jnp.zeros((embed_dim,), jnp.float32),
        "embed": rnd((vocab, embed_dim), dtype=jnp.bfloat16),
        "out_w_t": rnd((hidden, vocab), dtype=jnp.bfloat16),
        "out_b": rnd((vocab,)),
        "lstm": [],
    }
    for l in range(num_layers):
        in_dim = embed_dim if l == 0 else hidden
        lk = jax.random.split(jax.random.fold_in(key, 100 + l), 4)
        wih_t = (0.05 * jax.random.normal(lk[0], (in_dim, 4 * hidden))).astype(jnp.bfloat16)
        whh_t = (0.05 * jax.random.normal(lk[1], (hidden, 4 * hidden))).astype(jnp.bfloat16)
        b_ih = (0.05 * jax.random.normal(lk[2], (4 * hidden,))).astype(jnp.float32)
        b_hh = (0.05 * jax.random.normal(lk[3], (4 * hidden,))).astype(jnp.float32)
        params["lstm"].append({"wih_t": wih_t, "whh_t": whh_t, "b": b_ih + b_hh})
    return params


# ----------------------------------------------------------------------------
if __name__ == "__main__":
    B, C, HH, WW = 4, 3, 16, 16        # input images (NCHW)
    T = 8                              # caption length (before feature prepend)
    RES_FEAT = 64                      # stand-in for resnet.fc.in_features
    EMBED = 128                        # cnn_embedding == lstm_embedding
    HIDDEN = 128                       # must stay a multiple of 128
    VOCAB = 256
    NUM_LAYERS = 2

    key = jax.random.PRNGKey(0)
    k_img, k_cap, k_par = jax.random.split(key, 3)

    images = jax.random.normal(k_img, (B, C, HH, WW), dtype=jnp.float32)
    caps = jax.random.randint(k_cap, (B, T), 0, VOCAB, dtype=jnp.int32)
    lens = [9, 8, 6, 4]                # sorted descending, max == T + 1

    params = init_params(k_par, C, RES_FEAT, EMBED, HIDDEN, VOCAB, NUM_LAYERS)

    fwd = jax.jit(functools.partial(conv_lstm_forward, lens_list=lens))
    out = fwd(params, images, caps)
    out = jax.block_until_ready(out)

    assert out.shape == (sum(lens), VOCAB), out.shape
    assert bool(jnp.all(jnp.isfinite(out)))
    print("KERNEL_OK")
</pallas_src>

<mosaic_0001>
module attributes {stable_mosaic.version = 11 : i64} {
  func.func @decoder_kernel(%arg0: memref<16x3xf32, #tpu.memory_space<vmem>>, %arg1: memref<3x64xf32, #tpu.memory_space<vmem>>, %arg2: memref<1x64xf32, #tpu.memory_space<vmem>>, %arg3: memref<64x128xf32, #tpu.memory_space<vmem>>, %arg4: memref<1x128xf32, #tpu.memory_space<vmem>>, %arg5: memref<1x128xf32, #tpu.memory_space<vmem>>, %arg6: memref<1x128xf32, #tpu.memory_space<vmem>>, %arg7: memref<128x128xbf16, #tpu.memory_space<vmem>>, %arg8: memref<128x512xbf16, #tpu.memory_space<vmem>>, %arg9: memref<128x512xbf16, #tpu.memory_space<vmem>>, %arg10: memref<1x512xf32, #tpu.memory_space<vmem>>, %arg11: memref<128x512xbf16, #tpu.memory_space<vmem>>, %arg12: memref<128x512xbf16, #tpu.memory_space<vmem>>, %arg13: memref<1x512xf32, #tpu.memory_space<vmem>>, %arg14: memref<144x128xbf16, #tpu.memory_space<vmem>>, %arg15: memref<144x512xf32, #tpu.memory_space<vmem>>, %arg16: memref<144x128xbf16, #tpu.memory_space<vmem>>) attributes {dimension_semantics = [], scalar_prefetch = 0 : i64, scratch_operands = 2 : i64, tpu.core_type = #tpu.core_type<tc>} {
    %c0 = arith.constant 0 : index
    %c0_0 = arith.constant 0 : index
    %0 = vector.load %arg0[%c0, %c0_0] : memref<16x3xf32, #tpu.memory_space<vmem>>, vector<16x3xf32>
    %c0_1 = arith.constant 0 : index
    %c0_2 = arith.constant 0 : index
    %1 = vector.load %arg1[%c0_1, %c0_2] : memref<3x64xf32, #tpu.memory_space<vmem>>, vector<3x64xf32>
    %cst = arith.constant dense<0.000000e+00> : vector<16x64xf32>
    %2 = tpu.matmul %0, %1, %cst {dimension_numbers = #tpu.dot_dimension_numbers<[1], [0], [0], [1], [0, 0, 1, 1], [], []>} : vector<16x3xf32>, vector<3x64xf32>, vector<16x64xf32> -> vector<16x64xf32>
    %c0_3 = arith.constant 0 : index
    %c0_4 = arith.constant 0 : index
    %3 = vector.load %arg2[%c0_3, %c0_4] : memref<1x64xf32, #tpu.memory_space<vmem>>, vector<1x64xf32>
    %4 = vector.broadcast %3 : vector<1x64xf32> to vector<16x64xf32>
    %5 = arith.addf %2, %4 : vector<16x64xf32>
    %c0_5 = arith.constant 0 : index
    %c0_6 = arith.constant 0 : index
    %6 = vector.load %arg3[%c0_5, %c0_6] : memref<64x128xf32, #tpu.memory_space<vmem>>, vector<64x128xf32>
    %cst_7 = arith.constant dense<0.000000e+00> : vector<16x128xf32>
    %7 = tpu.matmul %5, %6, %cst_7 {dimension_numbers = #tpu.dot_dimension_numbers<[1], [0], [0], [1], [0, 0, 1, 1], [], []>} : vector<16x64xf32>, vector<64x128xf32>, vector<16x128xf32> -> vector<16x128xf32>
    %c0_8 = arith.constant 0 : index
    %c0_9 = arith.constant 0 : index
    %8 = vector.load %arg4[%c0_8, %c0_9] : memref<1x128xf32, #tpu.memory_space<vmem>>, vector<1x128xf32>
    %9 = vector.broadcast %8 : vector<1x128xf32> to vector<16x128xf32>
    %10 = arith.addf %7, %9 : vector<16x128xf32>
    %11 = tpu.iota {dimensions = array<i32: 0>} : vector<16x128xi32>
    %c4_i32 = arith.constant 4 : i32
    %12 = vector.broadcast %c4_i32 : i32 to vector<16x128xi32>
    %13 = arith.cmpi slt, %11, %12 : vector<16x128xi32>
    %14 = arith.extui %13 : vector<16x128xi1> to vector<16x128xi32>
    %15 = arith.sitofp %14 : vector<16x128xi32> to vector<16x128xf32>
    %16 = arith.mulf %10, %15 : vector<16x128xf32>
    %cst_10 = arith.constant dense<0.000000e+00> : vector<128xf32>
    %17 = vector.multi_reduction <add>, %16, %cst_10 [0] : vector<16x128xf32> to vector<128xf32>
    %18 = vector.shape_cast %17 : vector<128xf32> to vector<1x128xf32>
    %cst_11 = arith.constant 2.500000e-01 : f32
    %19 = vector.broadcast %cst_11 : f32 to vector<1x128xf32>
    %20 = arith.mulf %18, %19 : vector<1x128xf32>
    %21 = vector.broadcast %20 : vector<1x128xf32> to vector<16x128xf32>
    %22 = arith.subf %10, %21 : vector<16x128xf32>
    %23 = arith.mulf %22, %15 : vector<16x128xf32>
    %24 = arith.mulf %23, %23 : vector<16x128xf32>
    %cst_12 = arith.constant dense<0.000000e+00> : vector<128xf32>
    %25 = vector.multi_reduction <add>, %24, %cst_12 [0] : vector<16x128xf32> to vector<128xf32>
    %26 = vector.shape_cast %25 : vector<128xf32> to vector<1x128xf32>
    %cst_13 = arith.constant 2.500000e-01 : f32
    %27 = vector.broadcast %cst_13 : f32 to vector<1x128xf32>
    %28 = arith.mulf %26, %27 : vector<1x128xf32>
    %29 = vector.broadcast %20 : vector<1x128xf32> to vector<16x128xf32>
    %30 = arith.subf %10, %29 : vector<16x128xf32>
    %cst_14 = arith.constant 9.99999974E-6 : f32
    %31 = vector.broadcast %cst_14 : f32 to vector<1x128xf32>
    %32 = arith.addf %28, %31 : vector<1x128xf32>
    %33 = math.rsqrt %32 : vector<1x128xf32>
    %34 = vector.broadcast %33 : vector<1x128xf32> to vector<16x128xf32>
    %35 = arith.mulf %30, %34 : vector<16x128xf32>
    %c0_15 = arith.constant 0 : index
    %c0_16 = arith.constant 0 : index
    %36 = vector.load %arg5[%c0_15, %c0_16] : memref<1x128xf32, #tpu.memory_space<vmem>>, vector<1x128xf32>
    %37 = vector.broadcast %36 : vector<1x128xf32> to vector<16x128xf32>
    %38 = arith.mulf %35, %37 : vector<16x128xf32>
    %c0_17 = arith.constant 0 : index
    %c0_18 = arith.constant 0 : index
    %39 = vector.load %arg6[%c0_17, %c0_18] : memref<1x128xf32, #tpu.memory_space<vmem>>, vector<1x128xf32>
    %40 = vector.broadcast %39 : vector<1x128xf32> to vector<16x128xf32>
    %41 = arith.addf %38, %40 : vector<16x128xf32>
    %42 = arith.truncf %41 : vector<16x128xf32> to vector<16x128xbf16>
    %c0_19 = arith.constant 0 : index
    %c0_20 = arith.constant 0 : index
    %43 = vector.load %arg8[%c0_19, %c0_20] : memref<128x512xbf16, #tpu.memory_space<vmem>>, vector<128x512xbf16>
    %c0_21 = arith.constant 0 : index
    %c0_22 = arith.constant 0 : index
    %44 = vector.load %arg10[%c0_21, %c0_22] : memref<1x512xf32, #tpu.memory_space<vmem>>, vector<1x512xf32>
    %cst_23 = arith.constant dense<0.000000e+00> : vector<16x512xf32>
    %45 = tpu.matmul %42, %43, %cst_23 {dimension_numbers = #tpu.dot_dimension_numbers<[1], [0], [0], [1], [0, 0, 1, 1], [], []>} : vector<16x128xbf16>, vector<128x512xbf16>, vector<16x512xf32> -> vector<16x512xf32>
    %46 = vector.broadcast %44 : vector<1x512xf32> to vector<16x512xf32>
    %47 = arith.addf %45, %46 : vector<16x512xf32>
    %c0_24 = arith.constant 0 : index
    %c0_25 = arith.constant 0 : index
    %48 = vector.load %arg15[%c0_24, %c0_25] : memref<144x512xf32, #tpu.memory_space<vmem>>, vector<16x512xf32>
    tpu.vector_store %arg15[%c0_24, %c0_25], %47 {strides = array<i32>} : memref<144x512xf32, #tpu.memory_space<vmem>>, vector<16x512xf32>,
    %c0_26 = arith.constant 0 : index
    %c0_27 = arith.constant 0 : index
    %49 = vector.load %arg7[%c0_26, %c0_27] : memref<128x128xbf16, #tpu.memory_space<vmem>>, vector<128x128xbf16>
    %cst_28 = arith.constant dense<0.000000e+00> : vector<128x512xf32>
    %50 = tpu.matmul %49, %43, %cst_28 {dimension_numbers = #tpu.dot_dimension_numbers<[1], [0], [0], [1], [0, 0, 1, 1], [], []>} : vector<128x128xbf16>, vector<128x512xbf16>, vector<128x512xf32> -> vector<128x512xf32>
    %51 = vector.broadcast %44 : vector<1x512xf32> to vector<128x512xf32>
    %52 = arith.addf %50, %51 : vector<128x512xf32>
    %c16 = arith.constant 16 : index
    %c0_29 = arith.constant 0 : index
    %53 = vector.load %arg15[%c16, %c0_29] : memref<144x512xf32, #tpu.memory_space<vmem>>, vector<128x512xf32>
    tpu.vector_store %arg15[%c16, %c0_29], %52 {strides = array<i32>} : memref<144x512xf32, #tpu.memory_space<vmem>>, vector<128x512xf32>,
    %c0_30 = arith.constant 0 : index
    %c0_31 = arith.constant 0 : index
    %54 = vector.load %arg9[%c0_30, %c0_31] : memref<128x512xbf16, #tpu.memory_space<vmem>>, vector<128x512xbf16>
    %cst_32 = arith.constant 0.000000e+00 : f32
    %55 = vector.broadcast %cst_32 : f32 to vector<16x128xf32>
    %cst_33 = arith.constant 0.000000e+00 : f32
    %56 = vector.broadcast %cst_33 : f32 to vector<16x128xf32>
    %c0_i32 = arith.constant 0 : i32
    %c16_i32 = arith.constant 16 : i32
    %57 = arith.muli %c0_i32, %c16_i32 : i32
    %58 = tpu.assume_multiple %57, 16 : i32
    %59 = arith.index_cast %58 : i32 to index
    %c0_34 = arith.constant 0 : index
    %60 = vector.load %arg15[%59, %c0_34] : memref<144x512xf32, #tpu.memory_space<vmem>>, vector<16x512xf32>
    %61 = arith.truncf %55 : vector<16x128xf32> to vector<16x128xbf16>
    %cst_35 = arith.constant dense<0.000000e+00> : vector<16x512xf32>
    %62 = tpu.matmul %61, %54, %cst_35 {dimension_numbers = #tpu.dot_dimension_numbers<[1], [0], [0], [1], [0, 0, 1, 1], [], []>} : vector<16x128xbf16>, vector<128x512xbf16>, vector<16x512xf32> -> vector<16x512xf32>
    %63 = arith.addf %60, %62 : vector<16x512xf32>
    %64 = vector.extract_strided_slice %63 {offsets = [0, 0], sizes = [16, 128], strides = [1, 1]} : vector<16x512xf32> to vector<16x128xf32>
    %65 = arith.negf %64 : vector<16x128xf32>
    %66 = math.exp %65 : vector<16x128xf32>
    %cst_36 = arith.constant 1.000000e+00 : f32
    %67 = vector.broadcast %cst_36 : f32 to vector<16x128xf32>
    %68 = arith.addf %67, %66 : vector<16x128xf32>
    %69 = arith.divf %67, %68 : vector<16x128xf32>
    %70 = vector.extract_strided_slice %63 {offsets = [0, 128], sizes = [16, 128], strides = [1, 1]} : vector<16x512xf32> to vector<16x128xf32>
    %71 = arith.negf %70 : vector<16x128xf32>
    %72 = math.exp %71 : vector<16x128xf32>
    %cst_37 = arith.constant 1.000000e+00 : f32
    %73 = vector.broadcast %cst_37 : f32 to vector<16x128xf32>
    %74 = arith.addf %73, %72 : vector<16x128xf32>
    %75 = arith.divf %73, %74 : vector<16x128xf32>
    %76 = vector.extract_strided_slice %63 {offsets = [0, 256], sizes = [16, 128], strides = [1, 1]} : vector<16x512xf32> to vector<16x128xf32>
    %77 = math.tanh %76 : vector<16x128xf32>
    %78 = vector.extract_strided_slice %63 {offsets = [0, 384], sizes = [16, 128], strides = [1, 1]} : vector<16x512xf32> to vector<16x128xf32>
    %79 = arith.negf %78 : vector<16x128xf32>
    %80 = math.exp %79 : vector<16x128xf32>
    %cst_38 = arith.constant 1.000000e+00 : f32
    %81 = vector.broadcast %cst_38 : f32 to vector<16x128xf32>
    %82 = arith.addf %81, %80 : vector<16x128xf32>
    %83 = arith.divf %81, %82 : vector<16x128xf32>
    %84 = arith.mulf %75, %56 : vector<16x128xf32>
    %85 = arith.mulf %69, %77 : vector<16x128xf32>
    %86 = arith.addf %84, %85 : vector<16x128xf32>
    %87 = math.tanh %86 : vector<16x128xf32>
    %88 = arith.mulf %83, %87 : vector<16x128xf32>
    %89 = arith.truncf %88 : vector<16x128xf32> to vector<16x128xbf16>
    %90 = arith.index_cast %58 : i32 to index
    %c0_39 = arith.constant 0 : index
    %91 = vector.load %arg16[%90, %c0_39] : memref<144x128xbf16, #tpu.memory_space<vmem>>, vector<16x128xbf16>
    tpu.vector_store %arg16[%90, %c0_39], %89 {strides = array<i32>} : memref<144x128xbf16, #tpu.memory_space<vmem>>, vector<16x128xbf16>,
    %c1_i32 = arith.constant 1 : i32
    %c16_i32_40 = arith.constant 16 : i32
    %92 = arith.muli %c1_i32, %c16_i32_40 : i32
    %93 = tpu.assume_multiple %92, 16 : i32
    %94 = arith.index_cast %93 : i32 to index
    %c0_41 = arith.constant 0 : index
    %95 = vector.load %arg15[%94, %c0_41] : memref<144x512xf32, #tpu.memory_space<vmem>>, vector<16x512xf32>
    %96 = arith.truncf %88 : vector<16x128xf32> to vector<16x128xbf16>
    %cst_42 = arith.constant dense<0.000000e+00> : vector<16x512xf32>
    %97 = tpu.matmul %96, %54, %cst_42 {dimension_numbers = #tpu.dot_dimension_numbers<[1], [0], [0], [1], [0, 0, 1, 1], [], []>} : vector<16x128xbf16>, vector<128x512xbf16>, vector<16x512xf32> -> vector<16x512xf32>
    %98 = arith.addf %95, %97 : vector<16x512xf32>
    %99 = vector.extract_strided_slice %98 {offsets = [0, 0], sizes = [16, 128], strides = [1, 1]} : vector<16x512xf32> to vector<16x128xf32>
    %100 = arith.negf %99 : vector<16x128xf32>
    %101 = math.exp %100 : vector<16x128xf32>
    %cst_43 = arith.constant 1.000000e+00 : f32
    %102 = vector.broadcast %cst_43 : f32 to vector<16x128xf32>
    %103 = arith.addf %102, %101 : vector<16x128xf32>
    %104 = arith.divf %102, %103 : vector<16x128xf32>
    %105 = vector.extract_strided_slice %98 {offsets = [0, 128], sizes = [16, 128], strides = [1, 1]} : vector<16x512xf32> to vector<16x128xf32>
    %106 = arith.negf %105 : vector<16x128xf32>
    %107 = math.exp %106 : vector<16x128xf32>
    %cst_44 = arith.constant 1.000000e+00 : f32
    %108 = vector.broadcast %cst_44 : f32 to vector<16x128xf32>
    %109 = arith.addf %108, %107 : vector<16x128xf32>
    %110 = arith.divf %108, %109 : vector<16x128xf32>
    %111 = vector.extract_strided_slice %98 {offsets = [0, 256], sizes = [16, 128], strides = [1, 1]} : vector<16x512xf32> to vector<16x128xf32>
    %112 = math.tanh %111 : vector<16x128xf32>
    %113 = vector.extract_strided_slice %98 {offsets = [0, 384], sizes = [16, 128], strides = [1, 1]} : vector<16x512xf32> to vector<16x128xf32>
    %114 = arith.negf %113 : vector<16x128xf32>
    %115 = math.exp %114 : vector<16x128xf32>
    %cst_45 = arith.constant 1.000000e+00 : f32
    %116 = vector.broadcast %cst_45 : f32 to vector<16x128xf32>
    %117 = arith.addf %116, %115 : vector<16x128xf32>
    %118 = arith.divf %116, %117 : vector<16x128xf32>
    %119 = arith.mulf %110, %86 : vector<16x128xf32>
    %120 = arith.mulf %104, %112 : vector<16x128xf32>
    %121 = arith.addf %119, %120 : vector<16x128xf32>
    %122 = math.tanh %121 : vector<16x128xf32>
    %123 = arith.mulf %118, %122 : vector<16x128xf32>
    %124 = arith.truncf %123 : vector<16x128xf32> to vector<16x128xbf16>
    %125 = arith.index_cast %93 : i32 to index
    %c0_46 = arith.constant 0 : index
    %126 = vector.load %arg16[%125, %c0_46] : memref<144x128xbf16, #tpu.memory_space<vmem>>, vector<16x128xbf16>
    tpu.vector_store %arg16[%125, %c0_46], %124 {strides = array<i32>} : memref<144x128xbf16, #tpu.memory_space<vmem>>, vector<16x128xbf16>,
    %c2_i32 = arith.constant 2 : i32
    %c16_i32_47 = arith.constant 16 : i32
    %127 = arith.muli %c2_i32, %c16_i32_47 : i32
    %128 = tpu.assume_multiple %127, 16 : i32
    %129 = arith.index_cast %128 : i32 to index
    %c0_48 = arith.constant 0 : index
    %130 = vector.load %arg15[%129, %c0_48] : memref<144x512xf32, #tpu.memory_space<vmem>>, vector<16x512xf32>
    %131 = arith.truncf %123 : vector<16x128xf32> to vector<16x128xbf16>
    %cst_49 = arith.constant dense<0.000000e+00> : vector<16x512xf32>
    %132 = tpu.matmul %131, %54, %cst_49 {dimension_numbers = #tpu.dot_dimension_numbers<[1], [0], [0], [1], [0, 0, 1, 1], [], []>} : vector<16x128xbf16>, vector<128x512xbf16>, vector<16x512xf32> -> vector<16x512xf32>
    %133 = arith.addf %130, %132 : vector<16x512xf32>
    %134 = vector.extract_strided_slice %133 {offsets = [0, 0], sizes = [16, 128], strides = [1, 1]} : vector<16x512xf32> to vector<16x128xf32>
    %135 = arith.negf %134 : vector<16x128xf32>
    %136 = math.exp %135 : vector<16x128xf32>
    %cst_50 = arith.constant 1.000000e+00 : f32
    %137 = vector.broadcast %cst_50 : f32 to vector<16x128xf32>
    %138 = arith.addf %137, %136 : vector<16x128xf32>
    %139 = arith.divf %137, %138 : vector<16x128xf32>
    %140 = vector.extract_strided_slice %133 {offsets = [0, 128], sizes = [16, 128], strides = [1, 1]} : vector<16x512xf32> to vector<16x128xf32>
    %141 = arith.negf %140 : vector<16x128xf32>
    %142 = math.exp %141 : vector<16x128xf32>
    %cst_51 = arith.constant 1.000000e+00 : f32
    %143 = vector.broadcast %cst_51 : f32 to vector<16x128xf32>
    %144 = arith.addf %143, %142 : vector<16x128xf32>
    %145 = arith.divf %143, %144 : vector<16x128xf32>
    %146 = vector.extract_strided_slice %133 {offsets = [0, 256], sizes = [16, 128], strides = [1, 1]} : vector<16x512xf32> to vector<16x128xf32>
    %147 = math.tanh %146 : vector<16x128xf32>
    %148 = vector.extract_strided_slice %133 {offsets = [0, 384], sizes = [16, 128], strides = [1, 1]} : vector<16x512xf32> to vector<16x128xf32>
    %149 = arith.negf %148 : vector<16x128xf32>
    %150 = math.exp %149 : vector<16x128xf32>
    %cst_52 = arith.constant 1.000000e+00 : f32
    %151 = vector.broadcast %cst_52 : f32 to vector<16x128xf32>
    %152 = arith.addf %151, %150 : vector<16x128xf32>
    %153 = arith.divf %151, %152 : vector<16x128xf32>
    %154 = arith.mulf %145, %121 : vector<16x128xf32>
    %155 = arith.mulf %139, %147 : vector<16x128xf32>
    %156 = arith.addf %154, %155 : vector<16x128xf32>
    %157 = math.tanh %156 : vector<16x128xf32>
    %158 = arith.mulf %153, %157 : vector<16x128xf32>
    %159 = arith.truncf %158 : vector<16x128xf32> to vector<16x128xbf16>
    %160 = arith.index_cast %128 : i32 to index
    %c0_53 = arith.constant 0 : index
    %161 = vector.load %arg16[%160, %c0_53] : memref<144x128xbf16, #tpu.memory_space<vmem>>, vector<16x128xbf16>
    tpu.vector_store %arg16[%160, %c0_53], %159 {strides = array<i32>} : memref<144x128xbf16, #tpu.memory_space<vmem>>, vector<16x128xbf16>,
    %c3_i32 = arith.constant 3 : i32
    %c16_i32_54 = arith.constant 16 : i32
    %162 = arith.muli %c3_i32, %c16_i32_54 : i32
    %163 = tpu.assume_multiple %162, 16 : i32
    %164 = arith.index_cast %163 : i32 to index
    %c0_55 = arith.constant 0 : index
    %165 = vector.load %arg15[%164, %c0_55] : memref<144x512xf32, #tpu.memory_space<vmem>>, vector<16x512xf32>
    %166 = arith.truncf %158 : vector<16x128xf32> to vector<16x128xbf16>
    %cst_56 = arith.constant dense<0.000000e+00> : vector<16x512xf32>
    %167 = tpu.matmul %166, %54, %cst_56 {dimension_numbers = #tpu.dot_dimension_numbers<[1], [0], [0], [1], [0, 0, 1, 1], [], []>} : vector<16x128xbf16>, vector<128x512xbf16>, vector<16x512xf32> -> vector<16x512xf32>
    %168 = arith.addf %165, %167 : vector<16x512xf32>
    %169 = vector.extract_strided_slice %168 {offsets = [0, 0], sizes = [16, 128], strides = [1, 1]} : vector<16x512xf32> to vector<16x128xf32>
    %170 = arith.negf %169 : vector<16x128xf32>
    %171 = math.exp %170 : vector<16x128xf32>
    %cst_57 = arith.constant 1.000000e+00 : f32
    %172 = vector.broadcast %cst_57 : f32 to vector<16x128xf32>
    %173 = arith.addf %172, %171 : vector<16x128xf32>
    %174 = arith.divf %172, %173 : vector<16x128xf32>
    %175 = vector.extract_strided_slice %168 {offsets = [0, 128], sizes = [16, 128], strides = [1, 1]} : vector<16x512xf32> to vector<16x128xf32>
    %176 = arith.negf %175 : vector<16x128xf32>
    %177 = math.exp %176 : vector<16x128xf32>
    %cst_58 = arith.constant 1.000000e+00 : f32
    %178 = vector.broadcast %cst_58 : f32 to vector<16x128xf32>
    %179 = arith.addf %178, %177 : vector<16x128xf32>
    %180 = arith.divf %178, %179 : vector<16x128xf32>
    %181 = vector.extract_strided_slice %168 {offsets = [0, 256], sizes = [16, 128], strides = [1, 1]} : vector<16x512xf32> to vector<16x128xf32>
    %182 = math.tanh %181 : vector<16x128xf32>
    %183 = vector.extract_strided_slice %168 {offsets = [0, 384], sizes = [16, 128], strides = [1, 1]} : vector<16x512xf32> to vector<16x128xf32>
    %184 = arith.negf %183 : vector<16x128xf32>
    %185 = math.exp %184 : vector<16x128xf32>
    %cst_59 = arith.constant 1.000000e+00 : f32
    %186 = vector.broadcast %cst_59 : f32 to vector<16x128xf32>
    %187 = arith.addf %186, %185 : vector<16x128xf32>
    %188 = arith.divf %186, %187 : vector<16x128xf32>
    %189 = arith.mulf %180, %156 : vector<16x128xf32>
    %190 = arith.mulf %174, %182 : vector<16x128xf32>
    %191 = arith.addf %189, %190 : vector<16x128xf32>
    %192 = math.tanh %191 : vector<16x128xf32>
    %193 = arith.mulf %188, %192 : vector<16x128xf32>
    %194 = arith.truncf %193 : vector<16x128xf32> to vector<16x128xbf16>
    %195 = arith.index_cast %163 : i32 to index
    %c0_60 = arith.constant 0 : index
    %196 = vector.load %arg16[%195, %c0_60] : memref<144x128xbf16, #tpu.memory_space<vmem>>, vector<16x128xbf16>
    tpu.vector_store %arg16[%195, %c0_60], %194 {strides = array<i32>} : memref<144x128xbf16, #tpu.memory_space<vmem>>, vector<16x128xbf16>,
    %c4_i32_61 = arith.constant 4 : i32
    %c16_i32_62 = arith.constant 16 : i32
    %197 = arith.muli %c4_i32_61, %c16_i32_62 : i32
    %198 = tpu.assume_multiple %197, 16 : i32
    %199 = arith.index_cast %198 : i32 to index
    %c0_63 = arith.constant 0 : index
    %200 = vector.load %arg15[%199, %c0_63] : memref<144x512xf32, #tpu.memory_space<vmem>>, vector<16x512xf32>
    %201 = arith.truncf %193 : vector<16x128xf32> to vector<16x128xbf16>
    %cst_64 = arith.constant dense<0.000000e+00> : vector<16x512xf32>
    %202 = tpu.matmul %201, %54, %cst_64 {dimension_numbers = #tpu.dot_dimension_numbers<[1], [0], [0], [1], [0, 0, 1, 1], [], []>} : vector<16x128xbf16>, vector<128x512xbf16>, vector<16x512xf32> -> vector<16x512xf32>
    %203 = arith.addf %200, %202 : vector<16x512xf32>
    %204 = vector.extract_strided_slice %203 {offsets = [0, 0], sizes = [16, 128], strides = [1, 1]} : vector<16x512xf32> to vector<16x128xf32>
    %205 = arith.negf %204 : vector<16x128xf32>
    %206 = math.exp %205 : vector<16x128xf32>
    %cst_65 = arith.constant 1.000000e+00 : f32
    %207 = vector.broadcast %cst_65 : f32 to vector<16x128xf32>
    %208 = arith.addf %207, %206 : vector<16x128xf32>
    %209 = arith.divf %207, %208 : vector<16x128xf32>
    %210 = vector.extract_strided_slice %203 {offsets = [0, 128], sizes = [16, 128], strides = [1, 1]} : vector<16x512xf32> to vector<16x128xf32>
    %211 = arith.negf %210 : vector<16x128xf32>
    %212 = math.exp %211 : vector<16x128xf32>
    %cst_66 = arith.constant 1.000000e+00 : f32
    %213 = vector.broadcast %cst_66 : f32 to vector<16x128xf32>
    %214 = arith.addf %213, %212 : vector<16x128xf32>
    %215 = arith.divf %213, %214 : vector<16x128xf32>
    %216 = vector.extract_strided_slice %203 {offsets = [0, 256], sizes = [16, 128], strides = [1, 1]} : vector<16x512xf32> to vector<16x128xf32>
    %217 = math.tanh %216 : vector<16x128xf32>
    %218 = vector.extract_strided_slice %203 {offsets = [0, 384], sizes = [16, 128], strides = [1, 1]} : vector<16x512xf32> to vector<16x128xf32>
    %219 = arith.negf %218 : vector<16x128xf32>
    %220 = math.exp %219 : vector<16x128xf32>
    %cst_67 = arith.constant 1.000000e+00 : f32
    %221 = vector.broadcast %cst_67 : f32 to vector<16x128xf32>
    %222 = arith.addf %221, %220 : vector<16x128xf32>
    %223 = arith.divf %221, %222 : vector<16x128xf32>
    %224 = arith.mulf %215, %191 : vector<16x128xf32>
    %225 = arith.mulf %209, %217 : vector<16x128xf32>
    %226 = arith.addf %224, %225 : vector<16x128xf32>
    %227 = math.tanh %226 : vector<16x128xf32>
    %228 = arith.mulf %223, %227 : vector<16x128xf32>
    %229 = arith.truncf %228 : vector<16x128xf32> to vector<16x128xbf16>
    %230 = arith.index_cast %198 : i32 to index
    %c0_68 = arith.constant 0 : index
    %231 = vector.load %arg16[%230, %c0_68] : memref<144x128xbf16, #tpu.memory_space<vmem>>, vector<16x128xbf16>
    tpu.vector_store %arg16[%230, %c0_68], %229 {strides = array<i32>} : memref<144x128xbf16, #tpu.memory_space<vmem>>, vector<16x128xbf16>,
    %c5_i32 = arith.constant 5 : i32
    %c16_i32_69 = arith.constant 16 : i32
    %232 = arith.muli %c5_i32, %c16_i32_69 : i32
    %233 = tpu.assume_multiple %232, 16 : i32
    %234 = arith.index_cast %233 : i32 to index
    %c0_70 = arith.constant 0 : index
    %235 = vector.load %arg15[%234, %c0_70] : memref<144x512xf32, #tpu.memory_space<vmem>>, vector<16x512xf32>
    %236 = arith.truncf %228 : vector<16x128xf32> to vector<16x128xbf16>
    %cst_71 = arith.constant dense<0.000000e+00> : vector<16x512xf32>
    %237 = tpu.matmul %236, %54, %cst_71 {dimension_numbers = #tpu.dot_dimension_numbers<[1], [0], [0], [1], [0, 0, 1, 1], [], []>} : vector<16x128xbf16>, vector<128x512xbf16>, vector<16x512xf32> -> vector<16x512xf32>
    %238 = arith.addf %235, %237 : vector<16x512xf32>
    %239 = vector.extract_strided_slice %238 {offsets = [0, 0], sizes = [16, 128], strides = [1, 1]} : vector<16x512xf32> to vector<16x128xf32>
    %240 = arith.negf %239 : vector<16x128xf32>
    %241 = math.exp %240 : vector<16x128xf32>
    %cst_72 = arith.constant 1.000000e+00 : f32
    %242 = vector.broadcast %cst_72 : f32 to vector<16x128xf32>
    %243 = arith.addf %242, %241 : vector<16x128xf32>
    %244 = arith.divf %242, %243 : vector<16x128xf32>
    %245 = vector.extract_strided_slice %238 {offsets = [0, 128], sizes = [16, 128], strides = [1, 1]} : vector<16x512xf32> to vector<16x128xf32>
    %246 = arith.negf %245 : vector<16x128xf32>
    %247 = math.exp %246 : vector<16x128xf32>
    %cst_73 = arith.constant 1.000000e+00 : f32
    %248 = vector.broadcast %cst_73 : f32 to vector<16x128xf32>
    %249 = arith.addf %248, %247 : vector<16x128xf32>
    %250 = arith.divf %248, %249 : vector<16x128xf32>
    %251 = vector.extract_strided_slice %238 {offsets = [0, 256], sizes = [16, 128], strides = [1, 1]} : vector<16x512xf32> to vector<16x128xf32>
    %252 = math.tanh %251 : vector<16x128xf32>
    %253 = vector.extract_strided_slice %238 {offsets = [0, 384], sizes = [16, 128], strides = [1, 1]} : vector<16x512xf32> to vector<16x128xf32>
    %254 = arith.negf %253 : vector<16x128xf32>
    %255 = math.exp %254 : vector<16x128xf32>
    %cst_74 = arith.constant 1.000000e+00 : f32
    %256 = vector.broadcast %cst_74 : f32 to vector<16x128xf32>
    %257 = arith.addf %256, %255 : vector<16x128xf32>
    %258 = arith.divf %256, %257 : vector<16x128xf32>
    %259 = arith.mulf %250, %226 : vector<16x128xf32>
    %260 = arith.mulf %244, %252 : vector<16x128xf32>
    %261 = arith.addf %259, %260 : vector<16x128xf32>
    %262 = math.tanh %261 : vector<16x128xf32>
    %263 = arith.mulf %258, %262 : vector<16x128xf32>
    %264 = arith.truncf %263 : vector<16x128xf32> to vector<16x128xbf16>
    %265 = arith.index_cast %233 : i32 to index
    %c0_75 = arith.constant 0 : index
    %266 = vector.load %arg16[%265, %c0_75] : memref<144x128xbf16, #tpu.memory_space<vmem>>, vector<16x128xbf16>
    tpu.vector_store %arg16[%265, %c0_75], %264 {strides = array<i32>} : memref<144x128xbf16, #tpu.memory_space<vmem>>, vector<16x128xbf16>,
    %c6_i32 = arith.constant 6 : i32
    %c16_i32_76 = arith.constant 16 : i32
    %267 = arith.muli %c6_i32, %c16_i32_76 : i32
    %268 = tpu.assume_multiple %267, 16 : i32
    %269 = arith.index_cast %268 : i32 to index
    %c0_77 = arith.constant 0 : index
    %270 = vector.load %arg15[%269, %c0_77] : memref<144x512xf32, #tpu.memory_space<vmem>>, vector<16x512xf32>
    %271 = arith.truncf %263 : vector<16x128xf32> to vector<16x128xbf16>
    %cst_78 = arith.constant dense<0.000000e+00> : vector<16x512xf32>
    %272 = tpu.matmul %271, %54, %cst_78 {dimension_numbers = #tpu.dot_dimension_numbers<[1], [0], [0], [1], [0, 0, 1, 1], [], []>} : vector<16x128xbf16>, vector<128x512xbf16>, vector<16x512xf32> -> vector<16x512xf32>
    %273 = arith.addf %270, %272 : vector<16x512xf32>
    %274 = vector.extract_strided_slice %273 {offsets = [0, 0], sizes = [16, 128], strides = [1, 1]} : vector<16x512xf32> to vector<16x128xf32>
    %275 = arith.negf %274 : vector<16x128xf32>
    %276 = math.exp %275 : vector<16x128xf32>
    %cst_79 = arith.constant 1.000000e+00 : f32
    %277 = vector.broadcast %cst_79 : f32 to vector<16x128xf32>
    %278 = arith.addf %277, %276 : vector<16x128xf32>
    %279 = arith.divf %277, %278 : vector<16x128xf32>
    %280 = vector.extract_strided_slice %273 {offsets = [0, 128], sizes = [16, 128], strides = [1, 1]} : vector<16x512xf32> to vector<16x128xf32>
    %281 = arith.negf %280 : vector<16x128xf32>
    %282 = math.exp %281 : vector<16x128xf32>
    %cst_80 = arith.constant 1.000000e+00 : f32
    %283 = vector.broadcast %cst_80 : f32 to vector<16x128xf32>
    %284 = arith.addf %283, %282 : vector<16x128xf32>
    %285 = arith.divf %283, %284 : vector<16x128xf32>
    %286 = vector.extract_strided_slice %273 {offsets = [0, 256], sizes = [16, 128], strides = [1, 1]} : vector<16x512xf32> to vector<16x128xf32>
    %287 = math.tanh %286 : vector<16x128xf32>
    %288 = vector.extract_strided_slice %273 {offsets = [0, 384], sizes = [16, 128], strides = [1, 1]} : vector<16x512xf32> to vector<16x128xf32>
    %289 = arith.negf %288 : vector<16x128xf32>
    %290 = math.exp %289 : vector<16x128xf32>
    %cst_81 = arith.constant 1.000000e+00 : f32
    %291 = vector.broadcast %cst_81 : f32 to vector<16x128xf32>
    %292 = arith.addf %291, %290 : vector<16x128xf32>
    %293 = arith.divf %291, %292 : vector<16x128xf32>
    %294 = arith.mulf %285, %261 : vector<16x128xf32>
    %295 = arith.mulf %279, %287 : vector<16x128xf32>
    %296 = arith.addf %294, %295 : vector<16x128xf32>
    %297 = math.tanh %296 : vector<16x128xf32>
    %298 = arith.mulf %293, %297 : vector<16x128xf32>
    %299 = arith.truncf %298 : vector<16x128xf32> to vector<16x128xbf16>
    %300 = arith.index_cast %268 : i32 to index
    %c0_82 = arith.constant 0 : index
    %301 = vector.load %arg16[%300, %c0_82] : memref<144x128xbf16, #tpu.memory_space<vmem>>, vector<16x128xbf16>
    tpu.vector_store %arg16[%300, %c0_82], %299 {strides = array<i32>} : memref<144x128xbf16, #tpu.memory_space<vmem>>, vector<16x128xbf16>,
    %c7_i32 = arith.constant 7 : i32
    %c16_i32_83 = arith.constant 16 : i32
    %302 = arith.muli %c7_i32, %c16_i32_83 : i32
    %303 = tpu.assume_multiple %302, 16 : i32
    %304 = arith.index_cast %303 : i32 to index
    %c0_84 = arith.constant 0 : index
    %305 = vector.load %arg15[%304, %c0_84] : memref<144x512xf32, #tpu.memory_space<vmem>>, vector<16x512xf32>
    %306 = arith.truncf %298 : vector<16x128xf32> to vector<16x128xbf16>
    %cst_85 = arith.constant dense<0.000000e+00> : vector<16x512xf32>
    %307 = tpu.matmul %306, %54, %cst_85 {dimension_numbers = #tpu.dot_dimension_numbers<[1], [0], [0], [1], [0, 0, 1, 1], [], []>} : vector<16x128xbf16>, vector<128x512xbf16>, vector<16x512xf32> -> vector<16x512xf32>
    %308 = arith.addf %305, %307 : vector<16x512xf32>
    %309 = vector.extract_strided_slice %308 {offsets = [0, 0], sizes = [16, 128], strides = [1, 1]} : vector<16x512xf32> to vector<16x128xf32>
    %310 = arith.negf %309 : vector<16x128xf32>
    %311 = math.exp %310 : vector<16x128xf32>
    %cst_86 = arith.constant 1.000000e+00 : f32
    %312 = vector.broadcast %cst_86 : f32 to vector<16x128xf32>
    %313 = arith.addf %312, %311 : vector<16x128xf32>
    %314 = arith.divf %312, %313 : vector<16x128xf32>
    %315 = vector.extract_strided_slice %308 {offsets = [0, 128], sizes = [16, 128], strides = [1, 1]} : vector<16x512xf32> to vector<16x128xf32>
    %316 = arith.negf %315 : vector<16x128xf32>
    %317 = math.exp %316 : vector<16x128xf32>
    %cst_87 = arith.constant 1.000000e+00 : f32
    %318 = vector.broadcast %cst_87 : f32 to vector<16x128xf32>
    %319 = arith.addf %318, %317 : vector<16x128xf32>
    %320 = arith.divf %318, %319 : vector<16x128xf32>
    %321 = vector.extract_strided_slice %308 {offsets = [0, 256], sizes = [16, 128], strides = [1, 1]} : vector<16x512xf32> to vector<16x128xf32>
    %322 = math.tanh %321 : vector<16x128xf32>
    %323 = vector.extract_strided_slice %308 {offsets = [0, 384], sizes = [16, 128], strides = [1, 1]} : vector<16x512xf32> to vector<16x128xf32>
    %324 = arith.negf %323 : vector<16x128xf32>
    %325 = math.exp %324 : vector<16x128xf32>
    %cst_88 = arith.constant 1.000000e+00 : f32
    %326 = vector.broadcast %cst_88 : f32 to vector<16x128xf32>
    %327 = arith.addf %326, %325 : vector<16x128xf32>
    %328 = arith.divf %326, %327 : vector<16x128xf32>
    %329 = arith.mulf %320, %296 : vector<16x128xf32>
    %330 = arith.mulf %314, %322 : vector<16x128xf32>
    %331 = arith.addf %329, %330 : vector<16x128xf32>
    %332 = math.tanh %331 : vector<16x128xf32>
    %333 = arith.mulf %328, %332 : vector<16x128xf32>
    %334 = arith.truncf %333 : vector<16x128xf32> to vector<16x128xbf16>
    %335 = arith.index_cast %303 : i32 to index
    %c0_89 = arith.constant 0 : index
    %336 = vector.load %arg16[%335, %c0_89] : memref<144x128xbf16, #tpu.memory_space<vmem>>, vector<16x128xbf16>
    tpu.vector_store %arg16[%335, %c0_89], %334 {strides = array<i32>} : memref<144x128xbf16, #tpu.memory_space<vmem>>, vector<16x128xbf16>,
    %c8_i32 = arith.constant 8 : i32
    %c16_i32_90 = arith.constant 16 : i32
    %337 = arith.muli %c8_i32, %c16_i32_90 : i32
    %338 = tpu.assume_multiple %337, 16 : i32
    %339 = arith.index_cast %338 : i32 to index
    %c0_91 = arith.constant 0 : index
    %340 = vector.load %arg15[%339, %c0_91] : memref<144x512xf32, #tpu.memory_space<vmem>>, vector<16x512xf32>
    %341 = arith.truncf %333 : vector<16x128xf32> to vector<16x128xbf16>
    %cst_92 = arith.constant dense<0.000000e+00> : vector<16x512xf32>
    %342 = tpu.matmul %341, %54, %cst_92 {dimension_numbers = #tpu.dot_dimension_numbers<[1], [0], [0], [1], [0, 0, 1, 1], [], []>} : vector<16x128xbf16>, vector<128x512xbf16>, vector<16x512xf32> -> vector<16x512xf32>
    %343 = arith.addf %340, %342 : vector<16x512xf32>
    %344 = vector.extract_strided_slice %343 {offsets = [0, 0], sizes = [16, 128], strides = [1, 1]} : vector<16x512xf32> to vector<16x128xf32>
    %345 = arith.negf %344 : vector<16x128xf32>
    %346 = math.exp %345 : vector<16x128xf32>
    %cst_93 = arith.constant 1.000000e+00 : f32
    %347 = vector.broadcast %cst_93 : f32 to vector<16x128xf32>
    %348 = arith.addf %347, %346 : vector<16x128xf32>
    %349 = arith.divf %347, %348 : vector<16x128xf32>
    %350 = vector.extract_strided_slice %343 {offsets = [0, 128], sizes = [16, 128], strides = [1, 1]} : vector<16x512xf32> to vector<16x128xf32>
    %351 = arith.negf %350 : vector<16x128xf32>
    %352 = math.exp %351 : vector<16x128xf32>
    %cst_94 = arith.constant 1.000000e+00 : f32
    %353 = vector.broadcast %cst_94 : f32 to vector<16x128xf32>
    %354 = arith.addf %353, %352 : vector<16x128xf32>
    %355 = arith.divf %353, %354 : vector<16x128xf32>
    %356 = vector.extract_strided_slice %343 {offsets = [0, 256], sizes = [16, 128], strides = [1, 1]} : vector<16x512xf32> to vector<16x128xf32>
    %357 = math.tanh %356 : vector<16x128xf32>
    %358 = vector.extract_strided_slice %343 {offsets = [0, 384], sizes = [16, 128], strides = [1, 1]} : vector<16x512xf32> to vector<16x128xf32>
    %359 = arith.negf %358 : vector<16x128xf32>
    %360 = math.exp %359 : vector<16x128xf32>
    %cst_95 = arith.constant 1.000000e+00 : f32
    %361 = vector.broadcast %cst_95 : f32 to vector<16x128xf32>
    %362 = arith.addf %361, %360 : vector<16x128xf32>
    %363 = arith.divf %361, %362 : vector<16x128xf32>
    %364 = arith.mulf %355, %331 : vector<16x128xf32>
    %365 = arith.mulf %349, %357 : vector<16x128xf32>
    %366 = arith.addf %364, %365 : vector<16x128xf32>
    %367 = math.tanh %366 : vector<16x128xf32>
    %368 = arith.mulf %363, %367 : vector<16x128xf32>
    %369 = arith.truncf %368 : vector<16x128xf32> to vector<16x128xbf16>
    %370 = arith.index_cast %338 : i32 to index
    %c0_96 = arith.constant 0 : index
    %371 = vector.load %arg16[%370, %c0_96] : memref<144x128xbf16, #tpu.memory_space<vmem>>, vector<16x128xbf16>
    tpu.vector_store %arg16[%370, %c0_96], %369 {strides = array<i32>} : memref<144x128xbf16, #tpu.memory_space<vmem>>, vector<16x128xbf16>,
    %c9_i32 = arith.constant 9 : i32
    %c0_97 = arith.constant 0 : index
    %c0_98 = arith.constant 0 : index
    %372 = vector.load %arg11[%c0_97, %c0_98] : memref<128x512xbf16, #tpu.memory_space<vmem>>, vector<128x512xbf16>
    %c0_99 = arith.constant 0 : index
    %c0_100 = arith.constant 0 : index
    %373 = vector.load %arg13[%c0_99, %c0_100] : memref<1x512xf32, #tpu.memory_space<vmem>>, vector<1x512xf32>
    %c0_101 = arith.constant 0 : index
    %c0_102 = arith.constant 0 : index
    %374 = vector.load %arg16[%c0_101, %c0_102] : memref<144x128xbf16, #tpu.memory_space<vmem>>, vector<144x128xbf16>
    %cst_103 = arith.constant dense<0.000000e+00> : vector<144x512xf32>
    %375 = tpu.matmul %374, %372, %cst_103 {dimension_numbers = #tpu.dot_dimension_numbers<[1], [0], [0], [1], [0, 0, 1, 1], [], []>} : vector<144x128xbf16>, vector<128x512xbf16>, vector<144x512xf32> -> vector<144x512xf32>
    %376 = vector.broadcast %373 : vector<1x512xf32> to vector<144x512xf32>
    %377 = arith.addf %375, %376 : vector<144x512xf32>
    %c0_104 = arith.constant 0 : index
    %c0_105 = arith.constant 0 : index
    %378 = vector.load %arg15[%c0_104, %c0_105] : memref<144x512xf32, #tpu.memory_space<vmem>>, vector<144x512xf32>
    tpu.vector_store %arg15[%c0_104, %c0_105], %377 {strides = array<i32>} : memref<144x512xf32, #tpu.memory_space<vmem>>, vector<144x512xf32>,
    %c0_106 = arith.constant 0 : index
    %c0_107 = arith.constant 0 : index
    %379 = vector.load %arg12[%c0_106, %c0_107] : memref<128x512xbf16, #tpu.memory_space<vmem>>, vector<128x512xbf16>
    %cst_108 = arith.constant 0.000000e+00 : f32
    %380 = vector.broadcast %cst_108 : f32 to vector<16x128xf32>
    %cst_109 = arith.constant 0.000000e+00 : f32
    %381 = vector.broadcast %cst_109 : f32 to vector<16x128xf32>
    %c0_i32_110 = arith.constant 0 : i32
    %c16_i32_111 = arith.constant 16 : i32
    %382 = arith.muli %c0_i32_110, %c16_i32_111 : i32
    %383 = tpu.assume_multiple %382, 16 : i32
    %384 = arith.index_cast %383 : i32 to index
    %c0_112 = arith.constant 0 : index
    %385 = vector.load %arg15[%384, %c0_112] : memref<144x512xf32, #tpu.memory_space<vmem>>, vector<16x512xf32>
    %386 = arith.truncf %380 : vector<16x128xf32> to vector<16x128xbf16>
    %cst_113 = arith.constant dense<0.000000e+00> : vector<16x512xf32>
    %387 = tpu.matmul %386, %379, %cst_113 {dimension_numbers = #tpu.dot_dimension_numbers<[1], [0], [0], [1], [0, 0, 1, 1], [], []>} : vector<16x128xbf16>, vector<128x512xbf16>, vector<16x512xf32> -> vector<16x512xf32>
    %388 = arith.addf %385, %387 : vector<16x512xf32>
    %389 = vector.extract_strided_slice %388 {offsets = [0, 0], sizes = [16, 128], strides = [1, 1]} : vector<16x512xf32> to vector<16x128xf32>
    %390 = arith.negf %389 : vector<16x128xf32>
    %391 = math.exp %390 : vector<16x128xf32>
    %cst_114 = arith.constant 1.000000e+00 : f32
    %392 = vector.broadcast %cst_114 : f32 to vector<16x128xf32>
    %393 = arith.addf %392, %391 : vector<16x128xf32>
    %394 = arith.divf %392, %393 : vector<16x128xf32>
    %395 = vector.extract_strided_slice %388 {offsets = [0, 128], sizes = [16, 128], strides = [1, 1]} : vector<16x512xf32> to vector<16x128xf32>
    %396 = arith.negf %395 : vector<16x128xf32>
    %397 = math.exp %396 : vector<16x128xf32>
    %cst_115 = arith.constant 1.000000e+00 : f32
    %398 = vector.broadcast %cst_115 : f32 to vector<16x128xf32>
    %399 = arith.addf %398, %397 : vector<16x128xf32>
    %400 = arith.divf %398, %399 : vector<16x128xf32>
    %401 = vector.extract_strided_slice %388 {offsets = [0, 256], sizes = [16, 128], strides = [1, 1]} : vector<16x512xf32> to vector<16x128xf32>
    %402 = math.tanh %401 : vector<16x128xf32>
    %403 = vector.extract_strided_slice %388 {offsets = [0, 384], sizes = [16, 128], strides = [1, 1]} : vector<16x512xf32> to vector<16x128xf32>
    %404 = arith.negf %403 : vector<16x128xf32>
    %405 = math.exp %404 : vector<16x128xf32>
    %cst_116 = arith.constant 1.000000e+00 : f32
    %406 = vector.broadcast %cst_116 : f32 to vector<16x128xf32>
    %407 = arith.addf %406, %405 : vector<16x128xf32>
    %408 = arith.divf %406, %407 : vector<16x128xf32>
    %409 = arith.mulf %400, %381 : vector<16x128xf32>
    %410 = arith.mulf %394, %402 : vector<16x128xf32>
    %411 = arith.addf %409, %410 : vector<16x128xf32>
    %412 = math.tanh %411 : vector<16x128xf32>
    %413 = arith.mulf %408, %412 : vector<16x128xf32>
    %414 = arith.truncf %413 : vector<16x128xf32> to vector<16x128xbf16>
    %415 = arith.index_cast %383 : i32 to index
    %c0_117 = arith.constant 0 : index
    %416 = vector.load %arg14[%415, %c0_117] : memref<144x128xbf16, #tpu.memory_space<vmem>>, vector<16x128xbf16>
    tpu.vector_store %arg14[%415, %c0_117], %414 {strides = array<i32>} : memref<144x128xbf16, #tpu.memory_space<vmem>>, vector<16x128xbf16>,
    %c1_i32_118 = arith.constant 1 : i32
    %c16_i32_119 = arith.constant 16 : i32
    %417 = arith.muli %c1_i32_118, %c16_i32_119 : i32
    %418 = tpu.assume_multiple %417, 16 : i32
    %419 = arith.index_cast %418 : i32 to index
    %c0_120 = arith.constant 0 : index
    %420 = vector.load %arg15[%419, %c0_120] : memref<144x512xf32, #tpu.memory_space<vmem>>, vector<16x512xf32>
    %421 = arith.truncf %413 : vector<16x128xf32> to vector<16x128xbf16>
    %cst_121 = arith.constant dense<0.000000e+00> : vector<16x512xf32>
    %422 = tpu.matmul %421, %379, %cst_121 {dimension_numbers = #tpu.dot_dimension_numbers<[1], [0], [0], [1], [0, 0, 1, 1], [], []>} : vector<16x128xbf16>, vector<128x512xbf16>, vector<16x512xf32> -> vector<16x512xf32>
    %423 = arith.addf %420, %422 : vector<16x512xf32>
    %424 = vector.extract_strided_slice %423 {offsets = [0, 0], sizes = [16, 128], strides = [1, 1]} : vector<16x512xf32> to vector<16x128xf32>
    %425 = arith.negf %424 : vector<16x128xf32>
    %426 = math.exp %425 : vector<16x128xf32>
    %cst_122 = arith.constant 1.000000e+00 : f32
    %427 = vector.broadcast %cst_122 : f32 to vector<16x128xf32>
    %428 = arith.addf %427, %426 : vector<16x128xf32>
    %429 = arith.divf %427, %428 : vector<16x128xf32>
    %430 = vector.extract_strided_slice %423 {offsets = [0, 128], sizes = [16, 128], strides = [1, 1]} : vector<16x512xf32> to vector<16x128xf32>
    %431 = arith.negf %430 : vector<16x128xf32>
    %432 = math.exp %431 : vector<16x128xf32>
    %cst_123 = arith.constant 1.000000e+00 : f32
    %433 = vector.broadcast %cst_123 : f32 to vector<16x128xf32>
    %434 = arith.addf %433, %432 : vector<16x128xf32>
    %435 = arith.divf %433, %434 : vector<16x128xf32>
    %436 = vector.extract_strided_slice %423 {offsets = [0, 256], sizes = [16, 128], strides = [1, 1]} : vector<16x512xf32> to vector<16x128xf32>
    %437 = math.tanh %436 : vector<16x128xf32>
    %438 = vector.extract_strided_slice %423 {offsets = [0, 384], sizes = [16, 128], strides = [1, 1]} : vector<16x512xf32> to vector<16x128xf32>
    %439 = arith.negf %438 : vector<16x128xf32>
    %440 = math.exp %439 : vector<16x128xf32>
    %cst_124 = arith.constant 1.000000e+00 : f32
    %441 = vector.broadcast %cst_124 : f32 to vector<16x128xf32>
    %442 = arith.addf %441, %440 : vector<16x128xf32>
    %443 = arith.divf %441, %442 : vector<16x128xf32>
    %444 = arith.mulf %435, %411 : vector<16x128xf32>
    %445 = arith.mulf %429, %437 : vector<16x128xf32>
    %446 = arith.addf %444, %445 : vector<16x128xf32>
    %447 = math.tanh %446 : vector<16x128xf32>
    %448 = arith.mulf %443, %447 : vector<16x128xf32>
    %449 = arith.truncf %448 : vector<16x128xf32> to vector<16x128xbf16>
    %450 = arith.index_cast %418 : i32 to index
    %c0_125 = arith.constant 0 : index
    %451 = vector.load %arg14[%450, %c0_125] : memref<144x128xbf16, #tpu.memory_space<vmem>>, vector<16x128xbf16>
    tpu.vector_store %arg14[%450, %c0_125], %449 {strides = array<i32>} : memref<144x128xbf16, #tpu.memory_space<vmem>>, vector<16x128xbf16>,
    %c2_i32_126 = arith.constant 2 : i32
    %c16_i32_127 = arith.constant 16 : i32
    %452 = arith.muli %c2_i32_126, %c16_i32_127 : i32
    %453 = tpu.assume_multiple %452, 16 : i32
    %454 = arith.index_cast %453 : i32 to index
    %c0_128 = arith.constant 0 : index
    %455 = vector.load %arg15[%454, %c0_128] : memref<144x512xf32, #tpu.memory_space<vmem>>, vector<16x512xf32>
    %456 = arith.truncf %448 : vector<16x128xf32> to vector<16x128xbf16>
    %cst_129 = arith.constant dense<0.000000e+00> : vector<16x512xf32>
    %457 = tpu.matmul %456, %379, %cst_129 {dimension_numbers = #tpu.dot_dimension_numbers<[1], [0], [0], [1], [0, 0, 1, 1], [], []>} : vector<16x128xbf16>, vector<128x512xbf16>, vector<16x512xf32> -> vector<16x512xf32>
    %458 = arith.addf %455, %457 : vector<16x512xf32>
    %459 = vector.extract_strided_slice %458 {offsets = [0, 0], sizes = [16, 128], strides = [1, 1]} : vector<16x512xf32> to vector<16x128xf32>
    %460 = arith.negf %459 : vector<16x128xf32>
    %461 = math.exp %460 : vector<16x128xf32>
    %cst_130 = arith.constant 1.000000e+00 : f32
    %462 = vector.broadcast %cst_130 : f32 to vector<16x128xf32>
    %463 = arith.addf %462, %461 : vector<16x128xf32>
    %464 = arith.divf %462, %463 : vector<16x128xf32>
    %465 = vector.extract_strided_slice %458 {offsets = [0, 128], sizes = [16, 128], strides = [1, 1]} : vector<16x512xf32> to vector<16x128xf32>
    %466 = arith.negf %465 : vector<16x128xf32>
    %467 = math.exp %466 : vector<16x128xf32>
    %cst_131 = arith.constant 1.000000e+00 : f32
    %468 = vector.broadcast %cst_131 : f32 to vector<16x128xf32>
    %469 = arith.addf %468, %467 : vector<16x128xf32>
    %470 = arith.divf %468, %469 : vector<16x128xf32>
    %471 = vector.extract_strided_slice %458 {offsets = [0, 256], sizes = [16, 128], strides = [1, 1]} : vector<16x512xf32> to vector<16x128xf32>
    %472 = math.tanh %471 : vector<16x128xf32>
    %473 = vector.extract_strided_slice %458 {offsets = [0, 384], sizes = [16, 128], strides = [1, 1]} : vector<16x512xf32> to vector<16x128xf32>
    %474 = arith.negf %473 : vector<16x128xf32>
    %475 = math.exp %474 : vector<16x128xf32>
    %cst_132 = arith.constant 1.000000e+00 : f32
    %476 = vector.broadcast %cst_132 : f32 to vector<16x128xf32>
    %477 = arith.addf %476, %475 : vector<16x128xf32>
    %478 = arith.divf %476, %477 : vector<16x128xf32>
    %479 = arith.mulf %470, %446 : vector<16x128xf32>
    %480 = arith.mulf %464, %472 : vector<16x128xf32>
    %481 = arith.addf %479, %480 : vector<16x128xf32>
    %482 = math.tanh %481 : vector<16x128xf32>
    %483 = arith.mulf %478, %482 : vector<16x128xf32>
    %484 = arith.truncf %483 : vector<16x128xf32> to vector<16x128xbf16>
    %485 = arith.index_cast %453 : i32 to index
    %c0_133 = arith.constant 0 : index
    %486 = vector.load %arg14[%485, %c0_133] : memref<144x128xbf16, #tpu.memory_space<vmem>>, vector<16x128xbf16>
    tpu.vector_store %arg14[%485, %c0_133], %484 {strides = array<i32>} : memref<144x128xbf16, #tpu.memory_space<vmem>>, vector<16x128xbf16>,
    %c3_i32_134 = arith.constant 3 : i32
    %c16_i32_135 = arith.constant 16 : i32
    %487 = arith.muli %c3_i32_134, %c16_i32_135 : i32
    %488 = tpu.assume_multiple %487, 16 : i32
    %489 = arith.index_cast %488 : i32 to index
    %c0_136 = arith.constant 0 : index
    %490 = vector.load %arg15[%489, %c0_136] : memref<144x512xf32, #tpu.memory_space<vmem>>, vector<16x512xf32>
    %491 = arith.truncf %483 : vector<16x128xf32> to vector<16x128xbf16>
    %cst_137 = arith.constant dense<0.000000e+00> : vector<16x512xf32>
    %492 = tpu.matmul %491, %379, %cst_137 {dimension_numbers = #tpu.dot_dimension_numbers<[1], [0], [0], [1], [0, 0, 1, 1], [], []>} : vector<16x128xbf16>, vector<128x512xbf16>, vector<16x512xf32> -> vector<16x512xf32>
    %493 = arith.addf %490, %492 : vector<16x512xf32>
    %494 = vector.extract_strided_slice %493 {offsets = [0, 0], sizes = [16, 128], strides = [1, 1]} : vector<16x512xf32> to vector<16x128xf32>
    %495 = arith.negf %494 : vector<16x128xf32>
    %496 = math.exp %495 : vector<16x128xf32>
    %cst_138 = arith.constant 1.000000e+00 : f32
    %497 = vector.broadcast %cst_138 : f32 to vector<16x128xf32>
    %498 = arith.addf %497, %496 : vector<16x128xf32>
    %499 = arith.divf %497, %498 : vector<16x128xf32>
    %500 = vector.extract_strided_slice %493 {offsets = [0, 128], sizes = [16, 128], strides = [1, 1]} : vector<16x512xf32> to vector<16x128xf32>
    %501 = arith.negf %500 : vector<16x128xf32>
    %502 = math.exp %501 : vector<16x128xf32>
    %cst_139 = arith.constant 1.000000e+00 : f32
    %503 = vector.broadcast %cst_139 : f32 to vector<16x128xf32>
    %504 = arith.addf %503, %502 : vector<16x128xf32>
    %505 = arith.divf %503, %504 : vector<16x128xf32>
    %506 = vector.extract_strided_slice %493 {offsets = [0, 256], sizes = [16, 128], strides = [1, 1]} : vector<16x512xf32> to vector<16x128xf32>
    %507 = math.tanh %506 : vector<16x128xf32>
    %508 = vector.extract_strided_slice %493 {offsets = [0, 384], sizes = [16, 128], strides = [1, 1]} : vector<16x512xf32> to vector<16x128xf32>
    %509 = arith.negf %508 : vector<16x128xf32>
    %510 = math.exp %509 : vector<16x128xf32>
    %cst_140 = arith.constant 1.000000e+00 : f32
    %511 = vector.broadcast %cst_140 : f32 to vector<16x128xf32>
    %512 = arith.addf %511, %510 : vector<16x128xf32>
    %513 = arith.divf %511, %512 : vector<16x128xf32>
    %514 = arith.mulf %505, %481 : vector<16x128xf32>
    %515 = arith.mulf %499, %507 : vector<16x128xf32>
    %516 = arith.addf %514, %515 : vector<16x128xf32>
    %517 = math.tanh %516 : vector<16x128xf32>
    %518 = arith.mulf %513, %517 : vector<16x128xf32>
    %519 = arith.truncf %518 : vector<16x128xf32> to vector<16x128xbf16>
    %520 = arith.index_cast %488 : i32 to index
    %c0_141 = arith.constant 0 : index
    %521 = vector.load %arg14[%520, %c0_141] : memref<144x128xbf16, #tpu.memory_space<vmem>>, vector<16x128xbf16>
    tpu.vector_store %arg14[%520, %c0_141], %519 {strides = array<i32>} : memref<144x128xbf16, #tpu.memory_space<vmem>>, vector<16x128xbf16>,
    %c4_i32_142 = arith.constant 4 : i32
    %c16_i32_143 = arith.constant 16 : i32
    %522 = arith.muli %c4_i32_142, %c16_i32_143 : i32
    %523 = tpu.assume_multiple %522, 16 : i32
    %524 = arith.index_cast %523 : i32 to index
    %c0_144 = arith.constant 0 : index
    %525 = vector.load %arg15[%524, %c0_144] : memref<144x512xf32, #tpu.memory_space<vmem>>, vector<16x512xf32>
    %526 = arith.truncf %518 : vector<16x128xf32> to vector<16x128xbf16>
    %cst_145 = arith.constant dense<0.000000e+00> : vector<16x512xf32>
    %527 = tpu.matmul %526, %379, %cst_145 {dimension_numbers = #tpu.dot_dimension_numbers<[1], [0], [0], [1], [0, 0, 1, 1], [], []>} : vector<16x128xbf16>, vector<128x512xbf16>, vector<16x512xf32> -> vector<16x512xf32>
    %528 = arith.addf %525, %527 : vector<16x512xf32>
    %529 = vector.extract_strided_slice %528 {offsets = [0, 0], sizes = [16, 128], strides = [1, 1]} : vector<16x512xf32> to vector<16x128xf32>
    %530 = arith.negf %529 : vector<16x128xf32>
    %531 = math.exp %530 : vector<16x128xf32>
    %cst_146 = arith.constant 1.000000e+00 : f32
    %532 = vector.broadcast %cst_146 : f32 to vector<16x128xf32>
    %533 = arith.addf %532, %531 : vector<16x128xf32>
    %534 = arith.divf %532, %533 : vector<16x128xf32>
    %535 = vector.extract_strided_slice %528 {offsets = [0, 128], sizes = [16, 128], strides = [1, 1]} : vector<16x512xf32> to vector<16x128xf32>
    %536 = arith.negf %535 : vector<16x128xf32>
    %537 = math.exp %536 : vector<16x128xf32>
    %cst_147 = arith.constant 1.000000e+00 : f32
    %538 = vector.broadcast %cst_147 : f32 to vector<16x128xf32>
    %539 = arith.addf %538, %537 : vector<16x128xf32>
    %540 = arith.divf %538, %539 : vector<16x128xf32>
    %541 = vector.extract_strided_slice %528 {offsets = [0, 256], sizes = [16, 128], strides = [1, 1]} : vector<16x512xf32> to vector<16x128xf32>
    %542 = math.tanh %541 : vector<16x128xf32>
    %543 = vector.extract_strided_slice %528 {offsets = [0, 384], sizes = [16, 128], strides = [1, 1]} : vector<16x512xf32> to vector<16x128xf32>
    %544 = arith.negf %543 : vector<16x128xf32>
    %545 = math.exp %544 : vector<16x128xf32>
    %cst_148 = arith.constant 1.000000e+00 : f32
    %546 = vector.broadcast %cst_148 : f32 to vector<16x128xf32>
    %547 = arith.addf %546, %545 : vector<16x128xf32>
    %548 = arith.divf %546, %547 : vector<16x128xf32>
    %549 = arith.mulf %540, %516 : vector<16x128xf32>
    %550 = arith.mulf %534, %542 : vector<16x128xf32>
    %551 = arith.addf %549, %550 : vector<16x128xf32>
    %552 = math.tanh %551 : vector<16x128xf32>
    %553 = arith.mulf %548, %552 : vector<16x128xf32>
    %554 = arith.truncf %553 : vector<16x128xf32> to vector<16x128xbf16>
    %555 = arith.index_cast %523 : i32 to index
    %c0_149 = arith.constant 0 : index
    %556 = vector.load %arg14[%555, %c0_149] : memref<144x128xbf16, #tpu.memory_space<vmem>>, vector<16x128xbf16>
    tpu.vector_store %arg14[%555, %c0_149], %554 {strides = array<i32>} : memref<144x128xbf16, #tpu.memory_space<vmem>>, vector<16x128xbf16>,
    %c5_i32_150 = arith.constant 5 : i32
    %c16_i32_151 = arith.constant 16 : i32
    %557 = arith.muli %c5_i32_150, %c16_i32_151 : i32
    %558 = tpu.assume_multiple %557, 16 : i32
    %559 = arith.index_cast %558 : i32 to index
    %c0_152 = arith.constant 0 : index
    %560 = vector.load %arg15[%559, %c0_152] : memref<144x512xf32, #tpu.memory_space<vmem>>, vector<16x512xf32>
    %561 = arith.truncf %553 : vector<16x128xf32> to vector<16x128xbf16>
    %cst_153 = arith.constant dense<0.000000e+00> : vector<16x512xf32>
    %562 = tpu.matmul %561, %379, %cst_153 {dimension_numbers = #tpu.dot_dimension_numbers<[1], [0], [0], [1], [0, 0, 1, 1], [], []>} : vector<16x128xbf16>, vector<128x512xbf16>, vector<16x512xf32> -> vector<16x512xf32>
    %563 = arith.addf %560, %562 : vector<16x512xf32>
    %564 = vector.extract_strided_slice %563 {offsets = [0, 0], sizes = [16, 128], strides = [1, 1]} : vector<16x512xf32> to vector<16x128xf32>
    %565 = arith.negf %564 : vector<16x128xf32>
    %566 = math.exp %565 : vector<16x128xf32>
    %cst_154 = arith.constant 1.000000e+00 : f32
    %567 = vector.broadcast %cst_154 : f32 to vector<16x128xf32>
    %568 = arith.addf %567, %566 : vector<16x128xf32>
    %569 = arith.divf %567, %568 : vector<16x128xf32>
    %570 = vector.extract_strided_slice %563 {offsets = [0, 128], sizes = [16, 128], strides = [1, 1]} : vector<16x512xf32> to vector<16x128xf32>
    %571 = arith.negf %570 : vector<16x128xf32>
    %572 = math.exp %571 : vector<16x128xf32>
    %cst_155 = arith.constant 1.000000e+00 : f32
    %573 = vector.broadcast %cst_155 : f32 to vector<16x128xf32>
    %574 = arith.addf %573, %572 : vector<16x128xf32>
    %575 = arith.divf %573, %574 : vector<16x128xf32>
    %576 = vector.extract_strided_slice %563 {offsets = [0, 256], sizes = [16, 128], strides = [1, 1]} : vector<16x512xf32> to vector<16x128xf32>
    %577 = math.tanh %576 : vector<16x128xf32>
    %578 = vector.extract_strided_slice %563 {offsets = [0, 384], sizes = [16, 128], strides = [1, 1]} : vector<16x512xf32> to vector<16x128xf32>
    %579 = arith.negf %578 : vector<16x128xf32>
    %580 = math.exp %579 : vector<16x128xf32>
    %cst_156 = arith.constant 1.000000e+00 : f32
    %581 = vector.broadcast %cst_156 : f32 to vector<16x128xf32>
    %582 = arith.addf %581, %580 : vector<16x128xf32>
    %583 = arith.divf %581, %582 : vector<16x128xf32>
    %584 = arith.mulf %575, %551 : vector<16x128xf32>
    %585 = arith.mulf %569, %577 : vector<16x128xf32>
    %586 = arith.addf %584, %585 : vector<16x128xf32>
    %587 = math.tanh %586 : vector<16x128xf32>
    %588 = arith.mulf %583, %587 : vector<16x128xf32>
    %589 = arith.truncf %588 : vector<16x128xf32> to vector<16x128xbf16>
    %590 = arith.index_cast %558 : i32 to index
    %c0_157 = arith.constant 0 : index
    %591 = vector.load %arg14[%590, %c0_157] : memref<144x128xbf16, #tpu.memory_space<vmem>>, vector<16x128xbf16>
    tpu.vector_store %arg14[%590, %c0_157], %589 {strides = array<i32>} : memref<144x128xbf16, #tpu.memory_space<vmem>>, vector<16x128xbf16>,
    %c6_i32_158 = arith.constant 6 : i32
    %c16_i32_159 = arith.constant 16 : i32
    %592 = arith.muli %c6_i32_158, %c16_i32_159 : i32
    %593 = tpu.assume_multiple %592, 16 : i32
    %594 = arith.index_cast %593 : i32 to index
    %c0_160 = arith.constant 0 : index
    %595 = vector.load %arg15[%594, %c0_160] : memref<144x512xf32, #tpu.memory_space<vmem>>, vector<16x512xf32>
    %596 = arith.truncf %588 : vector<16x128xf32> to vector<16x128xbf16>
    %cst_161 = arith.constant dense<0.000000e+00> : vector<16x512xf32>
    %597 = tpu.matmul %596, %379, %cst_161 {dimension_numbers = #tpu.dot_dimension_numbers<[1], [0], [0], [1], [0, 0, 1, 1], [], []>} : vector<16x128xbf16>, vector<128x512xbf16>, vector<16x512xf32> -> vector<16x512xf32>
    %598 = arith.addf %595, %597 : vector<16x512xf32>
    %599 = vector.extract_strided_slice %598 {offsets = [0, 0], sizes = [16, 128], strides = [1, 1]} : vector<16x512xf32> to vector<16x128xf32>
    %600 = arith.negf %599 : vector<16x128xf32>
    %601 = math.exp %600 : vector<16x128xf32>
    %cst_162 = arith.constant 1.000000e+00 : f32
    %602 = vector.broadcast %cst_162 : f32 to vector<16x128xf32>
    %603 = arith.addf %602, %601 : vector<16x128xf32>
    %604 = arith.divf %602, %603 : vector<16x128xf32>
    %605 = vector.extract_strided_slice %598 {offsets = [0, 128], sizes = [16, 128], strides = [1, 1]} : vector<16x512xf32> to vector<16x128xf32>
    %606 = arith.negf %605 : vector<16x128xf32>
    %607 = math.exp %606 : vector<16x128xf32>
    %cst_163 = arith.constant 1.000000e+00 : f32
    %608 = vector.broadcast %cst_163 : f32 to vector<16x128xf32>
    %609 = arith.addf %608, %607 : vector<16x128xf32>
    %610 = arith.divf %608, %609 : vector<16x128xf32>
    %611 = vector.extract_strided_slice %598 {offsets = [0, 256], sizes = [16, 128], strides = [1, 1]} : vector<16x512xf32> to vector<16x128xf32>
    %612 = math.tanh %611 : vector<16x128xf32>
    %613 = vector.extract_strided_slice %598 {offsets = [0, 384], sizes = [16, 128], strides = [1, 1]} : vector<16x512xf32> to vector<16x128xf32>
    %614 = arith.negf %613 : vector<16x128xf32>
    %615 = math.exp %614 : vector<16x128xf32>
    %cst_164 = arith.constant 1.000000e+00 : f32
    %616 = vector.broadcast %cst_164 : f32 to vector<16x128xf32>
    %617 = arith.addf %616, %615 : vector<16x128xf32>
    %618 = arith.divf %616, %617 : vector<16x128xf32>
    %619 = arith.mulf %610, %586 : vector<16x128xf32>
    %620 = arith.mulf %604, %612 : vector<16x128xf32>
    %621 = arith.addf %619, %620 : vector<16x128xf32>
    %622 = math.tanh %621 : vector<16x128xf32>
    %623 = arith.mulf %618, %622 : vector<16x128xf32>
    %624 = arith.truncf %623 : vector<16x128xf32> to vector<16x128xbf16>
    %625 = arith.index_cast %593 : i32 to index
    %c0_165 = arith.constant 0 : index
    %626 = vector.load %arg14[%625, %c0_165] : memref<144x128xbf16, #tpu.memory_space<vmem>>, vector<16x128xbf16>
    tpu.vector_store %arg14[%625, %c0_165], %624 {strides = array<i32>} : memref<144x128xbf16, #tpu.memory_space<vmem>>, vector<16x128xbf16>,
    %c7_i32_166 = arith.constant 7 : i32
    %c16_i32_167 = arith.constant 16 : i32
    %627 = arith.muli %c7_i32_166, %c16_i32_167 : i32
    %628 = tpu.assume_multiple %627, 16 : i32
    %629 = arith.index_cast %628 : i32 to index
    %c0_168 = arith.constant 0 : index
    %630 = vector.load %arg15[%629, %c0_168] : memref<144x512xf32, #tpu.memory_space<vmem>>, vector<16x512xf32>
    %631 = arith.truncf %623 : vector<16x128xf32> to vector<16x128xbf16>
    %cst_169 = arith.constant dense<0.000000e+00> : vector<16x512xf32>
    %632 = tpu.matmul %631, %379, %cst_169 {dimension_numbers = #tpu.dot_dimension_numbers<[1], [0], [0], [1], [0, 0, 1, 1], [], []>} : vector<16x128xbf16>, vector<128x512xbf16>, vector<16x512xf32> -> vector<16x512xf32>
    %633 = arith.addf %630, %632 : vector<16x512xf32>
    %634 = vector.extract_strided_slice %633 {offsets = [0, 0], sizes = [16, 128], strides = [1, 1]} : vector<16x512xf32> to vector<16x128xf32>
    %635 = arith.negf %634 : vector<16x128xf32>
    %636 = math.exp %635 : vector<16x128xf32>
    %cst_170 = arith.constant 1.000000e+00 : f32
    %637 = vector.broadcast %cst_170 : f32 to vector<16x128xf32>
    %638 = arith.addf %637, %636 : vector<16x128xf32>
    %639 = arith.divf %637, %638 : vector<16x128xf32>
    %640 = vector.extract_strided_slice %633 {offsets = [0, 128], sizes = [16, 128], strides = [1, 1]} : vector<16x512xf32> to vector<16x128xf32>
    %641 = arith.negf %640 : vector<16x128xf32>
    %642 = math.exp %641 : vector<16x128xf32>
    %cst_171 = arith.constant 1.000000e+00 : f32
    %643 = vector.broadcast %cst_171 : f32 to vector<16x128xf32>
    %644 = arith.addf %643, %642 : vector<16x128xf32>
    %645 = arith.divf %643, %644 : vector<16x128xf32>
    %646 = vector.extract_strided_slice %633 {offsets = [0, 256], sizes = [16, 128], strides = [1, 1]} : vector<16x512xf32> to vector<16x128xf32>
    %647 = math.tanh %646 : vector<16x128xf32>
    %648 = vector.extract_strided_slice %633 {offsets = [0, 384], sizes = [16, 128], strides = [1, 1]} : vector<16x512xf32> to vector<16x128xf32>
    %649 = arith.negf %648 : vector<16x128xf32>
    %650 = math.exp %649 : vector<16x128xf32>
    %cst_172 = arith.constant 1.000000e+00 : f32
    %651 = vector.broadcast %cst_172 : f32 to vector<16x128xf32>
    %652 = arith.addf %651, %650 : vector<16x128xf32>
    %653 = arith.divf %651, %652 : vector<16x128xf32>
    %654 = arith.mulf %645, %621 : vector<16x128xf32>
    %655 = arith.mulf %639, %647 : vector<16x128xf32>
    %656 = arith.addf %654, %655 : vector<16x128xf32>
    %657 = math.tanh %656 : vector<16x128xf32>
    %658 = arith.mulf %653, %657 : vector<16x128xf32>
    %659 = arith.truncf %658 : vector<16x128xf32> to vector<16x128xbf16>
    %660 = arith.index_cast %628 : i32 to index
    %c0_173 = arith.constant 0 : index
    %661 = vector.load %arg14[%660, %c0_173] : memref<144x128xbf16, #tpu.memory_space<vmem>>, vector<16x128xbf16>
    tpu.vector_store %arg14[%660, %c0_173], %659 {strides = array<i32>} : memref<144x128xbf16, #tpu.memory_space<vmem>>, vector<16x128xbf16>,
    %c8_i32_174 = arith.constant 8 : i32
    %c16_i32_175 = arith.constant 16 : i32
    %662 = arith.muli %c8_i32_174, %c16_i32_175 : i32
    %663 = tpu.assume_multiple %662, 16 : i32
    %664 = arith.index_cast %663 : i32 to index
    %c0_176 = arith.constant 0 : index
    %665 = vector.load %arg15[%664, %c0_176] : memref<144x512xf32, #tpu.memory_space<vmem>>, vector<16x512xf32>
    %666 = arith.truncf %658 : vector<16x128xf32> to vector<16x128xbf16>
    %cst_177 = arith.constant dense<0.000000e+00> : vector<16x512xf32>
    %667 = tpu.matmul %666, %379, %cst_177 {dimension_numbers = #tpu.dot_dimension_numbers<[1], [0], [0], [1], [0, 0, 1, 1], [], []>} : vector<16x128xbf16>, vector<128x512xbf16>, vector<16x512xf32> -> vector<16x512xf32>
    %668 = arith.addf %665, %667 : vector<16x512xf32>
    %669 = vector.extract_strided_slice %668 {offsets = [0, 0], sizes = [16, 128], strides = [1, 1]} : vector<16x512xf32> to vector<16x128xf32>
    %670 = arith.negf %669 : vector<16x128xf32>
    %671 = math.exp %670 : vector<16x128xf32>
    %cst_178 = arith.constant 1.000000e+00 : f32
    %672 = vector.broadcast %cst_178 : f32 to vector<16x128xf32>
    %673 = arith.addf %672, %671 : vector<16x128xf32>
    %674 = arith.divf %672, %673 : vector<16x128xf32>
    %675 = vector.extract_strided_slice %668 {offsets = [0, 128], sizes = [16, 128], strides = [1, 1]} : vector<16x512xf32> to vector<16x128xf32>
    %676 = arith.negf %675 : vector<16x128xf32>
    %677 = math.exp %676 : vector<16x128xf32>
    %cst_179 = arith.constant 1.000000e+00 : f32
    %678 = vector.broadcast %cst_179 : f32 to vector<16x128xf32>
    %679 = arith.addf %678, %677 : vector<16x128xf32>
    %680 = arith.divf %678, %679 : vector<16x128xf32>
    %681 = vector.extract_strided_slice %668 {offsets = [0, 256], sizes = [16, 128], strides = [1, 1]} : vector<16x512xf32> to vector<16x128xf32>
    %682 = math.tanh %681 : vector<16x128xf32>
    %683 = vector.extract_strided_slice %668 {offsets = [0, 384], sizes = [16, 128], strides = [1, 1]} : vector<16x512xf32> to vector<16x128xf32>
    %684 = arith.negf %683 : vector<16x128xf32>
    %685 = math.exp %684 : vector<16x128xf32>
    %cst_180 = arith.constant 1.000000e+00 : f32
    %686 = vector.broadcast %cst_180 : f32 to vector<16x128xf32>
    %687 = arith.addf %686, %685 : vector<16x128xf32>
    %688 = arith.divf %686, %687 : vector<16x128xf32>
    %689 = arith.mulf %680, %656 : vector<16x128xf32>
    %690 = arith.mulf %674, %682 : vector<16x128xf32>
    %691 = arith.addf %689, %690 : vector<16x128xf32>
    %692 = math.tanh %691 : vector<16x128xf32>
    %693 = arith.mulf %688, %692 : vector<16x128xf32>
    %694 = arith.truncf %693 : vector<16x128xf32> to vector<16x128xbf16>
    %695 = arith.index_cast %663 : i32 to index
    %c0_181 = arith.constant 0 : index
    %696 = vector.load %arg14[%695, %c0_181] : memref<144x128xbf16, #tpu.memory_space<vmem>>, vector<16x128xbf16>
    tpu.vector_store %arg14[%695, %c0_181], %694 {strides = array<i32>} : memref<144x128xbf16, #tpu.memory_space<vmem>>, vector<16x128xbf16>,
    %c9_i32_182 = arith.constant 9 : i32
    return
  }
}

module attributes {stable_mosaic.version = 11 : i64} {
  func.func @proj_kernel(%arg0: i32, %arg1: memref<32x128xbf16, #tpu.memory_space<vmem>>, %arg2: memref<128x256xbf16, #tpu.memory_space<vmem>>, %arg3: memref<1x256xf32, #tpu.memory_space<vmem>>, %arg4: memref<32x256xf32, #tpu.memory_space<vmem>>) attributes {dimension_semantics = [#tpu.dimension_semantics<parallel>], iteration_bounds = array<i64: 1>, scalar_prefetch = 0 : i64, scratch_operands = 0 : i64, tpu.core_type = #tpu.core_type<tc>, window_params = [{pipeline_mode = #tpu.pipeline_mode<synchronous>, transform_indices = @transform_0, window_bounds = array<i64: 32, 128>}, {transform_indices = @transform_1, window_bounds = array<i64: 128, 256>}, {transform_indices = @transform_2, window_bounds = array<i64: 1, 256>}, {transform_indices = @transform_3, window_bounds = array<i64: 32, 256>}]} {
    %c0 = arith.constant 0 : index
    %c0_0 = arith.constant 0 : index
    %0 = vector.load %arg1[%c0, %c0_0] : memref<32x128xbf16, #tpu.memory_space<vmem>>, vector<32x128xbf16>
    %c0_1 = arith.constant 0 : index
    %c0_2 = arith.constant 0 : index
    %1 = vector.load %arg2[%c0_1, %c0_2] : memref<128x256xbf16, #tpu.memory_space<vmem>>, vector<128x256xbf16>
    %cst = arith.constant dense<0.000000e+00> : vector<32x256xf32>
    %2 = tpu.matmul %0, %1, %cst {dimension_numbers = #tpu.dot_dimension_numbers<[1], [0], [0], [1], [0, 0, 1, 1], [], []>} : vector<32x128xbf16>, vector<128x256xbf16>, vector<32x256xf32> -> vector<32x256xf32>
    %c0_3 = arith.constant 0 : index
    %c0_4 = arith.constant 0 : index
    %3 = vector.load %arg3[%c0_3, %c0_4] : memref<1x256xf32, #tpu.memory_space<vmem>>, vector<1x256xf32>
    %4 = vector.broadcast %3 : vector<1x256xf32> to vector<32x256xf32>
    %5 = arith.addf %2, %4 : vector<32x256xf32>
    %c0_5 = arith.constant 0 : index
    %c0_6 = arith.constant 0 : index
    %6 = vector.load %arg4[%c0_5, %c0_6] : memref<32x256xf32, #tpu.memory_space<vmem>>, vector<32x256xf32>
    tpu.vector_store %arg4[%c0_5, %c0_6], %5 {strides = array<i32>} : memref<32x256xf32, #tpu.memory_space<vmem>>, vector<32x256xf32>,
    return
  }
  func.func @transform_0(%arg0: i32) -> (i32, i32) {
    %c0_i32 = arith.constant 0 : i32
    %c0_i32_0 = arith.constant 0 : i32
    %c0_i32_1 = arith.constant 0 : i32
    return %c0_i32, %c0_i32_0 : i32, i32
  }
  func.func @transform_1(%arg0: i32) -> (i32, i32) {
    %c0_i32 = arith.constant 0 : i32
    %c0_i32_0 = arith.constant 0 : i32
    return %c0_i32, %arg0 : i32, i32
  }
  func.func @transform_2(%arg0: i32) -> (i32, i32) {
    %c0_i32 = arith.constant 0 : i32
    %c0_i32_0 = arith.constant 0 : i32
    return %c0_i32, %arg0 : i32, i32
  }
  func.func @transform_3(%arg0: i32) -> (i32, i32) {
    %c0_i32 = arith.constant 0 : i32
    %c0_i32_0 = arith.constant 0 : i32
    return %c0_i32, %arg0 : i32, i32
  }
}

</mosaic_0001>

<llo_original>
// kernel: conv_lstm_forward.3
$region0: #{conv_lstm_forward.3}
  #allocation0 [shape = 'u32[]', space=smem, size = 0x4, offset = 0x4, fixed_abs, tag = 'smem constant byte address 0x4 - core index']
  #allocation1 [shape = 'u32[144,128]{1,0:T(1,128)}', space=vmem, size = 0x12000, scoped, tag = 'internal scratch']
  %s0 = inlined_call_operand.vmem [shape: bf16[32,128], index: 0, kind: input, shape index: {}]
  %s1 = inlined_call_operand.vmem [shape: bf16[128,256], index: 1, kind: input, shape index: {}]
  %s2 = inlined_call_operand.vmem [shape: f32[1,256], index: 2, kind: input, shape index: {}]
  %s3 = inlined_call_operand.hbm [shape: f32[32,256], index: 3, kind: output, shape index: {}]
  %s4 = sld [smem:[#allocation0]]
  $region22: #{conv_lstm_forward.3} parent=0
    _
  %s6 = ssub.s32 1, %s4
  %s7 = scalar_select 0, %s6, %s4
  $region1: #{conv_lstm_forward.3} parent=0
    #allocation2 [shape = 'u8[32768]{0}', space=vmem, size = 0x8000, scoped, tag = 'output window, operand 0, single buffered']
    #allocation3 [shape = 's32[1]{0}', space=sflag, size = 0x4, scoped, tag = 'scoped memory for conv_lstm_forward.3']
    %8 = vsyncpa [#allocation3], 0
    // Predicated region
    $region2: #{conv_lstm_forward.3} parent=1 // pred_check
      _
    $region3: #{conv_lstm_forward.3} parent=1 // pred_check_branch
      %10 = sbr.rel (0) target = $region5
    $region4: #{conv_lstm_forward.3} parent=1 // pred_region
      _
    $region5: #{conv_lstm_forward.3} parent=1 // pred_fallthru
      _
    // Predicated region
    $region6: #{conv_lstm_forward.3} parent=1 // pred_check
      _
    $region7: #{conv_lstm_forward.3} parent=1 // pred_check_branch
      %12 = sbr.rel (0) target = $region9
    $region8: #{conv_lstm_forward.3} parent=1 // pred_region
      _
    $region9: #{conv_lstm_forward.3} parent=1 // pred_fallthru
      _
    // Predicated region
    $region10: #{conv_lstm_forward.3} parent=1 // pred_check
      _
    $region11: #{conv_lstm_forward.3} parent=1 // pred_check_branch
      %14 = sbr.rel (0) target = $region13
    $region12: #{conv_lstm_forward.3} parent=1 // pred_region
      _
    $region13: #{conv_lstm_forward.3} parent=1 // pred_fallthru
      _
    %v16 = vld [vmem:[%s0] sm:$0xf]
    %v17 = vld [vmem:[%s0 + $0x4] sm:$0xf]
    %v18 = vld [vmem:[%s0 + $0x8] sm:$0xf]
    %v19 = vld [vmem:[%s0 + $0xc] sm:$0xf]
    %v20 = vld [vmem:[%s1] sm:$0xff]
    %v21 = vld [vmem:[%s1 + $0x8] sm:$0xff]
    %v22 = vld [vmem:[%s1 + $0x10] sm:$0xff]
    %v23 = vld [vmem:[%s1 + $0x18] sm:$0xff]
    %v24 = vld [vmem:[%s1 + $0x20] sm:$0xff]
    %v25 = vld [vmem:[%s1 + $0x28] sm:$0xff]
    %v26 = vld [vmem:[%s1 + $0x30] sm:$0xff]
    %v27 = vld [vmem:[%s1 + $0x38] sm:$0xff]
    %v28 = vld [vmem:[%s1 + $0x40] sm:$0xff]
    %v29 = vld [vmem:[%s1 + $0x48] sm:$0xff]
    %v30 = vld [vmem:[%s1 + $0x50] sm:$0xff]
    %v31 = vld [vmem:[%s1 + $0x58] sm:$0xff]
    %v32 = vld [vmem:[%s1 + $0x60] sm:$0xff]
    %v33 = vld [vmem:[%s1 + $0x68] sm:$0xff]
    %v34 = vld [vmem:[%s1 + $0x70] sm:$0xff]
    %v35 = vld [vmem:[%s1 + $0x78] sm:$0xff]
    %v36 = vld [vmem:[%s2] sm:$0x3]
    %v38 = vlaneseq
    %v39 = vshrl.u32 %v38, 7
    %v40 = vsub.s32 0, %v39
    %v41 = vrot.slane %v36, %v40
    %v42 = vlaneseq
    %v43 = vshrl.u32 %v42, 7
    %v44 = vsub.s32 1, %v43
    %v45 = vrot.slane %v36, %v44
    %v52 = vunpack.c.l.b16 %v16
    %v53 = vunpack.c.l.b16 %v17
    %v54 = vunpack.c.l.b16 %v18
    %v55 = vunpack.c.l.b16 %v19
    %v56 = vpack.c.b16 %v53, %v52
    %v57 = vpack.c.b16 %v55, %v54
    %v76 = vunpack.c.l.b16 %v20
    %v77 = vunpack.c.h.b16 %v20
    %v78 = vunpack.c.l.b16 %v21
    %v79 = vunpack.c.h.b16 %v21
    %v80 = vunpack.c.l.b16 %v22
    %v81 = vunpack.c.h.b16 %v22
    %v82 = vunpack.c.l.b16 %v23
    %v83 = vunpack.c.h.b16 %v23
    %v84 = vunpack.c.l.b16 %v24
    %v85 = vunpack.c.h.b16 %v24
    %v86 = vunpack.c.l.b16 %v25
    %v87 = vunpack.c.h.b16 %v25
    %v88 = vunpack.c.l.b16 %v26
    %v89 = vunpack.c.h.b16 %v26
    %v90 = vunpack.c.l.b16 %v27
    %v91 = vunpack.c.h.b16 %v27
    %v92 = vunpack.c.l.b16 %v28
    %v93 = vunpack.c.h.b16 %v28
    %v94 = vunpack.c.l.b16 %v29
    %v95 = vunpack.c.h.b16 %v29
    %v96 = vunpack.c.l.b16 %v30
    %v97 = vunpack.c.h.b16 %v30
    %v98 = vunpack.c.l.b16 %v31
    %v99 = vunpack.c.h.b16 %v31
    %v100 = vunpack.c.l.b16 %v32
    %v101 = vunpack.c.h.b16 %v32
    %v102 = vunpack.c.l.b16 %v33
    %v103 = vunpack.c.h.b16 %v33
    %v104 = vunpack.c.l.b16 %v34
    %v105 = vunpack.c.h.b16 %v34
    %v106 = vunpack.c.l.b16 %v35
    %v107 = vunpack.c.h.b16 %v35
    %v108 = vpack.c.b16 %v78, %v76
    %v109 = vpack.c.b16 %v79, %v77
    %v110 = vpack.c.b16 %v82, %v80
    %v111 = vpack.c.b16 %v83, %v81
    %v112 = vpack.c.b16 %v86, %v84
    %v113 = vpack.c.b16 %v87, %v85
    %v114 = vpack.c.b16 %v90, %v88
    %v115 = vpack.c.b16 %v91, %v89
    %v116 = vpack.c.b16 %v94, %v92
    %v117 = vpack.c.b16 %v95, %v93
    %v118 = vpack.c.b16 %v98, %v96
    %v119 = vpack.c.b16 %v99, %v97
    %v120 = vpack.c.b16 %v102, %v100
    %v121 = vpack.c.b16 %v103, %v101
    %v122 = vpack.c.b16 %v106, %v104
    %v123 = vpack.c.b16 %v107, %v105
    %140 = vmatprep.subr.bf16.mxu0 %v109
    %141 = vmatpush1.bf16.msra.mxu0 %v108
    %142 = vmatprep.subr.bf16.mxu0 %v111
    %143 = vmatpush1.bf16.msra.mxu0 %v110
    %144 = vmatprep.subr.bf16.mxu0 %v113
    %145 = vmatpush1.bf16.msra.mxu0 %v112
    %146 = vmatprep.subr.bf16.mxu0 %v115
    %147 = vmatpush1.bf16.msra.mxu0 %v114
    %148 = vmatprep.subr.bf16.mxu0 %v117
    %149 = vmatpush1.bf16.msra.mxu0 %v116
    %150 = vmatprep.subr.bf16.mxu0 %v119
    %151 = vmatpush1.bf16.msra.mxu0 %v118
    %152 = vmatprep.subr.bf16.mxu0 %v121
    %153 = vmatpush1.bf16.msra.mxu0 %v120
    %154 = vmatprep.subr.bf16.mxu0 %v123
    %155 = vmatpush1.bf16.msra.mxu0 %v122
    %156 = vmatprep.subr.bf16.mxu0 0
    %157 = vmatpush1.bf16.msra.mxu0 0
    %158 = vmatprep.subr.bf16.mxu0 0
    %159 = vmatpush1.bf16.msra.mxu0 0
    %160 = vmatprep.subr.bf16.mxu0 0
    %161 = vmatpush1.bf16.msra.mxu0 0
    %162 = vmatprep.subr.bf16.mxu0 0
    %163 = vmatpush1.bf16.msra.mxu0 0
    %164 = vmatprep.subr.bf16.mxu0 0
    %165 = vmatpush1.bf16.msra.mxu0 0
    %166 = vmatprep.subr.bf16.mxu0 0
    %167 = vmatpush1.bf16.msra.mxu0 0
    %168 = vmatprep.subr.bf16.mxu0 0
    %169 = vmatpush1.bf16.msra.mxu0 0
    %170 = vmatprep.subr.bf16.mxu0 0
    %171 = vmatpush1.bf16.msra.mxu0 0
    %172 = vmatprep.mubr.bf16.mxu0 0
    %173 = vmatmul.mubr.bf16.gmra.mrb[0].mxu0 %v56
    %v174 = vpop.f32.mrb[0].mxu0
    %v175 = vadd.f32 %v41, %v174
    %v176 = vpop.f32.mrb[0].mxu0
    %v177 = vadd.f32 %v45, %v176
    %v178 = vpop.f32.mrb[0].mxu0
    %v179 = vadd.f32 %v41, %v178
    %v180 = vpop.f32.mrb[0].mxu0
    %v181 = vadd.f32 %v45, %v180
    %182 = vmatprep.mubr.bf16.mxu0 0
    %183 = vmatmul.mubr.bf16.gmra.mrb[0].mxu0 %v57
    %v184 = vpop.f32.mrb[0].mxu0
    %v185 = vadd.f32 %v41, %v184
    %v186 = vpop.f32.mrb[0].mxu0
    %v187 = vadd.f32 %v45, %v186
    %v188 = vpop.f32.mrb[0].mxu0
    %v189 = vadd.f32 %v41, %v188
    %v190 = vpop.f32.mrb[0].mxu0
    %v191 = vadd.f32 %v45, %v190
    %192 = vdwg.mxu0
    %193 = vst [vmem:[#allocation2] sm:$0xff] %v175
    %194 = vst [vmem:[#allocation2 + $0x8] sm:$0xff] %v177
    %195 = vst [vmem:[#allocation2 + $0x10] sm:$0xff] %v179
    %196 = vst [vmem:[#allocation2 + $0x18] sm:$0xff] %v181
    %197 = vst [vmem:[#allocation2 + $0x20] sm:$0xff] %v185
    %198 = vst [vmem:[#allocation2 + $0x28] sm:$0xff] %v187
    %199 = vst [vmem:[#allocation2 + $0x30] sm:$0xff] %v189
    %200 = vst [vmem:[#allocation2 + $0x38] sm:$0xff] %v191
    // Predicated region
    $region14: #{conv_lstm_forward.3} parent=1 // pred_check
      _
    $region15: #{conv_lstm_forward.3} parent=1 // pred_check_branch
      %202 = sbr.rel (0) target = $region17
    $region16: #{conv_lstm_forward.3} parent=1 // pred_region
      %s204 = ssub.s32 1024, 1024
      %205 = vsyncadd [#allocation3], %s204
      %s206 = sshll.u32 [#allocation2], 4
      %s207 = int_to_ptr.vmem [resolvable:$true] %s206
      %212 = dma.vmem_to_hbm [thread:$0]  %s207, 1024, %s3, [#allocation3], 256, 256, 16
    $region17: #{conv_lstm_forward.3} parent=1 // pred_fallthru
      _
    // Predicated region
    $region18: #{conv_lstm_forward.3} parent=1 // pred_check
      _
    $region19: #{conv_lstm_forward.3} parent=1 // pred_check_branch
      %214 = sbr.rel (0) target = $region21
    $region20: #{conv_lstm_forward.3} parent=1 // pred_region
      %215 = dma.done [#allocation3], 1024
    $region21: #{conv_lstm_forward.3} parent=1 // pred_fallthru
      _
    %216 = vsyncpa [#allocation3], 1

// kernel: conv_lstm_forward.2
$region0: #{conv_lstm_forward.2}
  #allocation0 [shape = 'u32[]', space=smem, size = 0x4, offset = 0x4, fixed_abs, tag = 'smem constant byte address 0x4 - core index']
  #allocation1 [shape = 'u32[144,128]{1,0:T(1,128)}', space=vmem, size = 0x12000, scoped, tag = 'internal scratch']
  #allocation2 [shape = 'f32[144,512]{1,0:T(8,128)}', space=vmem, size = 0x48000, scoped, tag = 'scratch operand']
  #allocation3 [shape = 'bf16[144,128]{1,0:T(16,128)(2,1)}', space=vmem, size = 0x9000, scoped, tag = 'scratch operand']
  %s0 = inlined_call_operand.vmem [shape: f32[16,3], index: 0, kind: input, shape index: {}]
  %s1 = inlined_call_operand.vmem [shape: f32[3,64], index: 1, kind: input, shape index: {}]
  %s2 = inlined_call_operand.vmem [shape: f32[1,64], index: 2, kind: input, shape index: {}]
  %s3 = inlined_call_operand.hbm [shape: f32[64,128], index: 3, kind: input, shape index: {}]
  %s4 = inlined_call_operand.vmem [shape: f32[1,128], index: 4, kind: input, shape index: {}]
  %s5 = inlined_call_operand.vmem [shape: f32[1,128], index: 5, kind: input, shape index: {}]
  %s6 = inlined_call_operand.vmem [shape: f32[1,128], index: 6, kind: input, shape index: {}]
  %s7 = inlined_call_operand.vmem [shape: bf16[128,128], index: 7, kind: input, shape index: {}]
  %s8 = inlined_call_operand.vmem [shape: bf16[128,512], index: 8, kind: input, shape index: {}]
  %s9 = inlined_call_operand.vmem [shape: bf16[128,512], index: 9, kind: input, shape index: {}]
  %s10 = inlined_call_operand.vmem [shape: f32[1,512], index: 10, kind: input, shape index: {}]
  %s11 = inlined_call_operand.vmem [shape: bf16[128,512], index: 11, kind: input, shape index: {}]
  %s12 = inlined_call_operand.vmem [shape: bf16[128,512], index: 12, kind: input, shape index: {}]
  %s13 = inlined_call_operand.vmem [shape: f32[1,512], index: 13, kind: input, shape index: {}]
  %s14 = inlined_call_operand.vmem [shape: bf16[144,128], index: 14, kind: output, shape index: {}]
  %s15 = sld [smem:[#allocation0]]
  $region70: #{conv_lstm_forward.2} parent=0
    _
  %s17 = ssub.s32 1, %s15
  %s18 = scalar_select 0, %s17, %s15
  $region1: #{conv_lstm_forward.2} parent=0
    #allocation4 [shape = 'u8[32768]{0}', space=vmem, size = 0x8000, scoped, tag = 'input window, operand 3, single buffered']
    #allocation5 [shape = 's32[1]{0}', space=sflag, size = 0x4, scoped, tag = 'scoped memory for conv_lstm_forward.2']
    %19 = vsyncpa [#allocation5], 0
    // Predicated region
    $region2: #{conv_lstm_forward.2} parent=1 // pred_check
      _
    $region3: #{conv_lstm_forward.2} parent=1 // pred_check_branch
      %21 = sbr.rel (0) target = $region5
    $region4: #{conv_lstm_forward.2} parent=1 // pred_region
      _
    $region5: #{conv_lstm_forward.2} parent=1 // pred_fallthru
      _
    // Predicated region
    $region6: #{conv_lstm_forward.2} parent=1 // pred_check
      _
    $region7: #{conv_lstm_forward.2} parent=1 // pred_check_branch
      %23 = sbr.rel (0) target = $region9
    $region8: #{conv_lstm_forward.2} parent=1 // pred_region
      _
    $region9: #{conv_lstm_forward.2} parent=1 // pred_fallthru
      _
    // Predicated region
    $region10: #{conv_lstm_forward.2} parent=1 // pred_check
      _
    $region11: #{conv_lstm_forward.2} parent=1 // pred_check_branch
      %25 = sbr.rel (0) target = $region13
    $region12: #{conv_lstm_forward.2} parent=1 // pred_region
      _
    $region13: #{conv_lstm_forward.2} parent=1 // pred_fallthru
      _
    // Predicated region
    $region14: #{conv_lstm_forward.2} parent=1 // pred_check
      _
    $region15: #{conv_lstm_forward.2} parent=1 // pred_check_branch
      %27 = sbr.rel (0) target = $region17
    $region16: #{conv_lstm_forward.2} parent=1 // pred_region
      %s29 = ssub.s32 1024, 1024
      %30 = vsyncadd [#allocation5], %s29
      %s31 = sshll.u32 [#allocation4], 4
      %s32 = int_to_ptr.vmem [resolvable:$true] %s31
      %37 = dma.hbm_to_vmem [thread:$0]  %s3, 1024, %s32, [#allocation5], 128, 128, 8
    $region17: #{conv_lstm_forward.2} parent=1 // pred_fallthru
      _
    // Predicated region
    $region18: #{conv_lstm_forward.2} parent=1 // pred_check
      _
    $region19: #{conv_lstm_forward.2} parent=1 // pred_check_branch
      %39 = sbr.rel (0) target = $region21
    $region20: #{conv_lstm_forward.2} parent=1 // pred_region
      _
    $region21: #{conv_lstm_forward.2} parent=1 // pred_fallthru
      _
    // Predicated region
    $region22: #{conv_lstm_forward.2} parent=1 // pred_check
      _
    $region23: #{conv_lstm_forward.2} parent=1 // pred_check_branch
      %41 = sbr.rel (0) target = $region25
    $region24: #{conv_lstm_forward.2} parent=1 // pred_region
      _
    $region25: #{conv_lstm_forward.2} parent=1 // pred_fallthru
      _
    // Predicated region
    $region26: #{conv_lstm_forward.2} parent=1 // pred_check
      _
    $region27: #{conv_lstm_forward.2} parent=1 // pred_check_branch
      %43 = sbr.rel (0) target = $region29
    $region28: #{conv_lstm_forward.2} parent=1 // pred_region
      _
    $region29: #{conv_lstm_forward.2} parent=1 // pred_fallthru
      _
    // Predicated region
    $region30: #{conv_lstm_forward.2} parent=1 // pred_check
      _
    $region31: #{conv_lstm_forward.2} parent=1 // pred_check_branch
      %45 = sbr.rel (0) target = $region33
    $region32: #{conv_lstm_forward.2} parent=1 // pred_region
      _
    $region33: #{conv_lstm_forward.2} parent=1 // pred_fallthru
      _
    // Predicated region
    $region34: #{conv_lstm_forward.2} parent=1 // pred_check
      _
    $region35: #{conv_lstm_forward.2} parent=1 // pred_check_branch
      %47 = sbr.rel (0) target = $region37
    $region36: #{conv_lstm_forward.2} parent=1 // pred_region
      _
    $region37: #{conv_lstm_forward.2} parent=1 // pred_fallthru
      _
    // Predicated region
    $region38: #{conv_lstm_forward.2} parent=1 // pred_check
      _
    $region39: #{conv_lstm_forward.2} parent=1 // pred_check_branch
      %49 = sbr.rel (0) target = $region41
    $region40: #{conv_lstm_forward.2} parent=1 // pred_region
      _
    $region41: #{conv_lstm_forward.2} parent=1 // pred_fallthru
      _
    // Predicated region
    $region42: #{conv_lstm_forward.2} parent=1 // pred_check
      _
    $region43: #{conv_lstm_forward.2} parent=1 // pred_check_branch
      %51 = sbr.rel (0) target = $region45
    $region44: #{conv_lstm_forward.2} parent=1 // pred_region
      _
    $region45: #{conv_lstm_forward.2} parent=1 // pred_fallthru
      _
    // Predicated region
    $region46: #{conv_lstm_forward.2} parent=1 // pred_check
      _
    $region47: #{conv_lstm_forward.2} parent=1 // pred_check_branch
      %53 = sbr.rel (0) target = $region49
    $region48: #{conv_lstm_forward.2} parent=1 // pred_region
      _
    $region49: #{conv_lstm_forward.2} parent=1 // pred_fallthru
      _
    // Predicated region
    $region50: #{conv_lstm_forward.2} parent=1 // pred_check
      _
    $region51: #{conv_lstm_forward.2} parent=1 // pred_check_branch
      %55 = sbr.rel (0) target = $region53
    $region52: #{conv_lstm_forward.2} parent=1 // pred_region
      _
    $region53: #{conv_lstm_forward.2} parent=1 // pred_fallthru
      _
    // Predicated region
    $region54: #{conv_lstm_forward.2} parent=1 // pred_check
      _
    $region55: #{conv_lstm_forward.2} parent=1 // pred_check_branch
      %57 = sbr.rel (0) target = $region57
    $region56: #{conv_lstm_forward.2} parent=1 // pred_region
      _
    $region57: #{conv_lstm_forward.2} parent=1 // pred_fallthru
      _
    // Predicated region
    $region58: #{conv_lstm_forward.2} parent=1 // pred_check
      _
    $region59: #{conv_lstm_forward.2} parent=1 // pred_check_branch
      %59 = sbr.rel (0) target = $region61
    $region60: #{conv_lstm_forward.2} parent=1 // pred_region
      %60 = dma.done [#allocation5], 1024
    $region61: #{conv_lstm_forward.2} parent=1 // pred_fallthru
      _
    %v62 = vld [vmem:[%s0] sm:$0xff]
    %v63 = vld [vmem:[%s0 + $0x8] sm:$0xff]
    %v64 = vld [vmem:[%s1] sm:$0x7]
    %v65 = vld [vmem:[%s2] sm:$0x1]
    %v67 = vlaneseq
    %v68 = vshrl.u32 %v67, 7
    %v69 = vsub.s32 0, %v68
    %v70 = vrot.slane %v65, %v69
    %vm72 = vcmask 23552
    %v74 = vsel %vm72, %v62, 0
    %v77 = vsel %vm72, %v63, 0
    %vm79 = vcmask 1042432
    %v81 = vsel %vm79, %v64, 0
    %83 = vmatprep.subr.mxu0 0.0
    %84 = vmatpush1.msra.mxu0 %v81
    %85 = vmatprep.subr.mxu0 0.0
    %86 = vmatpush1.msra.mxu0 0.0
    %87 = vmatprep.subr.mxu0 0.0
    %88 = vmatpush1.msra.mxu0 0.0
    %89 = vmatprep.subr.mxu0 0.0
    %90 = vmatpush1.msra.mxu0 0.0
    %91 = vmatprep.subr.mxu0 0.0
    %92 = vmatpush1.msra.mxu0 0.0
    %93 = vmatprep.subr.mxu0 0.0
    %94 = vmatpush1.msra.mxu0 0.0
    %95 = vmatprep.subr.mxu0 0.0
    %96 = vmatpush1.msra.mxu0 0.0
    %97 = vmatprep.subr.mxu0 0.0
    %98 = vmatpush1.msra.mxu0 0.0
    %99 = vmatprep.subr.mxu0 0.0
    %100 = vmatpush1.msra.mxu0 0.0
    %101 = vmatprep.subr.mxu0 0.0
    %102 = vmatpush1.msra.mxu0 0.0
    %103 = vmatprep.subr.mxu0 0.0
    %104 = vmatpush1.msra.mxu0 0.0
    %105 = vmatprep.subr.mxu0 0.0
    %106 = vmatpush1.msra.mxu0 0.0
    %107 = vmatprep.subr.mxu0 0.0
    %108 = vmatpush1.msra.mxu0 0.0
    %109 = vmatprep.subr.mxu0 0.0
    %110 = vmatpush1.msra.mxu0 0.0
    %111 = vmatprep.subr.mxu0 0.0
    %112 = vmatpush1.msra.mxu0 0.0
    %113 = vmatprep.subr.mxu0 0.0
    %114 = vmatpush1.msra.mxu0 0.0
    %115 = vmatprep.subr.mxu0 0.0
    %116 = vmatpush1.msra.mxu0 0.0
    %117 = vmatprep.subr.mxu0 0.0
    %118 = vmatpush1.msra.mxu0 0.0
    %119 = vmatprep.subr.mxu0 0.0
    %120 = vmatpush1.msra.mxu0 0.0
    %121 = vmatprep.subr.mxu0 0.0
    %122 = vmatpush1.msra.mxu0 0.0
    %123 = vmatprep.subr.mxu0 0.0
    %124 = vmatpush1.msra.mxu0 0.0
    %125 = vmatprep.subr.mxu0 0.0
    %126 = vmatpush1.msra.mxu0 0.0
    %127 = vmatprep.subr.mxu0 0.0
    %128 = vmatpush1.msra.mxu0 0.0
    %129 = vmatprep.subr.mxu0 0.0
    %130 = vmatpush1.msra.mxu0 0.0
    %131 = vmatprep.subr.mxu0 0.0
    %132 = vmatpush1.msra.mxu0 0.0
    %133 = vmatprep.subr.mxu0 0.0
    %134 = vmatpush1.msra.mxu0 0.0
    %135 = vmatprep.subr.mxu0 0.0
    %136 = vmatpush1.msra.mxu0 0.0
    %137 = vmatprep.subr.mxu0 0.0
    %138 = vmatpush1.msra.mxu0 0.0
    %139 = vmatprep.subr.mxu0 0.0
    %140 = vmatpush1.msra.mxu0 0.0
    %141 = vmatprep.subr.mxu0 0.0
    %142 = vmatpush1.msra.mxu0 0.0
    %143 = vmatprep.subr.mxu0 0.0
    %144 = vmatpush1.msra.mxu0 0.0
    %145 = vmatprep.subr.mxu0 0.0
    %146 = vmatpush1.msra.mxu0 0.0
    %147 = vmatprep.mubr.f32.mxu0 0.0
    %148 = vmatmul.mubr.f32.gmra.mrb[0].mxu0 %v74
    %v149 = vpop.f32.mrb[0].mxu0
    %v150 = vadd.f32 %v70, %v149
    %v151 = vpop.f32.mrb[0].mxu0
    %152 = vmatprep.mubr.f32.mxu0 0.0
    %153 = vmatmul.mubr.f32.gmra.mrb[0].mxu0 %v77
    %v154 = vpop.f32.mrb[0].mxu0
    %v155 = vadd.f32 %v70, %v154
    %v156 = vpop.f32.mrb[0].mxu0
    %157 = vdwg.mxu0
    %v158 = vld [vmem:[#allocation4] sm:$0xff]
    %v159 = vld [vmem:[#allocation4 + $0x8] sm:$0xff]
    %v160 = vld [vmem:[#allocation4 + $0x10] sm:$0xff]
    %v161 = vld [vmem:[#allocation4 + $0x18] sm:$0xff]
    %v162 = vld [vmem:[#allocation4 + $0x20] sm:$0xff]
    %v163 = vld [vmem:[#allocation4 + $0x28] sm:$0xff]
    %v164 = vld [vmem:[#allocation4 + $0x30] sm:$0xff]
    %v165 = vld [vmem:[#allocation4 + $0x38] sm:$0xff]
    %v166 = vld [vmem:[%s4] sm:$0x1]
    %v168 = vlaneseq
    %v169 = vshrl.u32 %v168, 7
    %v170 = vsub.s32 0, %v169
    %v171 = vrot.slane %v166, %v170
    %vm173 = vcmask 523264
    %v175 = vsel %vm173, %v150, 0
    %v178 = vsel %vm173, %v155, 0
    %180 = vmatprep.subr.mxu0 0.0
    %181 = vmatpush1.msra.mxu0 %v158
    %182 = vmatprep.subr.mxu0 0.0
    %183 = vmatpush1.msra.mxu0 %v159
    %184 = vmatprep.subr.mxu0 0.0
    %185 = vmatpush1.msra.mxu0 %v160
    %186 = vmatprep.subr.mxu0 0.0
    %187 = vmatpush1.msra.mxu0 %v161
    %188 = vmatprep.subr.mxu0 0.0
    %189 = vmatpush1.msra.mxu0 %v162
    %190 = vmatprep.subr.mxu0 0.0
    %191 = vmatpush1.msra.mxu0 %v163
    %192 = vmatprep.subr.mxu0 0.0
    %193 = vmatpush1.msra.mxu0 %v164
    %194 = vmatprep.subr.mxu0 0.0
    %195 = vmatpush1.msra.mxu0 %v165
    %196 = vmatprep.subr.mxu0 0.0
    %197 = vmatpush1.msra.mxu0 0.0
    %198 = vmatprep.subr.mxu0 0.0
    %199 = vmatpush1.msra.mxu0 0.0
    %200 = vmatprep.subr.mxu0 0.0
    %201 = vmatpush1.msra.mxu0 0.0
    %202 = vmatprep.subr.mxu0 0.0
    %203 = vmatpush1.msra.mxu0 0.0
    %204 = vmatprep.subr.mxu0 0.0
    %205 = vmatpush1.msra.mxu0 0.0
    %206 = vmatprep.subr.mxu0 0.0
    %207 = vmatpush1.msra.mxu0 0.0
    %208 = vmatprep.subr.mxu0 0.0
    %209 = vmatpush1.msra.mxu0 0.0
    %210 = vmatprep.subr.mxu0 0.0
    %211 = vmatpush1.msra.mxu0 0.0
    %212 = vmatprep.subr.mxu0 0.0
    %213 = vmatpush1.msra.mxu0 0.0
    %214 = vmatprep.subr.mxu0 0.0
    %215 = vmatpush1.msra.mxu0 0.0
    %216 = vmatprep.subr.mxu0 0.0
    %217 = vmatpush1.msra.mxu0 0.0
    %218 = vmatprep.subr.mxu0 0.0
    %219 = vmatpush1.msra.mxu0 0.0
    %220 = vmatprep.subr.mxu0 0.0
    %221 = vmatpush1.msra.mxu0 0.0
    %222 = vmatprep.subr.mxu0 0.0
    %223 = vmatpush1.msra.mxu0 0.0
    %224 = vmatprep.subr.mxu0 0.0
    %225 = vmatpush1.msra.mxu0 0.0
    %226 = vmatprep.subr.mxu0 0.0
    %227 = vmatpush1.msra.mxu0 0.0
    %228 = vmatprep.subr.mxu0 0.0
    %229 = vmatpush1.msra.mxu0 0.0
    %230 = vmatprep.subr.mxu0 0.0
    %231 = vmatpush1.msra.mxu0 0.0
    %232 = vmatprep.subr.mxu0 0.0
    %233 = vmatpush1.msra.mxu0 0.0
    %234 = vmatprep.subr.mxu0 0.0
    %235 = vmatpush1.msra.mxu0 0.0
    %236 = vmatprep.subr.mxu0 0.0
    %237 = vmatpush1.msra.mxu0 0.0
    %238 = vmatprep.subr.mxu0 0.0
    %239 = vmatpush1.msra.mxu0 0.0
    %240 = vmatprep.subr.mxu0 0.0
    %241 = vmatpush1.msra.mxu0 0.0
    %242 = vmatprep.subr.mxu0 0.0
    %243 = vmatpush1.msra.mxu0 0.0
    %244 = vmatprep.mubr.f32.mxu0 0.0
    %245 = vmatmul.mubr.f32.gmra.mrb[0].mxu0 %v175
    %v246 = vpop.f32.mrb[0].mxu0
    %v247 = vadd.f32 %v171, %v246
    %v248 = vpop.f32.mrb[0].mxu0
    %249 = vmatprep.mubr.f32.mxu0 0.0
    %250 = vmatmul.mubr.f32.gmra.mrb[0].mxu0 %v178
    %v251 = vpop.f32.mrb[0].mxu0
    %v252 = vadd.f32 %v171, %v251
    %v253 = vpop.f32.mrb[0].mxu0
    %254 = vdwg.mxu0
    %v255 = vlaneseq
    %v256 = vshrl.u32 %v255, 7
    %v257 = vadd.s32 %v256, 8
    %vm258 = vcmp.lt.s32.totalorder %v256, 4
    %vm259 = vcmp.lt.s32.totalorder %v257, 4
    %v260 = vsel %vm258, 1, 0
    %v261 = vsel %vm259, 1, 0
    %v262 = vcvt.s32.f32 %v260
    %v263 = vcvt.s32.f32 %v261
    %v264 = vmul.f32 %v247, %v262
    %v265 = vmul.f32 %v252, %v263
    %v266 = vadd.f32 %v264, %v265
    %v267 = vrot.slane %v266, 4
    %v268 = vadd.f32 %v266, %v267
    %v269 = vrot.slane %v268, 2
    %v270 = vadd.f32 %v268, %v269
    %v271 = vrot.slane %v270, 1
    %v272 = vadd.f32 %v270, %v271
    %v273 = vmul.f32 %v272, 0.25
    %v274 = vsub.f32 %v247, %v273
    %v275 = vsub.f32 %v252, %v273
    %v276 = vmul.f32 %v274, %v262
    %v277 = vmul.f32 %v275, %v263
    %v278 = vmul.f32 %v276, %v276
    %v279 = vmul.f32 %v277, %v277
    %v280 = vadd.f32 %v278, %v279
    %v281 = vrot.slane %v280, 4
    %v282 = vadd.f32 %v280, %v281
    %v283 = vrot.slane %v282, 2
    %v284 = vadd.f32 %v282, %v283
    %v285 = vrot.slane %v284, 1
    %v286 = vadd.f32 %v284, %v285
    %v287 = vmul.f32 %v286, 0.25
    %v288 = vadd.f32 %v287, 1e-05
    %v289 = vrsqrt.pop %v288
    %v290 = vmul.f32 %v274, %v289
    %v291 = vmul.f32 %v275, %v289
    %v292 = vld [vmem:[%s5] sm:$0x1]
    %v294 = vlaneseq
    %v295 = vshrl.u32 %v294, 7
    %v296 = vsub.s32 0, %v295
    %v297 = vrot.slane %v292, %v296
    %v299 = vmul.f32 %v290, %v297
    %v300 = vmul.f32 %v291, %v297
    %v301 = vld [vmem:[%s6] sm:$0x1]
    %v303 = vlaneseq
    %v304 = vshrl.u32 %v303, 7
    %v305 = vsub.s32 0, %v304
    %v306 = vrot.slane %v301, %v305
    %v308 = vadd.f32 %v299, %v306
    %v309 = vadd.f32 %v300, %v306
    %v310 = vpack.c.bf16 %v309, %v308
    %v311 = vld [vmem:[%s8] sm:$0xff]
    %v312 = vld [vmem:[%s8 + $0x8] sm:$0xff]
    %v313 = vld [vmem:[%s8 + $0x10] sm:$0xff]
    %v314 = vld [vmem:[%s8 + $0x18] sm:$0xff]
    %v315 = vld [vmem:[%s8 + $0x20] sm:$0xff]
    %v316 = vld [vmem:[%s8 + $0x28] sm:$0xff]
    %v317 = vld [vmem:[%s8 + $0x30] sm:$0xff]
    %v318 = vld [vmem:[%s8 + $0x38] sm:$0xff]
    %v319 = vld [vmem:[%s8 + $0x40] sm:$0xff]
    %v320 = vld [vmem:[%s8 + $0x48] sm:$0xff]
    %v321 = vld [vmem:[%s8 + $0x50] sm:$0xff]
    %v322 = vld [vmem:[%s8 + $0x58] sm:$0xff]
    %v323 = vld [vmem:[%s8 + $0x60] sm:$0xff]
    %v324 = vld [vmem:[%s8 + $0x68] sm:$0xff]
    %v325 = vld [vmem:[%s8 + $0x70] sm:$0xff]
    %v326 = vld [vmem:[%s8 + $0x78] sm:$0xff]
    %v327 = vld [vmem:[%s8 + $0x80] sm:$0xff]
    %v328 = vld [vmem:[%s8 + $0x88] sm:$0xff]
    %v329 = vld [vmem:[%s8 + $0x90] sm:$0xff]
    %v330 = vld [vmem:[%s8 + $0x98] sm:$0xff]
    %v331 = vld [vmem:[%s8 + $0xa0] sm:$0xff]
    %v332 = vld [vmem:[%s8 + $0xa8] sm:$0xff]
    %v333 = vld [vmem:[%s8 + $0xb0] sm:$0xff]
    %v334 = vld [vmem:[%s8 + $0xb8] sm:$0xff]
    %v335 = vld [vmem:[%s8 + $0xc0] sm:$0xff]
    %v336 = vld [vmem:[%s8 + $0xc8] sm:$0xff]
    %v337 = vld [vmem:[%s8 + $0xd0] sm:$0xff]
    %v338 = vld [vmem:[%s8 + $0xd8] sm:$0xff]
    %v339 = vld [vmem:[%s8 + $0xe0] sm:$0xff]
    %v340 = vld [vmem:[%s8 + $0xe8] sm:$0xff]
    %v341 = vld [vmem:[%s8 + $0xf0] sm:$0xff]
    %v342 = vld [vmem:[%s8 + $0xf8] sm:$0xff]
    %v343 = vld [vmem:[%s10] sm:$0xf]
    %v345 = vlaneseq
    %v346 = vshrl.u32 %v345, 7
    %v347 = vsub.s32 0, %v346
    %v348 = vrot.slane %v343, %v347
    %v349 = vlaneseq
    %v350 = vshrl.u32 %v349, 7
    %v351 = vsub.s32 1, %v350
    %v352 = vrot.slane %v343, %v351
    %v353 = vlaneseq
    %v354 = vshrl.u32 %v353, 7
    %v355 = vsub.s32 2, %v354
    %v356 = vrot.slane %v343, %v355
    %v357 = vlaneseq
    %v358 = vshrl.u32 %v357, 7
    %v359 = vsub.s32 3, %v358
    %v360 = vrot.slane %v343, %v359
    %v397 = vunpack.c.l.b16 %v311
    %v398 = vunpack.c.h.b16 %v311
    %v399 = vunpack.c.l.b16 %v312
    %v400 = vunpack.c.h.b16 %v312
    %v401 = vunpack.c.l.b16 %v313
    %v402 = vunpack.c.h.b16 %v313
    %v403 = vunpack.c.l.b16 %v314
    %v404 = vunpack.c.h.b16 %v314
    %v405 = vunpack.c.l.b16 %v315
    %v406 = vunpack.c.h.b16 %v315
    %v407 = vunpack.c.l.b16 %v316
    %v408 = vunpack.c.h.b16 %v316
    %v409 = vunpack.c.l.b16 %v317
    %v410 = vunpack.c.h.b16 %v317
    %v411 = vunpack.c.l.b16 %v318
    %v412 = vunpack.c.h.b16 %v318
    %v413 = vunpack.c.l.b16 %v319
    %v414 = vunpack.c.h.b16 %v319
    %v415 = vunpack.c.l.b16 %v320
    %v416 = vunpack.c.h.b16 %v320
    %v417 = vunpack.c.l.b16 %v321
    %v418 = vunpack.c.h.b16 %v321
    %v419 = vunpack.c.l.b16 %v322
    %v420 = vunpack.c.h.b16 %v322
    %v421 = vunpack.c.l.b16 %v323
    %v422 = vunpack.c.h.b16 %v323
    %v423 = vunpack.c.l.b16 %v324
    %v424 = vunpack.c.h.b16 %v324
    %v425 = vunpack.c.l.b16 %v325
    %v426 = vunpack.c.h.b16 %v325
    %v427 = vunpack.c.l.b16 %v326
    %v428 = vunpack.c.h.b16 %v326
    %v429 = vunpack.c.l.b16 %v327
    %v430 = vunpack.c.h.b16 %v327
    %v431 = vunpack.c.l.b16 %v328
    %v432 = vunpack.c.h.b16 %v328
    %v433 = vunpack.c.l.b16 %v329
    %v434 = vunpack.c.h.b16 %v329
    %v435 = vunpack.c.l.b16 %v330
    %v436 = vunpack.c.h.b16 %v330
    %v437 = vunpack.c.l.b16 %v331
    %v438 = vunpack.c.h.b16 %v331
    %v439 = vunpack.c.l.b16 %v332
    %v440 = vunpack.c.h.b16 %v332
    %v441 = vunpack.c.l.b16 %v333
    %v442 = vunpack.c.h.b16 %v333
    %v443 = vunpack.c.l.b16 %v334
    %v444 = vunpack.c.h.b16 %v334
    %v445 = vunpack.c.l.b16 %v335
    %v446 = vunpack.c.h.b16 %v335
    %v447 = vunpack.c.l.b16 %v336
    %v448 = vunpack.c.h.b16 %v336
    %v449 = vunpack.c.l.b16 %v337
    %v450 = vunpack.c.h.b16 %v337
    %v451 = vunpack.c.l.b16 %v338
    %v452 = vunpack.c.h.b16 %v338
    %v453 = vunpack.c.l.b16 %v339
    %v454 = vunpack.c.h.b16 %v339
    %v455 = vunpack.c.l.b16 %v340
    %v456 = vunpack.c.h.b16 %v340
    %v457 = vunpack.c.l.b16 %v341
    %v458 = vunpack.c.h.b16 %v341
    %v459 = vunpack.c.l.b16 %v342
    %v460 = vunpack.c.h.b16 %v342
    %v461 = vpack.c.b16 %v401, %v397
    %v462 = vpack.c.b16 %v402, %v398
    %v463 = vpack.c.b16 %v403, %v399
    %v464 = vpack.c.b16 %v404, %v400
    %v465 = vpack.c.b16 %v409, %v405
    %v466 = vpack.c.b16 %v410, %v406
    %v467 = vpack.c.b16 %v411, %v407
    %v468 = vpack.c.b16 %v412, %v408
    %v469 = vpack.c.b16 %v417, %v413
    %v470 = vpack.c.b16 %v418, %v414
    %v471 = vpack.c.b16 %v419, %v415
    %v472 = vpack.c.b16 %v420, %v416
    %v473 = vpack.c.b16 %v425, %v421
    %v474 = vpack.c.b16 %v426, %v422
    %v475 = vpack.c.b16 %v427, %v423
    %v476 = vpack.c.b16 %v428, %v424
    %v477 = vpack.c.b16 %v433, %v429
    %v478 = vpack.c.b16 %v434, %v430
    %v479 = vpack.c.b16 %v435, %v431
    %v480 = vpack.c.b16 %v436, %v432
    %v481 = vpack.c.b16 %v441, %v437
    %v482 = vpack.c.b16 %v442, %v438
    %v483 = vpack.c.b16 %v443, %v439
    %v484 = vpack.c.b16 %v444, %v440
    %v485 = vpack.c.b16 %v449, %v445
    %v486 = vpack.c.b16 %v450, %v446
    %v487 = vpack.c.b16 %v451, %v447
    %v488 = vpack.c.b16 %v452, %v448
    %v489 = vpack.c.b16 %v457, %v453
    %v490 = vpack.c.b16 %v458, %v454
    %v491 = vpack.c.b16 %v459, %v455
    %v492 = vpack.c.b16 %v460, %v456
    %525 = vmatprep.subr.bf16.mxu0 %v462
    %526 = vmatpush1.bf16.msra.mxu0 %v461
    %527 = vmatprep.subr.bf16.mxu0 %v466
    %528 = vmatpush1.bf16.msra.mxu0 %v465
    %529 = vmatprep.subr.bf16.mxu0 %v470
    %530 = vmatpush1.bf16.msra.mxu0 %v469
    %531 = vmatprep.subr.bf16.mxu0 %v474
    %532 = vmatpush1.bf16.msra.mxu0 %v473
    %533 = vmatprep.subr.bf16.mxu0 %v478
    %534 = vmatpush1.bf16.msra.mxu0 %v477
    %535 = vmatprep.subr.bf16.mxu0 %v482
    %536 = vmatpush1.bf16.msra.mxu0 %v481
    %537 = vmatprep.subr.bf16.mxu0 %v486
    %538 = vmatpush1.bf16.msra.mxu0 %v485
    %539 = vmatprep.subr.bf16.mxu0 %v490
    %540 = vmatpush1.bf16.msra.mxu0 %v489
    %541 = vmatprep.subr.bf16.mxu0 0
    %542 = vmatpush1.bf16.msra.mxu0 0
    %543 = vmatprep.subr.bf16.mxu0 0
    %544 = vmatpush1.bf16.msra.mxu0 0
    %545 = vmatprep.subr.bf16.mxu0 0
    %546 = vmatpush1.bf16.msra.mxu0 0
    %547 = vmatprep.subr.bf16.mxu0 0
    %548 = vmatpush1.bf16.msra.mxu0 0
    %549 = vmatprep.subr.bf16.mxu0 0
    %550 = vmatpush1.bf16.msra.mxu0 0
    %551 = vmatprep.subr.bf16.mxu0 0
    %552 = vmatpush1.bf16.msra.mxu0 0
    %553 = vmatprep.subr.bf16.mxu0 0
    %554 = vmatpush1.bf16.msra.mxu0 0
    %555 = vmatprep.subr.bf16.mxu0 0
    %556 = vmatpush1.bf16.msra.mxu0 0
    %557 = vmatprep.mubr.bf16.mxu0 0
    %558 = vmatmul.mubr.bf16.gmra.mrb[0].mxu0 %v310
    %v559 = vpop.f32.mrb[0].mxu0
    %v560 = vadd.f32 %v348, %v559
    %v561 = vpop.f32.mrb[0].mxu0
    %v562 = vadd.f32 %v352, %v561
    %v563 = vpop.f32.mrb[0].mxu0
    %v564 = vadd.f32 %v348, %v563
    %v565 = vpop.f32.mrb[0].mxu0
    %v566 = vadd.f32 %v352, %v565
    %567 = vdwg.mxu0
    %568 = vmatprep.subr.bf16.mxu0 %v464
    %569 = vmatpush1.bf16.msra.mxu0 %v463
    %570 = vmatprep.subr.bf16.mxu0 %v468
    %571 = vmatpush1.bf16.msra.mxu0 %v467
    %572 = vmatprep.subr.bf16.mxu0 %v472
    %573 = vmatpush1.bf16.msra.mxu0 %v471
    %574 = vmatprep.subr.bf16.mxu0 %v476
    %575 = vmatpush1.bf16.msra.mxu0 %v475
    %576 = vmatprep.subr.bf16.mxu0 %v480
    %577 = vmatpush1.bf16.msra.mxu0 %v479
    %578 = vmatprep.subr.bf16.mxu0 %v484
    %579 = vmatpush1.bf16.msra.mxu0 %v483
    %580 = vmatprep.subr.bf16.mxu0 %v488
    %581 = vmatpush1.bf16.msra.mxu0 %v487
    %582 = vmatprep.subr.bf16.mxu0 %v492
    %583 = vmatpush1.bf16.msra.mxu0 %v491
    %584 = vmatprep.subr.bf16.mxu0 0
    %585 = vmatpush1.bf16.msra.mxu0 0
    %586 = vmatprep.subr.bf16.mxu0 0
    %587 = vmatpush1.bf16.msra.mxu0 0
    %588 = vmatprep.subr.bf16.mxu0 0
    %589 = vmatpush1.bf16.msra.mxu0 0
    %590 = vmatprep.subr.bf16.mxu0 0
    %591 = vmatpush1.bf16.msra.mxu0 0
    %592 = vmatprep.subr.bf16.mxu0 0
    %593 = vmatpush1.bf16.msra.mxu0 0
    %594 = vmatprep.subr.bf16.mxu0 0
    %595 = vmatpush1.bf16.msra.mxu0 0
    %596 = vmatprep.subr.bf16.mxu0 0
    %597 = vmatpush1.bf16.msra.mxu0 0
    %598 = vmatprep.subr.bf16.mxu0 0
    %599 = vmatpush1.bf16.msra.mxu0 0
    %600 = vmatprep.mubr.bf16.mxu0 0
    %601 = vmatmul.mubr.bf16.gmra.mrb[0].mxu0 %v310
    %v602 = vpop.f32.mrb[0].mxu0
    %v603 = vadd.f32 %v356, %v602
    %v604 = vpop.f32.mrb[0].mxu0
    %v605 = vadd.f32 %v360, %v604
    %v606 = vpop.f32.mrb[0].mxu0
    %v607 = vadd.f32 %v356, %v606
    %v608 = vpop.f32.mrb[0].mxu0
    %v609 = vadd.f32 %v360, %v608
    %610 = vdwg.mxu0
    %611 = vst [vmem:[#allocation2] sm:$0xff] %v560
    %612 = vst [vmem:[#allocation2 + $0x8] sm:$0xff] %v562
    %613 = vst [vmem:[#allocation2 + $0x10] sm:$0xff] %v603
    %614 = vst [vmem:[#allocation2 + $0x18] sm:$0xff] %v605
    %615 = vst [vmem:[#allocation2 + $0x20] sm:$0xff] %v564
    %616 = vst [vmem:[#allocation2 + $0x28] sm:$0xff] %v566
    %617 = vst [vmem:[#allocation2 + $0x30] sm:$0xff] %v607
    %618 = vst [vmem:[#allocation2 + $0x38] sm:$0xff] %v609
    %v619 = vld [vmem:[%s7] sm:$0xf]
    %v620 = vld [vmem:[%s7 + $0x4] sm:$0xf]
    %v621 = vld [vmem:[%s7 + $0x8] sm:$0xf]
    %v622 = vld [vmem:[%s7 + $0xc] sm:$0xf]
    %v623 = vld [vmem:[%s7 + $0x10] sm:$0xf]
    %v624 = vld [vmem:[%s7 + $0x14] sm:$0xf]
    %v625 = vld [vmem:[%s7 + $0x18] sm:$0xf]
    %v626 = vld [vmem:[%s7 + $0x1c] sm:$0xf]
    %v627 = vld [vmem:[%s7 + $0x20] sm:$0xf]
    %v628 = vld [vmem:[%s7 + $0x24] sm:$0xf]
    %v629 = vld [vmem:[%s7 + $0x28] sm:$0xf]
    %v630 = vld [vmem:[%s7 + $0x2c] sm:$0xf]
    %v631 = vld [vmem:[%s7 + $0x30] sm:$0xf]
    %v632 = vld [vmem:[%s7 + $0x34] sm:$0xf]
    %v633 = vld [vmem:[%s7 + $0x38] sm:$0xf]
    %v634 = vld [vmem:[%s7 + $0x3c] sm:$0xf]
    %v651 = vunpack.c.l.b16 %v619
    %v652 = vunpack.c.l.b16 %v620
    %v653 = vunpack.c.l.b16 %v621
    %v654 = vunpack.c.l.b16 %v622
    %v655 = vunpack.c.l.b16 %v623
    %v656 = vunpack.c.l.b16 %v624
    %v657 = vunpack.c.l.b16 %v625
    %v658 = vunpack.c.l.b16 %v626
    %v659 = vunpack.c.l.b16 %v627
    %v660 = vunpack.c.l.b16 %v628
    %v661 = vunpack.c.l.b16 %v629
    %v662 = vunpack.c.l.b16 %v630
    %v663 = vunpack.c.l.b16 %v631
    %v664 = vunpack.c.l.b16 %v632
    %v665 = vunpack.c.l.b16 %v633
    %v666 = vunpack.c.l.b16 %v634
    %v667 = vpack.c.b16 %v652, %v651
    %v668 = vpack.c.b16 %v654, %v653
    %v669 = vpack.c.b16 %v656, %v655
    %v670 = vpack.c.b16 %v658, %v657
    %v671 = vpack.c.b16 %v660, %v659
    %v672 = vpack.c.b16 %v662, %v661
    %v673 = vpack.c.b16 %v664, %v663
    %v674 = vpack.c.b16 %v666, %v665
    %683 = vmatprep.subr.bf16.mxu0 %v462
    %684 = vmatpush1.bf16.msra.mxu0 %v461
    %685 = vmatprep.subr.bf16.mxu0 %v466
    %686 = vmatpush1.bf16.msra.mxu0 %v465
    %687 = vmatprep.subr.bf16.mxu0 %v470
    %688 = vmatpush1.bf16.msra.mxu0 %v469
    %689 = vmatprep.subr.bf16.mxu0 %v474
    %690 = vmatpush1.bf16.msra.mxu0 %v473
    %691 = vmatprep.subr.bf16.mxu0 %v478
    %692 = vmatpush1.bf16.msra.mxu0 %v477
    %693 = vmatprep.subr.bf16.mxu0 %v482
    %694 = vmatpush1.bf16.msra.mxu0 %v481
    %695 = vmatprep.subr.bf16.mxu0 %v486
    %696 = vmatpush1.bf16.msra.mxu0 %v485
    %697 = vmatprep.subr.bf16.mxu0 %v490
    %698 = vmatpush1.bf16.msra.mxu0 %v489
    %699 = vmatprep.subr.bf16.mxu0 0
    %700 = vmatpush1.bf16.msra.mxu0 0
    %701 = vmatprep.subr.bf16.mxu0 0
    %702 = vmatpush1.bf16.msra.mxu0 0
    %703 = vmatprep.subr.bf16.mxu0 0
    %704 = vmatpush1.bf16.msra.mxu0 0
    %705 = vmatprep.subr.bf16.mxu0 0
    %706 = vmatpush1.bf16.msra.mxu0 0
    %707 = vmatprep.subr.bf16.mxu0 0
    %708 = vmatpush1.bf16.msra.mxu0 0
    %709 = vmatprep.subr.bf16.mxu0 0
    %710 = vmatpush1.bf16.msra.mxu0 0
    %711 = vmatprep.subr.bf16.mxu0 0
    %712 = vmatpush1.bf16.msra.mxu0 0
    %713 = vmatprep.subr.bf16.mxu0 0
    %714 = vmatpush1.bf16.msra.mxu0 0
    %715 = vmatprep.mubr.bf16.mxu0 0
    %716 = vmatmul.mubr.bf16.gmra.mrb[0].mxu0 %v667
    %v717 = vpop.f32.mrb[0].mxu0
    %v718 = vadd.f32 %v348, %v717
    %v719 = vpop.f32.mrb[0].mxu0
    %v720 = vadd.f32 %v352, %v719
    %v721 = vpop.f32.mrb[0].mxu0
    %v722 = vadd.f32 %v348, %v721
    %v723 = vpop.f32.mrb[0].mxu0
    %v724 = vadd.f32 %v352, %v723
    %725 = vmatprep.mubr.bf16.mxu0 0
    %726 = vmatmul.mubr.bf16.gmra.mrb[0].mxu0 %v668
    %v727 = vpop.f32.mrb[0].mxu0
    %v728 = vadd.f32 %v348, %v727
    %v729 = vpop.f32.mrb[0].mxu0
    %v730 = vadd.f32 %v352, %v729
    %v731 = vpop.f32.mrb[0].mxu0
    %v732 = vadd.f32 %v348, %v731
    %v733 = vpop.f32.mrb[0].mxu0
    %v734 = vadd.f32 %v352, %v733
    %735 = vmatprep.mubr.bf16.mxu0 0
    %736 = vmatmul.mubr.bf16.gmra.mrb[0].mxu0 %v669
    %v737 = vpop.f32.mrb[0].mxu0
    %v738 = vadd.f32 %v348, %v737
    %v739 = vpop.f32.mrb[0].mxu0
    %v740 = vadd.f32 %v352, %v739
    %v741 = vpop.f32.mrb[0].mxu0
    %v742 = vadd.f32 %v348, %v741
    %v743 = vpop.f32.mrb[0].mxu0
    %v744 = vadd.f32 %v352, %v743
    %745 = vmatprep.mubr.bf16.mxu0 0
    %746 = vmatmul.mubr.bf16.gmra.mrb[0].mxu0 %v670
    %v747 = vpop.f32.mrb[0].mxu0
    %v748 = vadd.f32 %v348, %v747
    %v749 = vpop.f32.mrb[0].mxu0
    %v750 = vadd.f32 %v352, %v749
    %v751 = vpop.f32.mrb[0].mxu0
    %v752 = vadd.f32 %v348, %v751
    %v753 = vpop.f32.mrb[0].mxu0
    %v754 = vadd.f32 %v352, %v753
    %755 = vmatprep.mubr.bf16.mxu0 0
    %756 = vmatmul.mubr.bf16.gmra.mrb[0].mxu0 %v671
    %v757 = vpop.f32.mrb[0].mxu0
    %v758 = vadd.f32 %v348, %v757
    %v759 = vpop.f32.mrb[0].mxu0
    %v760 = vadd.f32 %v352, %v759
    %v761 = vpop.f32.mrb[0].mxu0
    %v762 = vadd.f32 %v348, %v761
    %v763 = vpop.f32.mrb[0].mxu0
    %v764 = vadd.f32 %v352, %v763
    %765 = vmatprep.mubr.bf16.mxu0 0
    %766 = vmatmul.mubr.bf16.gmra.mrb[0].mxu0 %v672
    %v767 = vpop.f32.mrb[0].mxu0
    %v768 = vadd.f32 %v348, %v767
    %v769 = vpop.f32.mrb[0].mxu0
    %v770 = vadd.f32 %v352, %v769
    %v771 = vpop.f32.mrb[0].mxu0
    %v772 = vadd.f32 %v348, %v771
    %v773 = vpop.f32.mrb[0].mxu0
    %v774 = vadd.f32 %v352, %v773
    %775 = vmatprep.mubr.bf16.mxu0 0
    %776 = vmatmul.mubr.bf16.gmra.mrb[0].mxu0 %v673
    %v777 = vpop.f32.mrb[0].mxu0
    %v778 = vadd.f32 %v348, %v777
    %v779 = vpop.f32.mrb[0].mxu0
    %v780 = vadd.f32 %v352, %v779
    %v781 = vpop.f32.mrb[0].mxu0
    %v782 = vadd.f32 %v348, %v781
    %v783 = vpop.f32.mrb[0].mxu0
    %v784 = vadd.f32 %v352, %v783
    %785 = vmatprep.mubr.bf16.mxu0 0
    %786 = vmatmul.mubr.bf16.gmra.mrb[0].mxu0 %v674
    %v787 = vpop.f32.mrb[0].mxu0
    %v788 = vadd.f32 %v348, %v787
    %v789 = vpop.f32.mrb[0].mxu0
    %v790 = vadd.f32 %v352, %v789
    %v791 = vpop.f32.mrb[0].mxu0
    %v792 = vadd.f32 %v348, %v791
    %v793 = vpop.f32.mrb[0].mxu0
    %v794 = vadd.f32 %v352, %v793
    %795 = vdwg.mxu0
    %796 = vmatprep.subr.bf16.mxu0 %v464
    %797 = vmatpush1.bf16.msra.mxu0 %v463
    %798 = vmatprep.subr.bf16.mxu0 %v468
    %799 = vmatpush1.bf16.msra.mxu0 %v467
    %800 = vmatprep.subr.bf16.mxu0 %v472
    %801 = vmatpush1.bf16.msra.mxu0 %v471
    %802 = vmatprep.subr.bf16.mxu0 %v476
    %803 = vmatpush1.bf16.msra.mxu0 %v475
    %804 = vmatprep.subr.bf16.mxu0 %v480
    %805 = vmatpush1.bf16.msra.mxu0 %v479
    %806 = vmatprep.subr.bf16.mxu0 %v484
    %807 = vmatpush1.bf16.msra.mxu0 %v483
    %808 = vmatprep.subr.bf16.mxu0 %v488
    %809 = vmatpush1.bf16.msra.mxu0 %v487
    %810 = vmatprep.subr.bf16.mxu0 %v492
    %811 = vmatpush1.bf16.msra.mxu0 %v491
    %812 = vmatprep.subr.bf16.mxu0 0
    %813 = vmatpush1.bf16.msra.mxu0 0
    %814 = vmatprep.subr.bf16.mxu0 0
    %815 = vmatpush1.bf16.msra.mxu0 0
    %816 = vmatprep.subr.bf16.mxu0 0
    %817 = vmatpush1.bf16.msra.mxu0 0
    %818 = vmatprep.subr.bf16.mxu0 0
    %819 = vmatpush1.bf16.msra.mxu0 0
    %820 = vmatprep.subr.bf16.mxu0 0
    %821 = vmatpush1.bf16.msra.mxu0 0
    %822 = vmatprep.subr.bf16.mxu0 0
    %823 = vmatpush1.bf16.msra.mxu0 0
    %824 = vmatprep.subr.bf16.mxu0 0
    %825 = vmatpush1.bf16.msra.mxu0 0
    %826 = vmatprep.subr.bf16.mxu0 0
    %827 = vmatpush1.bf16.msra.mxu0 0
    %828 = vmatprep.mubr.bf16.mxu0 0
    %829 = vmatmul.mubr.bf16.gmra.mrb[0].mxu0 %v667
    %v830 = vpop.f32.mrb[0].mxu0
    %v831 = vadd.f32 %v356, %v830
    %v832 = vpop.f32.mrb[0].mxu0
    %v833 = vadd.f32 %v360, %v832
    %v834 = vpop.f32.mrb[0].mxu0
    %v835 = vadd.f32 %v356, %v834
    %v836 = vpop.f32.mrb[0].mxu0
    %v837 = vadd.f32 %v360, %v836
    %838 = vmatprep.mubr.bf16.mxu0 0
    %839 = vmatmul.mubr.bf16.gmra.mrb[0].mxu0 %v668
    %v840 = vpop.f32.mrb[0].mxu0
    %v841 = vadd.f32 %v356, %v840
    %v842 = vpop.f32.mrb[0].mxu0
    %v843 = vadd.f32 %v360, %v842
    %v844 = vpop.f32.mrb[0].mxu0
    %v845 = vadd.f32 %v356, %v844
    %v846 = vpop.f32.mrb[0].mxu0
    %v847 = vadd.f32 %v360, %v846
    %848 = vmatprep.mubr.bf16.mxu0 0
    %849 = vmatmul.mubr.bf16.gmra.mrb[0].mxu0 %v669
    %v850 = vpop.f32.mrb[0].mxu0
    %v851 = vadd.f32 %v356, %v850
    %v852 = vpop.f32.mrb[0].mxu0
    %v853 = vadd.f32 %v360, %v852
    %v854 = vpop.f32.mrb[0].mxu0
    %v855 = vadd.f32 %v356, %v854
    %v856 = vpop.f32.mrb[0].mxu0
    %v857 = vadd.f32 %v360, %v856
    %858 = vmatprep.mubr.bf16.mxu0 0
    %859 = vmatmul.mubr.bf16.gmra.mrb[0].mxu0 %v670
    %v860 = vpop.f32.mrb[0].mxu0
    %v861 = vadd.f32 %v356, %v860
    %v862 = vpop.f32.mrb[0].mxu0
    %v863 = vadd.f32 %v360, %v862
    %v864 = vpop.f32.mrb[0].mxu0
    %v865 = vadd.f32 %v356, %v864
    %v866 = vpop.f32.mrb[0].mxu0
    %v867 = vadd.f32 %v360, %v866
    %868 = vmatprep.mubr.bf16.mxu0 0
    %869 = vmatmul.mubr.bf16.gmra.mrb[0].mxu0 %v671
    %v870 = vpop.f32.mrb[0].mxu0
    %v871 = vadd.f32 %v356, %v870
    %v872 = vpop.f32.mrb[0].mxu0
    %v873 = vadd.f32 %v360, %v872
    %v874 = vpop.f32.mrb[0].mxu0
    %v875 = vadd.f32 %v356, %v874
    %v876 = vpop.f32.mrb[0].mxu0
    %v877 = vadd.f32 %v360, %v876
    %878 = vmatprep.mubr.bf16.mxu0 0
    %879 = vmatmul.mubr.bf16.gmra.mrb[0].mxu0 %v672
    %v880 = vpop.f32.mrb[0].mxu0
    %v881 = vadd.f32 %v356, %v880
    %v882 = vpop.f32.mrb[0].mxu0
    %v883 = vadd.f32 %v360, %v882
    %v884 = vpop.f32.mrb[0].mxu0
    %v885 = vadd.f32 %v356, %v884
    %v886 = vpop.f32.mrb[0].mxu0
    %v887 = vadd.f32 %v360, %v886
    %888 = vmatprep.mubr.bf16.mxu0 0
    %889 = vmatmul.mubr.bf16.gmra.mrb[0].mxu0 %v673
    %v890 = vpop.f32.mrb[0].mxu0
    %v891 = vadd.f32 %v356, %v890
    %v892 = vpop.f32.mrb[0].mxu0
    %v893 = vadd.f32 %v360, %v892
    %v894 = vpop.f32.mrb[0].mxu0
    %v895 = vadd.f32 %v356, %v894
    %v896 = vpop.f32.mrb[0].mxu0
    %v897 = vadd.f32 %v360, %v896
    %898 = vmatprep.mubr.bf16.mxu0 0
    %899 = vmatmul.mubr.bf16.gmra.mrb[0].mxu0 %v674
    %v900 = vpop.f32.mrb[0].mxu0
    %v901 = vadd.f32 %v356, %v900
    %v902 = vpop.f32.mrb[0].mxu0
    %v903 = vadd.f32 %v360, %v902
    %v904 = vpop.f32.mrb[0].mxu0
    %v905 = vadd.f32 %v356, %v904
    %v906 = vpop.f32.mrb[0].mxu0
    %v907 = vadd.f32 %v360, %v906
    %908 = vdwg.mxu0
    %909 = vst [vmem:[#allocation2 + $0x40] sm:$0xff] %v718
    %910 = vst [vmem:[#allocation2 + $0x48] sm:$0xff] %v720
    %911 = vst [vmem:[#allocation2 + $0x50] sm:$0xff] %v831
    %912 = vst [vmem:[#allocation2 + $0x58] sm:$0xff] %v833
    %913 = vst [vmem:[#allocation2 + $0x60] sm:$0xff] %v722
    %914 = vst [vmem:[#allocation2 + $0x68] sm:$0xff] %v724
    %915 = vst [vmem:[#allocation2 + $0x70] sm:$0xff] %v835
    %916 = vst [vmem:[#allocation2 + $0x78] sm:$0xff] %v837
    %917 = vst [vmem:[#allocation2 + $0x80] sm:$0xff] %v728
    %918 = vst [vmem:[#allocation2 + $0x88] sm:$0xff] %v730
    %919 = vst [vmem:[#allocation2 + $0x90] sm:$0xff] %v841
    %920 = vst [vmem:[#allocation2 + $0x98] sm:$0xff] %v843
    %921 = vst [vmem:[#allocation2 + $0xa0] sm:$0xff] %v732
    %922 = vst [vmem:[#allocation2 + $0xa8] sm:$0xff] %v734
    %923 = vst [vmem:[#allocation2 + $0xb0] sm:$0xff] %v845
    %924 = vst [vmem:[#allocation2 + $0xb8] sm:$0xff] %v847
    %925 = vst [vmem:[#allocation2 + $0xc0] sm:$0xff] %v738
    %926 = vst [vmem:[#allocation2 + $0xc8] sm:$0xff] %v740
    %927 = vst [vmem:[#allocation2 + $0xd0] sm:$0xff] %v851
    %928 = vst [vmem:[#allocation2 + $0xd8] sm:$0xff] %v853
    %929 = vst [vmem:[#allocation2 + $0xe0] sm:$0xff] %v742
    %930 = vst [vmem:[#allocation2 + $0xe8] sm:$0xff] %v744
    %931 = vst [vmem:[#allocation2 + $0xf0] sm:$0xff] %v855
    %932 = vst [vmem:[#allocation2 + $0xf8] sm:$0xff] %v857
    %933 = vst [vmem:[#allocation2 + $0x100] sm:$0xff] %v748
    %934 = vst [vmem:[#allocation2 + $0x108] sm:$0xff] %v750
    %935 = vst [vmem:[#allocation2 + $0x110] sm:$0xff] %v861
    %936 = vst [vmem:[#allocation2 + $0x118] sm:$0xff] %v863
    %937 = vst [vmem:[#allocation2 + $0x120] sm:$0xff] %v752
    %938 = vst [vmem:[#allocation2 + $0x128] sm:$0xff] %v754
    %939 = vst [vmem:[#allocation2 + $0x130] sm:$0xff] %v865
    %940 = vst [vmem:[#allocation2 + $0x138] sm:$0xff] %v867
    %941 = vst [vmem:[#allocation2 + $0x140] sm:$0xff] %v758
    %942 = vst [vmem:[#allocation2 + $0x148] sm:$0xff] %v760
    %943 = vst [vmem:[#allocation2 + $0x150] sm:$0xff] %v871
    %944 = vst [vmem:[#allocation2 + $0x158] sm:$0xff] %v873
    %945 = vst [vmem:[#allocation2 + $0x160] sm:$0xff] %v762
    %946 = vst [vmem:[#allocation2 + $0x168] sm:$0xff] %v764
    %947 = vst [vmem:[#allocation2 + $0x170] sm:$0xff] %v875
    %948 = vst [vmem:[#allocation2 + $0x178] sm:$0xff] %v877
    %949 = vst [vmem:[#allocation2 + $0x180] sm:$0xff] %v768
    %950 = vst [vmem:[#allocation2 + $0x188] sm:$0xff] %v770
    %951 = vst [vmem:[#allocation2 + $0x190] sm:$0xff] %v881
    %952 = vst [vmem:[#allocation2 + $0x198] sm:$0xff] %v883
    %953 = vst [vmem:[#allocation2 + $0x1a0] sm:$0xff] %v772
    %954 = vst [vmem:[#allocation2 + $0x1a8] sm:$0xff] %v774
    %955 = vst [vmem:[#allocation2 + $0x1b0] sm:$0xff] %v885
    %956 = vst [vmem:[#allocation2 + $0x1b8] sm:$0xff] %v887
    %957 = vst [vmem:[#allocation2 + $0x1c0] sm:$0xff] %v778
    %958 = vst [vmem:[#allocation2 + $0x1c8] sm:$0xff] %v780
    %959 = vst [vmem:[#allocation2 + $0x1d0] sm:$0xff] %v891
    %960 = vst [vmem:[#allocation2 + $0x1d8] sm:$0xff] %v893
    %961 = vst [vmem:[#allocation2 + $0x1e0] sm:$0xff] %v782
    %962 = vst [vmem:[#allocation2 + $0x1e8] sm:$0xff] %v784
    %963 = vst [vmem:[#allocation2 + $0x1f0] sm:$0xff] %v895
    %964 = vst [vmem:[#allocation2 + $0x1f8] sm:$0xff] %v897
    %965 = vst [vmem:[#allocation2 + $0x200] sm:$0xff] %v788
    %966 = vst [vmem:[#allocation2 + $0x208] sm:$0xff] %v790
    %967 = vst [vmem:[#allocation2 + $0x210] sm:$0xff] %v901
    %968 = vst [vmem:[#allocation2 + $0x218] sm:$0xff] %v903
    %969 = vst [vmem:[#allocation2 + $0x220] sm:$0xff] %v792
    %970 = vst [vmem:[#allocation2 + $0x228] sm:$0xff] %v794
    %971 = vst [vmem:[#allocation2 + $0x230] sm:$0xff] %v905
    %972 = vst [vmem:[#allocation2 + $0x238] sm:$0xff] %v907
    %v973 = vld [vmem:[%s9] sm:$0xff]
    %v974 = vld [vmem:[%s9 + $0x8] sm:$0xff]
    %v975 = vld [vmem:[%s9 + $0x10] sm:$0xff]
    %v976 = vld [vmem:[%s9 + $0x18] sm:$0xff]
    %v977 = vld [vmem:[%s9 + $0x20] sm:$0xff]
    %v978 = vld [vmem:[%s9 + $0x28] sm:$0xff]
    %v979 = vld [vmem:[%s9 + $0x30] sm:$0xff]
    %v980 = vld [vmem:[%s9 + $0x38] sm:$0xff]
    %v981 = vld [vmem:[%s9 + $0x40] sm:$0xff]
    %v982 = vld [vmem:[%s9 + $0x48] sm:$0xff]
    %v983 = vld [vmem:[%s9 + $0x50] sm:$0xff]
    %v984 = vld [vmem:[%s9 + $0x58] sm:$0xff]
    %v985 = vld [vmem:[%s9 + $0x60] sm:$0xff]
    %v986 = vld [vmem:[%s9 + $0x68] sm:$0xff]
    %v987 = vld [vmem:[%s9 + $0x70] sm:$0xff]
    %v988 = vld [vmem:[%s9 + $0x78] sm:$0xff]
    %v989 = vld [vmem:[%s9 + $0x80] sm:$0xff]
    %v990 = vld [vmem:[%s9 + $0x88] sm:$0xff]
    %v991 = vld [vmem:[%s9 + $0x90] sm:$0xff]
    %v992 = vld [vmem:[%s9 + $0x98] sm:$0xff]
    %v993 = vld [vmem:[%s9 + $0xa0] sm:$0xff]
    %v994 = vld [vmem:[%s9 + $0xa8] sm:$0xff]
    %v995 = vld [vmem:[%s9 + $0xb0] sm:$0xff]
    %v996 = vld [vmem:[%s9 + $0xb8] sm:$0xff]
    %v997 = vld [vmem:[%s9 + $0xc0] sm:$0xff]
    %v998 = vld [vmem:[%s9 + $0xc8] sm:$0xff]
    %v999 = vld [vmem:[%s9 + $0xd0] sm:$0xff]
    %v1000 = vld [vmem:[%s9 + $0xd8] sm:$0xff]
    %v1001 = vld [vmem:[%s9 + $0xe0] sm:$0xff]
    %v1002 = vld [vmem:[%s9 + $0xe8] sm:$0xff]
    %v1003 = vld [vmem:[%s9 + $0xf0] sm:$0xff]
    %v1004 = vld [vmem:[%s9 + $0xf8] sm:$0xff]
    %s1005 = smul.u32 0, 4
    %s1006 = smul.addr %s1005, 8
    %s1007 = scalar_lea.vmem [#allocation2], %s1006
    %v1008 = vld [vmem:[%s1007] sm:$0xff]
    %v1009 = vld [vmem:[%s1007 + $0x8] sm:$0xff]
    %v1010 = vld [vmem:[%s1007 + $0x10] sm:$0xff]
    %v1011 = vld [vmem:[%s1007 + $0x18] sm:$0xff]
    %v1012 = vld [vmem:[%s1007 + $0x20] sm:$0xff]
    %v1013 = vld [vmem:[%s1007 + $0x28] sm:$0xff]
    %v1014 = vld [vmem:[%s1007 + $0x30] sm:$0xff]
    %v1015 = vld [vmem:[%s1007 + $0x38] sm:$0xff]
    %v1048 = vunpack.c.l.b16 %v973
    %v1049 = vunpack.c.h.b16 %v973
    %v1050 = vunpack.c.l.b16 %v974
    %v1051 = vunpack.c.h.b16 %v974
    %v1052 = vunpack.c.l.b16 %v975
    %v1053 = vunpack.c.h.b16 %v975
    %v1054 = vunpack.c.l.b16 %v976
    %v1055 = vunpack.c.h.b16 %v976
    %v1056 = vunpack.c.l.b16 %v977
    %v1057 = vunpack.c.h.b16 %v977
    %v1058 = vunpack.c.l.b16 %v978
    %v1059 = vunpack.c.h.b16 %v978
    %v1060 = vunpack.c.l.b16 %v979
    %v1061 = vunpack.c.h.b16 %v979
    %v1062 = vunpack.c.l.b16 %v980
    %v1063 = vunpack.c.h.b16 %v980
    %v1064 = vunpack.c.l.b16 %v981
    %v1065 = vunpack.c.h.b16 %v981
    %v1066 = vunpack.c.l.b16 %v982
    %v1067 = vunpack.c.h.b16 %v982
    %v1068 = vunpack.c.l.b16 %v983
    %v1069 = vunpack.c.h.b16 %v983
    %v1070 = vunpack.c.l.b16 %v984
    %v1071 = vunpack.c.h.b16 %v984
    %v1072 = vunpack.c.l.b16 %v985
    %v1073 = vunpack.c.h.b16 %v985
    %v1074 = vunpack.c.l.b16 %v986
    %v1075 = vunpack.c.h.b16 %v986
    %v1076 = vunpack.c.l.b16 %v987
    %v1077 = vunpack.c.h.b16 %v987
    %v1078 = vunpack.c.l.b16 %v988
    %v1079 = vunpack.c.h.b16 %v988
    %v1080 = vunpack.c.l.b16 %v989
    %v1081 = vunpack.c.h.b16 %v989
    %v1082 = vunpack.c.l.b16 %v990
    %v1083 = vunpack.c.h.b16 %v990
    %v1084 = vunpack.c.l.b16 %v991
    %v1085 = vunpack.c.h.b16 %v991
    %v1086 = vunpack.c.l.b16 %v992
    %v1087 = vunpack.c.h.b16 %v992
    %v1088 = vunpack.c.l.b16 %v993
    %v1089 = vunpack.c.h.b16 %v993
    %v1090 = vunpack.c.l.b16 %v994
    %v1091 = vunpack.c.h.b16 %v994
    %v1092 = vunpack.c.l.b16 %v995
    %v1093 = vunpack.c.h.b16 %v995
    %v1094 = vunpack.c.l.b16 %v996
    %v1095 = vunpack.c.h.b16 %v996
    %v1096 = vunpack.c.l.b16 %v997
    %v1097 = vunpack.c.h.b16 %v997
    %v1098 = vunpack.c.l.b16 %v998
    %v1099 = vunpack.c.h.b16 %v998
    %v1100 = vunpack.c.l.b16 %v999
    %v1101 = vunpack.c.h.b16 %v999
    %v1102 = vunpack.c.l.b16 %v1000
    %v1103 = vunpack.c.h.b16 %v1000
    %v1104 = vunpack.c.l.b16 %v1001
    %v1105 = vunpack.c.h.b16 %v1001
    %v1106 = vunpack.c.l.b16 %v1002
    %v1107 = vunpack.c.h.b16 %v1002
    %v1108 = vunpack.c.l.b16 %v1003
    %v1109 = vunpack.c.h.b16 %v1003
    %v1110 = vunpack.c.l.b16 %v1004
    %v1111 = vunpack.c.h.b16 %v1004
    %v1112 = vpack.c.b16 %v1052, %v1048
    %v1113 = vpack.c.b16 %v1053, %v1049
    %v1114 = vpack.c.b16 %v1054, %v1050
    %v1115 = vpack.c.b16 %v1055, %v1051
    %v1116 = vpack.c.b16 %v1060, %v1056
    %v1117 = vpack.c.b16 %v1061, %v1057
    %v1118 = vpack.c.b16 %v1062, %v1058
    %v1119 = vpack.c.b16 %v1063, %v1059
    %v1120 = vpack.c.b16 %v1068, %v1064
    %v1121 = vpack.c.b16 %v1069, %v1065
    %v1122 = vpack.c.b16 %v1070, %v1066
    %v1123 = vpack.c.b16 %v1071, %v1067
    %v1124 = vpack.c.b16 %v1076, %v1072
    %v1125 = vpack.c.b16 %v1077, %v1073
    %v1126 = vpack.c.b16 %v1078, %v1074
    %v1127 = vpack.c.b16 %v1079, %v1075
    %v1128 = vpack.c.b16 %v1084, %v1080
    %v1129 = vpack.c.b16 %v1085, %v1081
    %v1130 = vpack.c.b16 %v1086, %v1082
    %v1131 = vpack.c.b16 %v1087, %v1083
    %v1132 = vpack.c.b16 %v1092, %v1088
    %v1133 = vpack.c.b16 %v1093, %v1089
    %v1134 = vpack.c.b16 %v1094, %v1090
    %v1135 = vpack.c.b16 %v1095, %v1091
    %v1136 = vpack.c.b16 %v1100, %v1096
    %v1137 = vpack.c.b16 %v1101, %v1097
    %v1138 = vpack.c.b16 %v1102, %v1098
    %v1139 = vpack.c.b16 %v1103, %v1099
    %v1140 = vpack.c.b16 %v1108, %v1104
    %v1141 = vpack.c.b16 %v1109, %v1105
    %v1142 = vpack.c.b16 %v1110, %v1106
    %v1143 = vpack.c.b16 %v1111, %v1107
    %1176 = vmatprep.subr.bf16.mxu0 %v1113
    %1177 = vmatpush1.bf16.msra.mxu0 %v1112
    %1178 = vmatprep.subr.bf16.mxu0 %v1117
    %1179 = vmatpush1.bf16.msra.mxu0 %v1116
    %1180 = vmatprep.subr.bf16.mxu0 %v1121
    %1181 = vmatpush1.bf16.msra.mxu0 %v1120
    %1182 = vmatprep.subr.bf16.mxu0 %v1125
    %1183 = vmatpush1.bf16.msra.mxu0 %v1124
    %1184 = vmatprep.subr.bf16.mxu0 %v1129
    %1185 = vmatpush1.bf16.msra.mxu0 %v1128
    %1186 = vmatprep.subr.bf16.mxu0 %v1133
    %1187 = vmatpush1.bf16.msra.mxu0 %v1132
    %1188 = vmatprep.subr.bf16.mxu0 %v1137
    %1189 = vmatpush1.bf16.msra.mxu0 %v1136
    %1190 = vmatprep.subr.bf16.mxu0 %v1141
    %1191 = vmatpush1.bf16.msra.mxu0 %v1140
    %1192 = vmatprep.subr.bf16.mxu0 0
    %1193 = vmatpush1.bf16.msra.mxu0 0
    %1194 = vmatprep.subr.bf16.mxu0 0
    %1195 = vmatpush1.bf16.msra.mxu0 0
    %1196 = vmatprep.subr.bf16.mxu0 0
    %1197 = vmatpush1.bf16.msra.mxu0 0
    %1198 = vmatprep.subr.bf16.mxu0 0
    %1199 = vmatpush1.bf16.msra.mxu0 0
    %1200 = vmatprep.subr.bf16.mxu0 0
    %1201 = vmatpush1.bf16.msra.mxu0 0
    %1202 = vmatprep.subr.bf16.mxu0 0
    %1203 = vmatpush1.bf16.msra.mxu0 0
    %1204 = vmatprep.subr.bf16.mxu0 0
    %1205 = vmatpush1.bf16.msra.mxu0 0
    %1206 = vmatprep.subr.bf16.mxu0 0
    %1207 = vmatpush1.bf16.msra.mxu0 0
    %1208 = vmatprep.mubr.bf16.mxu0 0
    %1209 = vmatmul.mubr.bf16.gmra.mrb[0].mxu0 0
    %v1210 = vpop.f32.mrb[0].mxu0
    %v1211 = vadd.f32 0.0, %v1210
    %v1212 = vpop.f32.mrb[0].mxu0
    %v1213 = vadd.f32 0.0, %v1212
    %v1214 = vpop.f32.mrb[0].mxu0
    %v1215 = vadd.f32 0.0, %v1214
    %v1216 = vpop.f32.mrb[0].mxu0
    %v1217 = vadd.f32 0.0, %v1216
    %1218 = vdwg.mxu0
    %1219 = vmatprep.subr.bf16.mxu0 %v1115
    %1220 = vmatpush1.bf16.msra.mxu0 %v1114
    %1221 = vmatprep.subr.bf16.mxu0 %v1119
    %1222 = vmatpush1.bf16.msra.mxu0 %v1118
    %1223 = vmatprep.subr.bf16.mxu0 %v1123
    %1224 = vmatpush1.bf16.msra.mxu0 %v1122
    %1225 = vmatprep.subr.bf16.mxu0 %v1127
    %1226 = vmatpush1.bf16.msra.mxu0 %v1126
    %1227 = vmatprep.subr.bf16.mxu0 %v1131
    %1228 = vmatpush1.bf16.msra.mxu0 %v1130
    %1229 = vmatprep.subr.bf16.mxu0 %v1135
    %1230 = vmatpush1.bf16.msra.mxu0 %v1134
    %1231 = vmatprep.subr.bf16.mxu0 %v1139
    %1232 = vmatpush1.bf16.msra.mxu0 %v1138
    %1233 = vmatprep.subr.bf16.mxu0 %v1143
    %1234 = vmatpush1.bf16.msra.mxu0 %v1142
    %1235 = vmatprep.subr.bf16.mxu0 0
    %1236 = vmatpush1.bf16.msra.mxu0 0
    %1237 = vmatprep.subr.bf16.mxu0 0
    %1238 = vmatpush1.bf16.msra.mxu0 0
    %1239 = vmatprep.subr.bf16.mxu0 0
    %1240 = vmatpush1.bf16.msra.mxu0 0
    %1241 = vmatprep.subr.bf16.mxu0 0
    %1242 = vmatpush1.bf16.msra.mxu0 0
    %1243 = vmatprep.subr.bf16.mxu0 0
    %1244 = vmatpush1.bf16.msra.mxu0 0
    %1245 = vmatprep.subr.bf16.mxu0 0
    %1246 = vmatpush1.bf16.msra.mxu0 0
    %1247 = vmatprep.subr.bf16.mxu0 0
    %1248 = vmatpush1.bf16.msra.mxu0 0
    %1249 = vmatprep.subr.bf16.mxu0 0
    %1250 = vmatpush1.bf16.msra.mxu0 0
    %1251 = vmatprep.mubr.bf16.mxu0 0
    %1252 = vmatmul.mubr.bf16.gmra.mrb[0].mxu0 0
    %v1253 = vpop.f32.mrb[0].mxu0
    %v1254 = vadd.f32 0.0, %v1253
    %v1255 = vpop.f32.mrb[0].mxu0
    %v1256 = vadd.f32 0.0, %v1255
    %v1257 = vpop.f32.mrb[0].mxu0
    %v1258 = vadd.f32 0.0, %v1257
    %v1259 = vpop.f32.mrb[0].mxu0
    %v1260 = vadd.f32 0.0, %v1259
    %1261 = vdwg.mxu0
    %v1262 = vadd.f32 %v1008, %v1211
    %v1263 = vadd.f32 %v1009, %v1213
    %v1264 = vadd.f32 %v1010, %v1254
    %v1265 = vadd.f32 %v1011, %v1256
    %v1266 = vadd.f32 %v1012, %v1215
    %v1267 = vadd.f32 %v1013, %v1217
    %v1268 = vadd.f32 %v1014, %v1258
    %v1269 = vadd.f32 %v1015, %v1260
    %v1270 = vxor.u32 %v1262, 2147483648
    %v1271 = vxor.u32 %v1266, 2147483648
    %v1272 = vmul.f32 %v1270, 1.442695
    %v1273 = vpow.pop %v1272
    %v1274 = vmul.f32 %v1271, 1.442695
    %v1275 = vpow.pop %v1274
    %v1276 = vadd.f32 %v1273, 1.0
    %v1277 = vadd.f32 %v1275, 1.0
    %v1278 = vrcp.pop %v1276
    %v1279 = vmul.f32 1.0, %v1278
    %v1280 = vrcp.pop %v1277
    %v1281 = vmul.f32 1.0, %v1280
    %v1282 = vxor.u32 %v1263, 2147483648
    %v1283 = vxor.u32 %v1267, 2147483648
    %v1284 = vmul.f32 %v1282, 1.442695
    %v1285 = vpow.pop %v1284
    %v1286 = vmul.f32 %v1283, 1.442695
    %v1287 = vpow.pop %v1286
    %v1288 = vadd.f32 %v1285, 1.0
    %v1289 = vadd.f32 %v1287, 1.0
    %v1290 = vrcp.pop %v1288
    %v1291 = vmul.f32 1.0, %v1290
    %v1292 = vrcp.pop %v1289
    %v1293 = vmul.f32 1.0, %v1292
    %v1294 = vtanh.pop %v1264
    %v1295 = vtanh.pop %v1268
    %v1296 = vxor.u32 %v1265, 2147483648
    %v1297 = vxor.u32 %v1269, 2147483648
    %v1298 = vmul.f32 %v1296, 1.442695
    %v1299 = vpow.pop %v1298
    %v1300 = vmul.f32 %v1297, 1.442695
    %v1301 = vpow.pop %v1300
    %v1302 = vadd.f32 %v1299, 1.0
    %v1303 = vadd.f32 %v1301, 1.0
    %v1304 = vrcp.pop %v1302
    %v1305 = vmul.f32 1.0, %v1304
    %v1306 = vrcp.pop %v1303
    %v1307 = vmul.f32 1.0, %v1306
    %v1308 = vmul.f32 %v1291, 0.0
    %v1309 = vmul.f32 %v1293, 0.0
    %v1310 = vmul.f32 %v1279, %v1294
    %v1311 = vmul.f32 %v1281, %v1295
    %v1312 = vadd.f32 %v1308, %v1310
    %v1313 = vadd.f32 %v1309, %v1311
    %v1314 = vtanh.pop %v1312
    %v1315 = vtanh.pop %v1313
    %v1316 = vmul.f32 %v1305, %v1314
    %v1317 = vmul.f32 %v1307, %v1315
    %v1318 = vpack.c.bf16 %v1317, %v1316
    %1319 = vst [vmem:[#allocation3] sm:$0xff] %v1318
    %s1320 = smul.u32 2, 4
    %s1321 = smul.addr %s1320, 8
    %s1322 = scalar_lea.vmem [#allocation2], %s1321
    %v1323 = vld [vmem:[%s1322] sm:$0xff]
    %v1324 = vld [vmem:[%s1322 + $0x8] sm:$0xff]
    %v1325 = vld [vmem:[%s1322 + $0x10] sm:$0xff]
    %v1326 = vld [vmem:[%s1322 + $0x18] sm:$0xff]
    %v1327 = vld [vmem:[%s1322 + $0x20] sm:$0xff]
    %v1328 = vld [vmem:[%s1322 + $0x28] sm:$0xff]
    %v1329 = vld [vmem:[%s1322 + $0x30] sm:$0xff]
    %v1330 = vld [vmem:[%s1322 + $0x38] sm:$0xff]
    %1331 = vmatprep.subr.bf16.mxu0 %v1113
    %1332 = vmatpush1.bf16.msra.mxu0 %v1112
    %1333 = vmatprep.subr.bf16.mxu0 %v1117
    %1334 = vmatpush1.bf16.msra.mxu0 %v1116
    %1335 = vmatprep.subr.bf16.mxu0 %v1121
    %1336 = vmatpush1.bf16.msra.mxu0 %v1120
    %1337 = vmatprep.subr.bf16.mxu0 %v1125
    %1338 = vmatpush1.bf16.msra.mxu0 %v1124
    %1339 = vmatprep.subr.bf16.mxu0 %v1129
    %1340 = vmatpush1.bf16.msra.mxu0 %v1128
    %1341 = vmatprep.subr.bf16.mxu0 %v1133
    %1342 = vmatpush1.bf16.msra.mxu0 %v1132
    %1343 = vmatprep.subr.bf16.mxu0 %v1137
    %1344 = vmatpush1.bf16.msra.mxu0 %v1136
    %1345 = vmatprep.subr.bf16.mxu0 %v1141
    %1346 = vmatpush1.bf16.msra.mxu0 %v1140
    %1347 = vmatprep.subr.bf16.mxu0 0
    %1348 = vmatpush1.bf16.msra.mxu0 0
    %1349 = vmatprep.subr.bf16.mxu0 0
    %1350 = vmatpush1.bf16.msra.mxu0 0
    %1351 = vmatprep.subr.bf16.mxu0 0
    %1352 = vmatpush1.bf16.msra.mxu0 0
    %1353 = vmatprep.subr.bf16.mxu0 0
    %1354 = vmatpush1.bf16.msra.mxu0 0
    %1355 = vmatprep.subr.bf16.mxu0 0
    %1356 = vmatpush1.bf16.msra.mxu0 0
    %1357 = vmatprep.subr.bf16.mxu0 0
    %1358 = vmatpush1.bf16.msra.mxu0 0
    %1359 = vmatprep.subr.bf16.mxu0 0
    %1360 = vmatpush1.bf16.msra.mxu0 0
    %1361 = vmatprep.subr.bf16.mxu0 0
    %1362 = vmatpush1.bf16.msra.mxu0 0
    %1363 = vmatprep.mubr.bf16.mxu0 0
    %1364 = vmatmul.mubr.bf16.gmra.mrb[0].mxu0 %v1318
    %v1365 = vpop.f32.mrb[0].mxu0
    %v1366 = vadd.f32 0.0, %v1365
    %v1367 = vpop.f32.mrb[0].mxu0
    %v1368 = vadd.f32 0.0, %v1367
    %v1369 = vpop.f32.mrb[0].mxu0
    %v1370 = vadd.f32 0.0, %v1369
    %v1371 = vpop.f32.mrb[0].mxu0
    %v1372 = vadd.f32 0.0, %v1371
    %1373 = vdwg.mxu0
    %1374 = vmatprep.subr.bf16.mxu0 %v1115
    %1375 = vmatpush1.bf16.msra.mxu0 %v1114
    %1376 = vmatprep.subr.bf16.mxu0 %v1119
    %1377 = vmatpush1.bf16.msra.mxu0 %v1118
    %1378 = vmatprep.subr.bf16.mxu0 %v1123
    %1379 = vmatpush1.bf16.msra.mxu0 %v1122
    %1380 = vmatprep.subr.bf16.mxu0 %v1127
    %1381 = vmatpush1.bf16.msra.mxu0 %v1126
    %1382 = vmatprep.subr.bf16.mxu0 %v1131
    %1383 = vmatpush1.bf16.msra.mxu0 %v1130
    %1384 = vmatprep.subr.bf16.mxu0 %v1135
    %1385 = vmatpush1.bf16.msra.mxu0 %v1134
    %1386 = vmatprep.subr.bf16.mxu0 %v1139
    %1387 = vmatpush1.bf16.msra.mxu0 %v1138
    %1388 = vmatprep.subr.bf16.mxu0 %v1143
    %1389 = vmatpush1.bf16.msra.mxu0 %v1142
    %1390 = vmatprep.subr.bf16.mxu0 0
    %1391 = vmatpush1.bf16.msra.mxu0 0
    %1392 = vmatprep.subr.bf16.mxu0 0
    %1393 = vmatpush1.bf16.msra.mxu0 0
    %1394 = vmatprep.subr.bf16.mxu0 0
    %1395 = vmatpush1.bf16.msra.mxu0 0
    %1396 = vmatprep.subr.bf16.mxu0 0
    %1397 = vmatpush1.bf16.msra.mxu0 0
    %1398 = vmatprep.subr.bf16.mxu0 0
    %1399 = vmatpush1.bf16.msra.mxu0 0
    %1400 = vmatprep.subr.bf16.mxu0 0
    %1401 = vmatpush1.bf16.msra.mxu0 0
    %1402 = vmatprep.subr.bf16.mxu0 0
    %1403 = vmatpush1.bf16.msra.mxu0 0
    %1404 = vmatprep.subr.bf16.mxu0 0
    %1405 = vmatpush1.bf16.msra.mxu0 0
    %1406 = vmatprep.mubr.bf16.mxu0 0
    %1407 = vmatmul.mubr.bf16.gmra.mrb[0].mxu0 %v1318
    %v1408 = vpop.f32.mrb[0].mxu0
    %v1409 = vadd.f32 0.0, %v1408
    %v1410 = vpop.f32.mrb[0].mxu0
    %v1411 = vadd.f32 0.0, %v1410
    %v1412 = vpop.f32.mrb[0].mxu0
    %v1413 = vadd.f32 0.0, %v1412
    %v1414 = vpop.f32.mrb[0].mxu0
    %v1415 = vadd.f32 0.0, %v1414
    %1416 = vdwg.mxu0
    %v1417 = vadd.f32 %v1323, %v1366
    %v1418 = vadd.f32 %v1324, %v1368
    %v1419 = vadd.f32 %v1325, %v1409
    %v1420 = vadd.f32 %v1326, %v1411
    %v1421 = vadd.f32 %v1327, %v1370
    %v1422 = vadd.f32 %v1328, %v1372
    %v1423 = vadd.f32 %v1329, %v1413
    %v1424 = vadd.f32 %v1330, %v1415
    %v1425 = vxor.u32 %v1417, 2147483648
    %v1426 = vxor.u32 %v1421, 2147483648
    %v1427 = vmul.f32 %v1425, 1.442695
    %v1428 = vpow.pop %v1427
    %v1429 = vmul.f32 %v1426, 1.442695
    %v1430 = vpow.pop %v1429
    %v1431 = vadd.f32 %v1428, 1.0
    %v1432 = vadd.f32 %v1430, 1.0
    %v1433 = vrcp.pop %v1431
    %v1434 = vmul.f32 1.0, %v1433
    %v1435 = vrcp.pop %v1432
    %v1436 = vmul.f32 1.0, %v1435
    %v1437 = vxor.u32 %v1418, 2147483648
    %v1438 = vxor.u32 %v1422, 2147483648
    %v1439 = vmul.f32 %v1437, 1.442695
    %v1440 = vpow.pop %v1439
    %v1441 = vmul.f32 %v1438, 1.442695
    %v1442 = vpow.pop %v1441
    %v1443 = vadd.f32 %v1440, 1.0
    %v1444 = vadd.f32 %v1442, 1.0
    %v1445 = vrcp.pop %v1443
    %v1446 = vmul.f32 1.0, %v1445
    %v1447 = vrcp.pop %v1444
    %v1448 = vmul.f32 1.0, %v1447
    %v1449 = vtanh.pop %v1419
    %v1450 = vtanh.pop %v1423
    %v1451 = vxor.u32 %v1420, 2147483648
    %v1452 = vxor.u32 %v1424, 2147483648
    %v1453 = vmul.f32 %v1451, 1.442695
    %v1454 = vpow.pop %v1453
    %v1455 = vmul.f32 %v1452, 1.442695
    %v1456 = vpow.pop %v1455
    %v1457 = vadd.f32 %v1454, 1.0
    %v1458 = vadd.f32 %v1456, 1.0
    %v1459 = vrcp.pop %v1457
    %v1460 = vmul.f32 1.0, %v1459
    %v1461 = vrcp.pop %v1458
    %v1462 = vmul.f32 1.0, %v1461
    %v1463 = vmul.f32 %v1446, %v1312
    %v1464 = vmul.f32 %v1448, %v1313
    %v1465 = vmul.f32 %v1434, %v1449
    %v1466 = vmul.f32 %v1436, %v1450
    %v1467 = vadd.f32 %v1463, %v1465
    %v1468 = vadd.f32 %v1464, %v1466
    %v1469 = vtanh.pop %v1467
    %v1470 = vtanh.pop %v1468
    %v1471 = vmul.f32 %v1460, %v1469
    %v1472 = vmul.f32 %v1462, %v1470
    %v1473 = vpack.c.bf16 %v1472, %v1471
    %s1474 = scalar_lea.vmem [#allocation3], 8
    %1475 = vst [vmem:[%s1474] sm:$0xff] %v1473
    %s1476 = smul.u32 4, 4
    %s1477 = smul.addr %s1476, 8
    %s1478 = scalar_lea.vmem [#allocation2], %s1477
    %v1479 = vld [vmem:[%s1478] sm:$0xff]
    %v1480 = vld [vmem:[%s1478 + $0x8] sm:$0xff]
    %v1481 = vld [vmem:[%s1478 + $0x10] sm:$0xff]
    %v1482 = vld [vmem:[%s1478 + $0x18] sm:$0xff]
    %v1483 = vld [vmem:[%s1478 + $0x20] sm:$0xff]
    %v1484 = vld [vmem:[%s1478 + $0x28] sm:$0xff]
    %v1485 = vld [vmem:[%s1478 + $0x30] sm:$0xff]
    %v1486 = vld [vmem:[%s1478 + $0x38] sm:$0xff]
    %1487 = vmatprep.subr.bf16.mxu0 %v1113
    %1488 = vmatpush1.bf16.msra.mxu0 %v1112
    %1489 = vmatprep.subr.bf16.mxu0 %v1117
    %1490 = vmatpush1.bf16.msra.mxu0 %v1116
    %1491 = vmatprep.subr.bf16.mxu0 %v1121
    %1492 = vmatpush1.bf16.msra.mxu0 %v1120
    %1493 = vmatprep.subr.bf16.mxu0 %v1125
    %1494 = vmatpush1.bf16.msra.mxu0 %v1124
    %1495 = vmatprep.subr.bf16.mxu0 %v1129
    %1496 = vmatpush1.bf16.msra.mxu0 %v1128
    %1497 = vmatprep.subr.bf16.mxu0 %v1133
    %1498 = vmatpush1.bf16.msra.mxu0 %v1132
    %1499 = vmatprep.subr.bf16.mxu0 %v1137
    %1500 = vmatpush1.bf16.msra.mxu0 %v1136
    %1501 = vmatprep.subr.bf16.mxu0 %v1141
    %1502 = vmatpush1.bf16.msra.mxu0 %v1140
    %1503 = vmatprep.subr.bf16.mxu0 0
    %1504 = vmatpush1.bf16.msra.mxu0 0
    %1505 = vmatprep.subr.bf16.mxu0 0
    %1506 = vmatpush1.bf16.msra.mxu0 0
    %1507 = vmatprep.subr.bf16.mxu0 0
    %1508 = vmatpush1.bf16.msra.mxu0 0
    %1509 = vmatprep.subr.bf16.mxu0 0
    %1510 = vmatpush1.bf16.msra.mxu0 0
    %1511 = vmatprep.subr.bf16.mxu0 0
    %1512 = vmatpush1.bf16.msra.mxu0 0
    %1513 = vmatprep.subr.bf16.mxu0 0
    %1514 = vmatpush1.bf16.msra.mxu0 0
    %1515 = vmatprep.subr.bf16.mxu0 0
    %1516 = vmatpush1.bf16.msra.mxu0 0
    %1517 = vmatprep.subr.bf16.mxu0 0
    %1518 = vmatpush1.bf16.msra.mxu0 0
    %1519 = vmatprep.mubr.bf16.mxu0 0
    %1520 = vmatmul.mubr.bf16.gmra.mrb[0].mxu0 %v1473
    %v1521 = vpop.f32.mrb[0].mxu0
    %v1522 = vadd.f32 0.0, %v1521
    %v1523 = vpop.f32.mrb[0].mxu0
    %v1524 = vadd.f32 0.0, %v1523
    %v1525 = vpop.f32.mrb[0].mxu0
    %v1526 = vadd.f32 0.0, %v1525
    %v1527 = vpop.f32.mrb[0].mxu0
    %v1528 = vadd.f32 0.0, %v1527
    %1529 = vdwg.mxu0
    %1530 = vmatprep.subr.bf16.mxu0 %v1115
    %1531 = vmatpush1.bf16.msra.mxu0 %v1114
    %1532 = vmatprep.subr.bf16.mxu0 %v1119
    %1533 = vmatpush1.bf16.msra.mxu0 %v1118
    %1534 = vmatprep.subr.bf16.mxu0 %v1123
    %1535 = vmatpush1.bf16.msra.mxu0 %v1122
    %1536 = vmatprep.subr.bf16.mxu0 %v1127
    %1537 = vmatpush1.bf16.msra.mxu0 %v1126
    %1538 = vmatprep.subr.bf16.mxu0 %v1131
    %1539 = vmatpush1.bf16.msra.mxu0 %v1130
    %1540 = vmatprep.subr.bf16.mxu0 %v1135
    %1541 = vmatpush1.bf16.msra.mxu0 %v1134
    %1542 = vmatprep.subr.bf16.mxu0 %v1139
    %1543 = vmatpush1.bf16.msra.mxu0 %v1138
    %1544 = vmatprep.subr.bf16.mxu0 %v1143
    %1545 = vmatpush1.bf16.msra.mxu0 %v1142
    %1546 = vmatprep.subr.bf16.mxu0 0
    %1547 = vmatpush1.bf16.msra.mxu0 0
    %1548 = vmatprep.subr.bf16.mxu0 0
    %1549 = vmatpush1.bf16.msra.mxu0 0
    %1550 = vmatprep.subr.bf16.mxu0 0
    %1551 = vmatpush1.bf16.msra.mxu0 0
    %1552 = vmatprep.subr.bf16.mxu0 0
    %1553 = vmatpush1.bf16.msra.mxu0 0
    %1554 = vmatprep.subr.bf16.mxu0 0
    %1555 = vmatpush1.bf16.msra.mxu0 0
    %1556 = vmatprep.subr.bf16.mxu0 0
    %1557 = vmatpush1.bf16.msra.mxu0 0
    %1558 = vmatprep.subr.bf16.mxu0 0
    %1559 = vmatpush1.bf16.msra.mxu0 0
    %1560 = vmatprep.subr.bf16.mxu0 0
    %1561 = vmatpush1.bf16.msra.mxu0 0
    %1562 = vmatprep.mubr.bf16.mxu0 0
    %1563 = vmatmul.mubr.bf16.gmra.mrb[0].mxu0 %v1473
    %v1564 = vpop.f32.mrb[0].mxu0
    %v1565 = vadd.f32 0.0, %v1564
    %v1566 = vpop.f32.mrb[0].mxu0
    %v1567 = vadd.f32 0.0, %v1566
    %v1568 = vpop.f32.mrb[0].mxu0
    %v1569 = vadd.f32 0.0, %v1568
    %v1570 = vpop.f32.mrb[0].mxu0
    %v1571 = vadd.f32 0.0, %v1570
    %1572 = vdwg.mxu0
    %v1573 = vadd.f32 %v1479, %v1522
    %v1574 = vadd.f32 %v1480, %v1524
    %v1575 = vadd.f32 %v1481, %v1565
    %v1576 = vadd.f32 %v1482, %v1567
    %v1577 = vadd.f32 %v1483, %v1526
    %v1578 = vadd.f32 %v1484, %v1528
    %v1579 = vadd.f32 %v1485, %v1569
    %v1580 = vadd.f32 %v1486, %v1571
    %v1581 = vxor.u32 %v1573, 2147483648
    %v1582 = vxor.u32 %v1577, 2147483648
    %v1583 = vmul.f32 %v1581, 1.442695
    %v1584 = vpow.pop %v1583
    %v1585 = vmul.f32 %v1582, 1.442695
    %v1586 = vpow.pop %v1585
    %v1587 = vadd.f32 %v1584, 1.0
    %v1588 = vadd.f32 %v1586, 1.0
    %v1589 = vrcp.pop %v1587
    %v1590 = vmul.f32 1.0, %v1589
    %v1591 = vrcp.pop %v1588
    %v1592 = vmul.f32 1.0, %v1591
    %v1593 = vxor.u32 %v1574, 2147483648
    %v1594 = vxor.u32 %v1578, 2147483648
    %v1595 = vmul.f32 %v1593, 1.442695
    %v1596 = vpow.pop %v1595
    %v1597 = vmul.f32 %v1594, 1.442695
    %v1598 = vpow.pop %v1597
    %v1599 = vadd.f32 %v1596, 1.0
    %v1600 = vadd.f32 %v1598, 1.0
    %v1601 = vrcp.pop %v1599
    %v1602 = vmul.f32 1.0, %v1601
    %v1603 = vrcp.pop %v1600
    %v1604 = vmul.f32 1.0, %v1603
    %v1605 = vtanh.pop %v1575
    %v1606 = vtanh.pop %v1579
    %v1607 = vxor.u32 %v1576, 2147483648
    %v1608 = vxor.u32 %v1580, 2147483648
    %v1609 = vmul.f32 %v1607, 1.442695
    %v1610 = vpow.pop %v1609
    %v1611 = vmul.f32 %v1608, 1.442695
    %v1612 = vpow.pop %v1611
    %v1613 = vadd.f32 %v1610, 1.0
    %v1614 = vadd.f32 %v1612, 1.0
    %v1615 = vrcp.pop %v1613
    %v1616 = vmul.f32 1.0, %v1615
    %v1617 = vrcp.pop %v1614
    %v1618 = vmul.f32 1.0, %v1617
    %v1619 = vmul.f32 %v1602, %v1467
    %v1620 = vmul.f32 %v1604, %v1468
    %v1621 = vmul.f32 %v1590, %v1605
    %v1622 = vmul.f32 %v1592, %v1606
    %v1623 = vadd.f32 %v1619, %v1621
    %v1624 = vadd.f32 %v1620, %v1622
    %v1625 = vtanh.pop %v1623
    %v1626 = vtanh.pop %v1624
    %v1627 = vmul.f32 %v1616, %v1625
    %v1628 = vmul.f32 %v1618, %v1626
    %v1629 = vpack.c.bf16 %v1628, %v1627
    %s1630 = scalar_lea.vmem [#allocation3], 16
    %1631 = vst [vmem:[%s1630] sm:$0xff] %v1629
    %s1632 = smul.u32 6, 4
    %s1633 = smul.addr %s1632, 8
    %s1634 = scalar_lea.vmem [#allocation2], %s1633
    %v1635 = vld [vmem:[%s1634] sm:$0xff]
    %v1636 = vld [vmem:[%s1634 + $0x8] sm:$0xff]
    %v1637 = vld [vmem:[%s1634 + $0x10] sm:$0xff]
    %v1638 = vld [vmem:[%s1634 + $0x18] sm:$0xff]
    %v1639 = vld [vmem:[%s1634 + $0x20] sm:$0xff]
    %v1640 = vld [vmem:[%s1634 + $0x28] sm:$0xff]
    %v1641 = vld [vmem:[%s1634 + $0x30] sm:$0xff]
    %v1642 = vld [vmem:[%s1634 + $0x38] sm:$0xff]
    %1643 = vmatprep.subr.bf16.mxu0 %v1113
    %1644 = vmatpush1.bf16.msra.mxu0 %v1112
    %1645 = vmatprep.subr.bf16.mxu0 %v1117
    %1646 = vmatpush1.bf16.msra.mxu0 %v1116
    %1647 = vmatprep.subr.bf16.mxu0 %v1121
    %1648 = vmatpush1.bf16.msra.mxu0 %v1120
    %1649 = vmatprep.subr.bf16.mxu0 %v1125
    %1650 = vmatpush1.bf16.msra.mxu0 %v1124
    %1651 = vmatprep.subr.bf16.mxu0 %v1129
    %1652 = vmatpush1.bf16.msra.mxu0 %v1128
    %1653 = vmatprep.subr.bf16.mxu0 %v1133
    %1654 = vmatpush1.bf16.msra.mxu0 %v1132
    %1655 = vmatprep.subr.bf16.mxu0 %v1137
    %1656 = vmatpush1.bf16.msra.mxu0 %v1136
    %1657 = vmatprep.subr.bf16.mxu0 %v1141
    %1658 = vmatpush1.bf16.msra.mxu0 %v1140
    %1659 = vmatprep.subr.bf16.mxu0 0
    %1660 = vmatpush1.bf16.msra.mxu0 0
    %1661 = vmatprep.subr.bf16.mxu0 0
    %1662 = vmatpush1.bf16.msra.mxu0 0
    %1663 = vmatprep.subr.bf16.mxu0 0
    %1664 = vmatpush1.bf16.msra.mxu0 0
    %1665 = vmatprep.subr.bf16.mxu0 0
    %1666 = vmatpush1.bf16.msra.mxu0 0
    %1667 = vmatprep.subr.bf16.mxu0 0
    %1668 = vmatpush1.bf16.msra.mxu0 0
    %1669 = vmatprep.subr.bf16.mxu0 0
    %1670 = vmatpush1.bf16.msra.mxu0 0
    %1671 = vmatprep.subr.bf16.mxu0 0
    %1672 = vmatpush1.bf16.msra.mxu0 0
    %1673 = vmatprep.subr.bf16.mxu0 0
    %1674 = vmatpush1.bf16.msra.mxu0 0
    %1675 = vmatprep.mubr.bf16.mxu0 0
    %1676 = vmatmul.mubr.bf16.gmra.mrb[0].mxu0 %v1629
    %v1677 = vpop.f32.mrb[0].mxu0
    %v1678 = vadd.f32 0.0, %v1677
    %v1679 = vpop.f32.mrb[0].mxu0
    %v1680 = vadd.f32 0.0, %v1679
    %v1681 = vpop.f32.mrb[0].mxu0
    %v1682 = vadd.f32 0.0, %v1681
    %v1683 = vpop.f32.mrb[0].mxu0
    %v1684 = vadd.f32 0.0, %v1683
    %1685 = vdwg.mxu0
    %1686 = vmatprep.subr.bf16.mxu0 %v1115
    %1687 = vmatpush1.bf16.msra.mxu0 %v1114
    %1688 = vmatprep.subr.bf16.mxu0 %v1119
    %1689 = vmatpush1.bf16.msra.mxu0 %v1118
    %1690 = vmatprep.subr.bf16.mxu0 %v1123
    %1691 = vmatpush1.bf16.msra.mxu0 %v1122
    %1692 = vmatprep.subr.bf16.mxu0 %v1127
    %1693 = vmatpush1.bf16.msra.mxu0 %v1126
    %1694 = vmatprep.subr.bf16.mxu0 %v1131
    %1695 = vmatpush1.bf16.msra.mxu0 %v1130
    %1696 = vmatprep.subr.bf16.mxu0 %v1135
    %1697 = vmatpush1.bf16.msra.mxu0 %v1134
    %1698 = vmatprep.subr.bf16.mxu0 %v1139
    %1699 = vmatpush1.bf16.msra.mxu0 %v1138
    %1700 = vmatprep.subr.bf16.mxu0 %v1143
    %1701 = vmatpush1.bf16.msra.mxu0 %v1142
    %1702 = vmatprep.subr.bf16.mxu0 0
    %1703 = vmatpush1.bf16.msra.mxu0 0
    %1704 = vmatprep.subr.bf16.mxu0 0
    %1705 = vmatpush1.bf16.msra.mxu0 0
    %1706 = vmatprep.subr.bf16.mxu0 0
    %1707 = vmatpush1.bf16.msra.mxu0 0
    %1708 = vmatprep.subr.bf16.mxu0 0
    %1709 = vmatpush1.bf16.msra.mxu0 0
    %1710 = vmatprep.subr.bf16.mxu0 0
    %1711 = vmatpush1.bf16.msra.mxu0 0
    %1712 = vmatprep.subr.bf16.mxu0 0
    %1713 = vmatpush1.bf16.msra.mxu0 0
    %1714 = vmatprep.subr.bf16.mxu0 0
    %1715 = vmatpush1.bf16.msra.mxu0 0
    %1716 = vmatprep.subr.bf16.mxu0 0
    %1717 = vmatpush1.bf16.msra.mxu0 0
    %1718 = vmatprep.mubr.bf16.mxu0 0
    %1719 = vmatmul.mubr.bf16.gmra.mrb[0].mxu0 %v1629
    %v1720 = vpop.f32.mrb[0].mxu0
    %v1721 = vadd.f32 0.0, %v1720
    %v1722 = vpop.f32.mrb[0].mxu0
    %v1723 = vadd.f32 0.0, %v1722
    %v1724 = vpop.f32.mrb[0].mxu0
    %v1725 = vadd.f32 0.0, %v1724
    %v1726 = vpop.f32.mrb[0].mxu0
    %v1727 = vadd.f32 0.0, %v1726
    %1728 = vdwg.mxu0
    %v1729 = vadd.f32 %v1635, %v1678
    %v1730 = vadd.f32 %v1636, %v1680
    %v1731 = vadd.f32 %v1637, %v1721
    %v1732 = vadd.f32 %v1638, %v1723
    %v1733 = vadd.f32 %v1639, %v1682
    %v1734 = vadd.f32 %v1640, %v1684
    %v1735 = vadd.f32 %v1641, %v1725
    %v1736 = vadd.f32 %v1642, %v1727
    %v1737 = vxor.u32 %v1729, 2147483648
    %v1738 = vxor.u32 %v1733, 2147483648
    %v1739 = vmul.f32 %v1737, 1.442695
    %v1740 = vpow.pop %v1739
    %v1741 = vmul.f32 %v1738, 1.442695
    %v1742 = vpow.pop %v1741
    %v1743 = vadd.f32 %v1740, 1.0
    %v1744 = vadd.f32 %v1742, 1.0
    %v1745 = vrcp.pop %v1743
    %v1746 = vmul.f32 1.0, %v1745
    %v1747 = vrcp.pop %v1744
    %v1748 = vmul.f32 1.0, %v1747
    %v1749 = vxor.u32 %v1730, 2147483648
    %v1750 = vxor.u32 %v1734, 2147483648
    %v1751 = vmul.f32 %v1749, 1.442695
    %v1752 = vpow.pop %v1751
    %v1753 = vmul.f32 %v1750, 1.442695
    %v1754 = vpow.pop %v1753
    %v1755 = vadd.f32 %v1752, 1.0
    %v1756 = vadd.f32 %v1754, 1.0
    %v1757 = vrcp.pop %v1755
    %v1758 = vmul.f32 1.0, %v1757
    %v1759 = vrcp.pop %v1756
    %v1760 = vmul.f32 1.0, %v1759
    %v1761 = vtanh.pop %v1731
    %v1762 = vtanh.pop %v1735
    %v1763 = vxor.u32 %v1732, 2147483648
    %v1764 = vxor.u32 %v1736, 2147483648
    %v1765 = vmul.f32 %v1763, 1.442695
    %v1766 = vpow.pop %v1765
    %v1767 = vmul.f32 %v1764, 1.442695
    %v1768 = vpow.pop %v1767
    %v1769 = vadd.f32 %v1766, 1.0
    %v1770 = vadd.f32 %v1768, 1.0
    %v1771 = vrcp.pop %v1769
    %v1772 = vmul.f32 1.0, %v1771
    %v1773 = vrcp.pop %v1770
    %v1774 = vmul.f32 1.0, %v1773
    %v1775 = vmul.f32 %v1758, %v1623
    %v1776 = vmul.f32 %v1760, %v1624
    %v1777 = vmul.f32 %v1746, %v1761
    %v1778 = vmul.f32 %v1748, %v1762
    %v1779 = vadd.f32 %v1775, %v1777
    %v1780 = vadd.f32 %v1776, %v1778
    %v1781 = vtanh.pop %v1779
    %v1782 = vtanh.pop %v1780
    %v1783 = vmul.f32 %v1772, %v1781
    %v1784 = vmul.f32 %v1774, %v1782
    %v1785 = vpack.c.bf16 %v1784, %v1783
    %s1786 = scalar_lea.vmem [#allocation3], 24
    %1787 = vst [vmem:[%s1786] sm:$0xff] %v1785
    %s1788 = smul.u32 8, 4
    %s1789 = smul.addr %s1788, 8
    %s1790 = scalar_lea.vmem [#allocation2], %s1789
    %v1791 = vld [vmem:[%s1790] sm:$0xff]
    %v1792 = vld [vmem:[%s1790 + $0x8] sm:$0xff]
    %v1793 = vld [vmem:[%s1790 + $0x10] sm:$0xff]
    %v1794 = vld [vmem:[%s1790 + $0x18] sm:$0xff]
    %v1795 = vld [vmem:[%s1790 + $0x20] sm:$0xff]
    %v1796 = vld [vmem:[%s1790 + $0x28] sm:$0xff]
    %v1797 = vld [vmem:[%s1790 + $0x30] sm:$0xff]
    %v1798 = vld [vmem:[%s1790 + $0x38] sm:$0xff]
    %1799 = vmatprep.subr.bf16.mxu0 %v1113
    %1800 = vmatpush1.bf16.msra.mxu0 %v1112
    %1801 = vmatprep.subr.bf16.mxu0 %v1117
    %1802 = vmatpush1.bf16.msra.mxu0 %v1116
    %1803 = vmatprep.subr.bf16.mxu0 %v1121
    %1804 = vmatpush1.bf16.msra.mxu0 %v1120
    %1805 = vmatprep.subr.bf16.mxu0 %v1125
    %1806 = vmatpush1.bf16.msra.mxu0 %v1124
    %1807 = vmatprep.subr.bf16.mxu0 %v1129
    %1808 = vmatpush1.bf16.msra.mxu0 %v1128
    %1809 = vmatprep.subr.bf16.mxu0 %v1133
    %1810 = vmatpush1.bf16.msra.mxu0 %v1132
    %1811 = vmatprep.subr.bf16.mxu0 %v1137
    %1812 = vmatpush1.bf16.msra.mxu0 %v1136
    %1813 = vmatprep.subr.bf16.mxu0 %v1141
    %1814 = vmatpush1.bf16.msra.mxu0 %v1140
    %1815 = vmatprep.subr.bf16.mxu0 0
    %1816 = vmatpush1.bf16.msra.mxu0 0
    %1817 = vmatprep.subr.bf16.mxu0 0
    %1818 = vmatpush1.bf16.msra.mxu0 0
    %1819 = vmatprep.subr.bf16.mxu0 0
    %1820 = vmatpush1.bf16.msra.mxu0 0
    %1821 = vmatprep.subr.bf16.mxu0 0
    %1822 = vmatpush1.bf16.msra.mxu0 0
    %1823 = vmatprep.subr.bf16.mxu0 0
    %1824 = vmatpush1.bf16.msra.mxu0 0
    %1825 = vmatprep.subr.bf16.mxu0 0
    %1826 = vmatpush1.bf16.msra.mxu0 0
    %1827 = vmatprep.subr.bf16.mxu0 0
    %1828 = vmatpush1.bf16.msra.mxu0 0
    %1829 = vmatprep.subr.bf16.mxu0 0
    %1830 = vmatpush1.bf16.msra.mxu0 0
    %1831 = vmatprep.mubr.bf16.mxu0 0
    %1832 = vmatmul.mubr.bf16.gmra.mrb[0].mxu0 %v1785
    %v1833 = vpop.f32.mrb[0].mxu0
    %v1834 = vadd.f32 0.0, %v1833
    %v1835 = vpop.f32.mrb[0].mxu0
    %v1836 = vadd.f32 0.0, %v1835
    %v1837 = vpop.f32.mrb[0].mxu0
    %v1838 = vadd.f32 0.0, %v1837
    %v1839 = vpop.f32.mrb[0].mxu0
    %v1840 = vadd.f32 0.0, %v1839
    %1841 = vdwg.mxu0
    %1842 = vmatprep.subr.bf16.mxu0 %v1115
    %1843 = vmatpush1.bf16.msra.mxu0 %v1114
    %1844 = vmatprep.subr.bf16.mxu0 %v1119
    %1845 = vmatpush1.bf16.msra.mxu0 %v1118
    %1846 = vmatprep.subr.bf16.mxu0 %v1123
    %1847 = vmatpush1.bf16.msra.mxu0 %v1122
    %1848 = vmatprep.subr.bf16.mxu0 %v1127
    %1849 = vmatpush1.bf16.msra.mxu0 %v1126
    %1850 = vmatprep.subr.bf16.mxu0 %v1131
    %1851 = vmatpush1.bf16.msra.mxu0 %v1130
    %1852 = vmatprep.subr.bf16.mxu0 %v1135
    %1853 = vmatpush1.bf16.msra.mxu0 %v1134
    %1854 = vmatprep.subr.bf16.mxu0 %v1139
    %1855 = vmatpush1.bf16.msra.mxu0 %v1138
    %1856 = vmatprep.subr.bf16.mxu0 %v1143
    %1857 = vmatpush1.bf16.msra.mxu0 %v1142
    %1858 = vmatprep.subr.bf16.mxu0 0
    %1859 = vmatpush1.bf16.msra.mxu0 0
    %1860 = vmatprep.subr.bf16.mxu0 0
    %1861 = vmatpush1.bf16.msra.mxu0 0
    %1862 = vmatprep.subr.bf16.mxu0 0
    %1863 = vmatpush1.bf16.msra.mxu0 0
    %1864 = vmatprep.subr.bf16.mxu0 0
    %1865 = vmatpush1.bf16.msra.mxu0 0
    %1866 = vmatprep.subr.bf16.mxu0 0
    %1867 = vmatpush1.bf16.msra.mxu0 0
    %1868 = vmatprep.subr.bf16.mxu0 0
    %1869 = vmatpush1.bf16.msra.mxu0 0
    %1870 = vmatprep.subr.bf16.mxu0 0
    %1871 = vmatpush1.bf16.msra.mxu0 0
    %1872 = vmatprep.subr.bf16.mxu0 0
    %1873 = vmatpush1.bf16.msra.mxu0 0
    %1874 = vmatprep.mubr.bf16.mxu0 0
    %1875 = vmatmul.mubr.bf16.gmra.mrb[0].mxu0 %v1785
    %v1876 = vpop.f32.mrb[0].mxu0
    %v1877 = vadd.f32 0.0, %v1876
    %v1878 = vpop.f32.mrb[0].mxu0
    %v1879 = vadd.f32 0.0, %v1878
    %v1880 = vpop.f32.mrb[0].mxu0
    %v1881 = vadd.f32 0.0, %v1880
    %v1882 = vpop.f32.mrb[0].mxu0
    %v1883 = vadd.f32 0.0, %v1882
    %1884 = vdwg.mxu0
    %v1885 = vadd.f32 %v1791, %v1834
    %v1886 = vadd.f32 %v1792, %v1836
    %v1887 = vadd.f32 %v1793, %v1877
    %v1888 = vadd.f32 %v1794, %v1879
    %v1889 = vadd.f32 %v1795, %v1838
    %v1890 = vadd.f32 %v1796, %v1840
    %v1891 = vadd.f32 %v1797, %v1881
    %v1892 = vadd.f32 %v1798, %v1883
    %v1893 = vxor.u32 %v1885, 2147483648
    %v1894 = vxor.u32 %v1889, 2147483648
    %v1895 = vmul.f32 %v1893, 1.442695
    %v1896 = vpow.pop %v1895
    %v1897 = vmul.f32 %v1894, 1.442695
    %v1898 = vpow.pop %v1897
    %v1899 = vadd.f32 %v1896, 1.0
    %v1900 = vadd.f32 %v1898, 1.0
    %v1901 = vrcp.pop %v1899
    %v1902 = vmul.f32 1.0, %v1901
    %v1903 = vrcp.pop %v1900
    %v1904 = vmul.f32 1.0, %v1903
    %v1905 = vxor.u32 %v1886, 2147483648
    %v1906 = vxor.u32 %v1890, 2147483648
    %v1907 = vmul.f32 %v1905, 1.442695
    %v1908 = vpow.pop %v1907
    %v1909 = vmul.f32 %v1906, 1.442695
    %v1910 = vpow.pop %v1909
    %v1911 = vadd.f32 %v1908, 1.0
    %v1912 = vadd.f32 %v1910, 1.0
    %v1913 = vrcp.pop %v1911
    %v1914 = vmul.f32 1.0, %v1913
    %v1915 = vrcp.pop %v1912
    %v1916 = vmul.f32 1.0, %v1915
    %v1917 = vtanh.pop %v1887
    %v1918 = vtanh.pop %v1891
    %v1919 = vxor.u32 %v1888, 2147483648
    %v1920 = vxor.u32 %v1892, 2147483648
    %v1921 = vmul.f32 %v1919, 1.442695
    %v1922 = vpow.pop %v1921
    %v1923 = vmul.f32 %v1920, 1.442695
    %v1924 = vpow.pop %v1923
    %v1925 = vadd.f32 %v1922, 1.0
    %v1926 = vadd.f32 %v1924, 1.0
    %v1927 = vrcp.pop %v1925
    %v1928 = vmul.f32 1.0, %v1927
    %v1929 = vrcp.pop %v1926
    %v1930 = vmul.f32 1.0, %v1929
    %v1931 = vmul.f32 %v1914, %v1779
    %v1932 = vmul.f32 %v1916, %v1780
    %v1933 = vmul.f32 %v1902, %v1917
    %v1934 = vmul.f32 %v1904, %v1918
    %v1935 = vadd.f32 %v1931, %v1933
    %v1936 = vadd.f32 %v1932, %v1934
    %v1937 = vtanh.pop %v1935
    %v1938 = vtanh.pop %v1936
    %v1939 = vmul.f32 %v1928, %v1937
    %v1940 = vmul.f32 %v1930, %v1938
    %v1941 = vpack.c.bf16 %v1940, %v1939
    %s1942 = scalar_lea.vmem [#allocation3], 32
    %1943 = vst [vmem:[%s1942] sm:$0xff] %v1941
    %s1944 = smul.u32 10, 4
    %s1945 = smul.addr %s1944, 8
    %s1946 = scalar_lea.vmem [#allocation2], %s1945
    %v1947 = vld [vmem:[%s1946] sm:$0xff]
    %v1948 = vld [vmem:[%s1946 + $0x8] sm:$0xff]
    %v1949 = vld [vmem:[%s1946 + $0x10] sm:$0xff]
    %v1950 = vld [vmem:[%s1946 + $0x18] sm:$0xff]
    %v1951 = vld [vmem:[%s1946 + $0x20] sm:$0xff]
    %v1952 = vld [vmem:[%s1946 + $0x28] sm:$0xff]
    %v1953 = vld [vmem:[%s1946 + $0x30] sm:$0xff]
    %v1954 = vld [vmem:[%s1946 + $0x38] sm:$0xff]
    %1955 = vmatprep.subr.bf16.mxu0 %v1113
    %1956 = vmatpush1.bf16.msra.mxu0 %v1112
    %1957 = vmatprep.subr.bf16.mxu0 %v1117
    %1958 = vmatpush1.bf16.msra.mxu0 %v1116
    %1959 = vmatprep.subr.bf16.mxu0 %v1121
    %1960 = vmatpush1.bf16.msra.mxu0 %v1120
    %1961 = vmatprep.subr.bf16.mxu0 %v1125
    %1962 = vmatpush1.bf16.msra.mxu0 %v1124
    %1963 = vmatprep.subr.bf16.mxu0 %v1129
    %1964 = vmatpush1.bf16.msra.mxu0 %v1128
    %1965 = vmatprep.subr.bf16.mxu0 %v1133
    %1966 = vmatpush1.bf16.msra.mxu0 %v1132
    %1967 = vmatprep.subr.bf16.mxu0 %v1137
    %1968 = vmatpush1.bf16.msra.mxu0 %v1136
    %1969 = vmatprep.subr.bf16.mxu0 %v1141
    %1970 = vmatpush1.bf16.msra.mxu0 %v1140
    %1971 = vmatprep.subr.bf16.mxu0 0
    %1972 = vmatpush1.bf16.msra.mxu0 0
    %1973 = vmatprep.subr.bf16.mxu0 0
    %1974 = vmatpush1.bf16.msra.mxu0 0
    %1975 = vmatprep.subr.bf16.mxu0 0
    %1976 = vmatpush1.bf16.msra.mxu0 0
    %1977 = vmatprep.subr.bf16.mxu0 0
    %1978 = vmatpush1.bf16.msra.mxu0 0
    %1979 = vmatprep.subr.bf16.mxu0 0
    %1980 = vmatpush1.bf16.msra.mxu0 0
    %1981 = vmatprep.subr.bf16.mxu0 0
    %1982 = vmatpush1.bf16.msra.mxu0 0
    %1983 = vmatprep.subr.bf16.mxu0 0
    %1984 = vmatpush1.bf16.msra.mxu0 0
    %1985 = vmatprep.subr.bf16.mxu0 0
    %1986 = vmatpush1.bf16.msra.mxu0 0
    %1987 = vmatprep.mubr.bf16.mxu0 0
    %1988 = vmatmul.mubr.bf16.gmra.mrb[0].mxu0 %v1941
    %v1989 = vpop.f32.mrb[0].mxu0
    %v1990 = vadd.f32 0.0, %v1989
    %v1991 = vpop.f32.mrb[0].mxu0
    %v1992 = vadd.f32 0.0, %v1991
    %v1993 = vpop.f32.mrb[0].mxu0
    %v1994 = vadd.f32 0.0, %v1993
    %v1995 = vpop.f32.mrb[0].mxu0
    %v1996 = vadd.f32 0.0, %v1995
    %1997 = vdwg.mxu0
    %1998 = vmatprep.subr.bf16.mxu0 %v1115
    %1999 = vmatpush1.bf16.msra.mxu0 %v1114
    %2000 = vmatprep.subr.bf16.mxu0 %v1119
    %2001 = vmatpush1.bf16.msra.mxu0 %v1118
    %2002 = vmatprep.subr.bf16.mxu0 %v1123
    %2003 = vmatpush1.bf16.msra.mxu0 %v1122
    %2004 = vmatprep.subr.bf16.mxu0 %v1127
    %2005 = vmatpush1.bf16.msra.mxu0 %v1126
    %2006 = vmatprep.subr.bf16.mxu0 %v1131
    %2007 = vmatpush1.bf16.msra.mxu0 %v1130
    %2008 = vmatprep.subr.bf16.mxu0 %v1135
    %2009 = vmatpush1.bf16.msra.mxu0 %v1134
    %2010 = vmatprep.subr.bf16.mxu0 %v1139
    %2011 = vmatpush1.bf16.msra.mxu0 %v1138
    %2012 = vmatprep.subr.bf16.mxu0 %v1143
    %2013 = vmatpush1.bf16.msra.mxu0 %v1142
    %2014 = vmatprep.subr.bf16.mxu0 0
    %2015 = vmatpush1.bf16.msra.mxu0 0
    %2016 = vmatprep.subr.bf16.mxu0 0
    %2017 = vmatpush1.bf16.msra.mxu0 0
    %2018 = vmatprep.subr.bf16.mxu0 0
    %2019 = vmatpush1.bf16.msra.mxu0 0
    %2020 = vmatprep.subr.bf16.mxu0 0
    %2021 = vmatpush1.bf16.msra.mxu0 0
    %2022 = vmatprep.subr.bf16.mxu0 0
    %2023 = vmatpush1.bf16.msra.mxu0 0
    %2024 = vmatprep.subr.bf16.mxu0 0
    %2025 = vmatpush1.bf16.msra.mxu0 0
    %2026 = vmatprep.subr.bf16.mxu0 0
    %2027 = vmatpush1.bf16.msra.mxu0 0
    %2028 = vmatprep.subr.bf16.mxu0 0
    %2029 = vmatpush1.bf16.msra.mxu0 0
    %2030 = vmatprep.mubr.bf16.mxu0 0
    %2031 = vmatmul.mubr.bf16.gmra.mrb[0].mxu0 %v1941
    %v2032 = vpop.f32.mrb[0].mxu0
    %v2033 = vadd.f32 0.0, %v2032
    %v2034 = vpop.f32.mrb[0].mxu0
    %v2035 = vadd.f32 0.0, %v2034
    %v2036 = vpop.f32.mrb[0].mxu0
    %v2037 = vadd.f32 0.0, %v2036
    %v2038 = vpop.f32.mrb[0].mxu0
    %v2039 = vadd.f32 0.0, %v2038
    %2040 = vdwg.mxu0
    %v2041 = vadd.f32 %v1947, %v1990
    %v2042 = vadd.f32 %v1948, %v1992
    %v2043 = vadd.f32 %v1949, %v2033
    %v2044 = vadd.f32 %v1950, %v2035
    %v2045 = vadd.f32 %v1951, %v1994
    %v2046 = vadd.f32 %v1952, %v1996
    %v2047 = vadd.f32 %v1953, %v2037
    %v2048 = vadd.f32 %v1954, %v2039
    %v2049 = vxor.u32 %v2041, 2147483648
    %v2050 = vxor.u32 %v2045, 2147483648
    %v2051 = vmul.f32 %v2049, 1.442695
    %v2052 = vpow.pop %v2051
    %v2053 = vmul.f32 %v2050, 1.442695
    %v2054 = vpow.pop %v2053
    %v2055 = vadd.f32 %v2052, 1.0
    %v2056 = vadd.f32 %v2054, 1.0
    %v2057 = vrcp.pop %v2055
    %v2058 = vmul.f32 1.0, %v2057
    %v2059 = vrcp.pop %v2056
    %v2060 = vmul.f32 1.0, %v2059
    %v2061 = vxor.u32 %v2042, 2147483648
    %v2062 = vxor.u32 %v2046, 2147483648
    %v2063 = vmul.f32 %v2061, 1.442695
    %v2064 = vpow.pop %v2063
    %v2065 = vmul.f32 %v2062, 1.442695
    %v2066 = vpow.pop %v2065
    %v2067 = vadd.f32 %v2064, 1.0
    %v2068 = vadd.f32 %v2066, 1.0
    %v2069 = vrcp.pop %v2067
    %v2070 = vmul.f32 1.0, %v2069
    %v2071 = vrcp.pop %v2068
    %v2072 = vmul.f32 1.0, %v2071
    %v2073 = vtanh.pop %v2043
    %v2074 = vtanh.pop %v2047
    %v2075 = vxor.u32 %v2044, 2147483648
    %v2076 = vxor.u32 %v2048, 2147483648
    %v2077 = vmul.f32 %v2075, 1.442695
    %v2078 = vpow.pop %v2077
    %v2079 = vmul.f32 %v2076, 1.442695
    %v2080 = vpow.pop %v2079
    %v2081 = vadd.f32 %v2078, 1.0
    %v2082 = vadd.f32 %v2080, 1.0
    %v2083 = vrcp.pop %v2081
    %v2084 = vmul.f32 1.0, %v2083
    %v2085 = vrcp.pop %v2082
    %v2086 = vmul.f32 1.0, %v2085
    %v2087 = vmul.f32 %v2070, %v1935
    %v2088 = vmul.f32 %v2072, %v1936
    %v2089 = vmul.f32 %v2058, %v2073
    %v2090 = vmul.f32 %v2060, %v2074
    %v2091 = vadd.f32 %v2087, %v2089
    %v2092 = vadd.f32 %v2088, %v2090
    %v2093 = vtanh.pop %v2091
    %v2094 = vtanh.pop %v2092
    %v2095 = vmul.f32 %v2084, %v2093
    %v2096 = vmul.f32 %v2086, %v2094
    %v2097 = vpack.c.bf16 %v2096, %v2095
    %s2098 = scalar_lea.vmem [#allocation3], 40
    %2099 = vst [vmem:[%s2098] sm:$0xff] %v2097
    %s2100 = smul.u32 12, 4
    %s2101 = smul.addr %s2100, 8
    %s2102 = scalar_lea.vmem [#allocation2], %s2101
    %v2103 = vld [vmem:[%s2102] sm:$0xff]
    %v2104 = vld [vmem:[%s2102 + $0x8] sm:$0xff]
    %v2105 = vld [vmem:[%s2102 + $0x10] sm:$0xff]
    %v2106 = vld [vmem:[%s2102 + $0x18] sm:$0xff]
    %v2107 = vld [vmem:[%s2102 + $0x20] sm:$0xff]
    %v2108 = vld [vmem:[%s2102 + $0x28] sm:$0xff]
    %v2109 = vld [vmem:[%s2102 + $0x30] sm:$0xff]
    %v2110 = vld [vmem:[%s2102 + $0x38] sm:$0xff]
    %2111 = vmatprep.subr.bf16.mxu0 %v1113
    %2112 = vmatpush1.bf16.msra.mxu0 %v1112
    %2113 = vmatprep.subr.bf16.mxu0 %v1117
    %2114 = vmatpush1.bf16.msra.mxu0 %v1116
    %2115 = vmatprep.subr.bf16.mxu0 %v1121
    %2116 = vmatpush1.bf16.msra.mxu0 %v1120
    %2117 = vmatprep.subr.bf16.mxu0 %v1125
    %2118 = vmatpush1.bf16.msra.mxu0 %v1124
    %2119 = vmatprep.subr.bf16.mxu0 %v1129
    %2120 = vmatpush1.bf16.msra.mxu0 %v1128
    %2121 = vmatprep.subr.bf16.mxu0 %v1133
    %2122 = vmatpush1.bf16.msra.mxu0 %v1132
    %2123 = vmatprep.subr.bf16.mxu0 %v1137
    %2124 = vmatpush1.bf16.msra.mxu0 %v1136
    %2125 = vmatprep.subr.bf16.mxu0 %v1141
    %2126 = vmatpush1.bf16.msra.mxu0 %v1140
    %2127 = vmatprep.subr.bf16.mxu0 0
    %2128 = vmatpush1.bf16.msra.mxu0 0
    %2129 = vmatprep.subr.bf16.mxu0 0
    %2130 = vmatpush1.bf16.msra.mxu0 0
    %2131 = vmatprep.subr.bf16.mxu0 0
    %2132 = vmatpush1.bf16.msra.mxu0 0
    %2133 = vmatprep.subr.bf16.mxu0 0
    %2134 = vmatpush1.bf16.msra.mxu0 0
    %2135 = vmatprep.subr.bf16.mxu0 0
    %2136 = vmatpush1.bf16.msra.mxu0 0
    %2137 = vmatprep.subr.bf16.mxu0 0
    %2138 = vmatpush1.bf16.msra.mxu0 0
    %2139 = vmatprep.subr.bf16.mxu0 0
    %2140 = vmatpush1.bf16.msra.mxu0 0
    %2141 = vmatprep.subr.bf16.mxu0 0
    %2142 = vmatpush1.bf16.msra.mxu0 0
    %2143 = vmatprep.mubr.bf16.mxu0 0
    %2144 = vmatmul.mubr.bf16.gmra.mrb[0].mxu0 %v2097
    %v2145 = vpop.f32.mrb[0].mxu0
    %v2146 = vadd.f32 0.0, %v2145
    %v2147 = vpop.f32.mrb[0].mxu0
    %v2148 = vadd.f32 0.0, %v2147
    %v2149 = vpop.f32.mrb[0].mxu0
    %v2150 = vadd.f32 0.0, %v2149
    %v2151 = vpop.f32.mrb[0].mxu0
    %v2152 = vadd.f32 0.0, %v2151
    %2153 = vdwg.mxu0
    %2154 = vmatprep.subr.bf16.mxu0 %v1115
    %2155 = vmatpush1.bf16.msra.mxu0 %v1114
    %2156 = vmatprep.subr.bf16.mxu0 %v1119
    %2157 = vmatpush1.bf16.msra.mxu0 %v1118
    %2158 = vmatprep.subr.bf16.mxu0 %v1123
    %2159 = vmatpush1.bf16.msra.mxu0 %v1122
    %2160 = vmatprep.subr.bf16.mxu0 %v1127
    %2161 = vmatpush1.bf16.msra.mxu0 %v1126
    %2162 = vmatprep.subr.bf16.mxu0 %v1131
    %2163 = vmatpush1.bf16.msra.mxu0 %v1130
    %2164 = vmatprep.subr.bf16.mxu0 %v1135
    %2165 = vmatpush1.bf16.msra.mxu0 %v1134
    %2166 = vmatprep.subr.bf16.mxu0 %v1139
    %2167 = vmatpush1.bf16.msra.mxu0 %v1138
    %2168 = vmatprep.subr.bf16.mxu0 %v1143
    %2169 = vmatpush1.bf16.msra.mxu0 %v1142
    %2170 = vmatprep.subr.bf16.mxu0 0
    %2171 = vmatpush1.bf16.msra.mxu0 0
    %2172 = vmatprep.subr.bf16.mxu0 0
    %2173 = vmatpush1.bf16.msra.mxu0 0
    %2174 = vmatprep.subr.bf16.mxu0 0
    %2175 = vmatpush1.bf16.msra.mxu0 0
    %2176 = vmatprep.subr.bf16.mxu0 0
    %2177 = vmatpush1.bf16.msra.mxu0 0
    %2178 = vmatprep.subr.bf16.mxu0 0
    %2179 = vmatpush1.bf16.msra.mxu0 0
    %2180 = vmatprep.subr.bf16.mxu0 0
    %2181 = vmatpush1.bf16.msra.mxu0 0
    %2182 = vmatprep.subr.bf16.mxu0 0
    %2183 = vmatpush1.bf16.msra.mxu0 0
    %2184 = vmatprep.subr.bf16.mxu0 0
    %2185 = vmatpush1.bf16.msra.mxu0 0
    %2186 = vmatprep.mubr.bf16.mxu0 0
    %2187 = vmatmul.mubr.bf16.gmra.mrb[0].mxu0 %v2097
    %v2188 = vpop.f32.mrb[0].mxu0
    %v2189 = vadd.f32 0.0, %v2188
    %v2190 = vpop.f32.mrb[0].mxu0
    %v2191 = vadd.f32 0.0, %v2190
    %v2192 = vpop.f32.mrb[0].mxu0
    %v2193 = vadd.f32 0.0, %v2192
    %v2194 = vpop.f32.mrb[0].mxu0
    %v2195 = vadd.f32 0.0, %v2194
    %2196 = vdwg.mxu0
    %v2197 = vadd.f32 %v2103, %v2146
    %v2198 = vadd.f32 %v2104, %v2148
    %v2199 = vadd.f32 %v2105, %v2189
    %v2200 = vadd.f32 %v2106, %v2191
    %v2201 = vadd.f32 %v2107, %v2150
    %v2202 = vadd.f32 %v2108, %v2152
    %v2203 = vadd.f32 %v2109, %v2193
    %v2204 = vadd.f32 %v2110, %v2195
    %v2205 = vxor.u32 %v2197, 2147483648
    %v2206 = vxor.u32 %v2201, 2147483648
    %v2207 = vmul.f32 %v2205, 1.442695
    %v2208 = vpow.pop %v2207
    %v2209 = vmul.f32 %v2206, 1.442695
    %v2210 = vpow.pop %v2209
    %v2211 = vadd.f32 %v2208, 1.0
    %v2212 = vadd.f32 %v2210, 1.0
    %v2213 = vrcp.pop %v2211
    %v2214 = vmul.f32 1.0, %v2213
    %v2215 = vrcp.pop %v2212
    %v2216 = vmul.f32 1.0, %v2215
    %v2217 = vxor.u32 %v2198, 2147483648
    %v2218 = vxor.u32 %v2202, 2147483648
    %v2219 = vmul.f32 %v2217, 1.442695
    %v2220 = vpow.pop %v2219
    %v2221 = vmul.f32 %v2218, 1.442695
    %v2222 = vpow.pop %v2221
    %v2223 = vadd.f32 %v2220, 1.0
    %v2224 = vadd.f32 %v2222, 1.0
    %v2225 = vrcp.pop %v2223
    %v2226 = vmul.f32 1.0, %v2225
    %v2227 = vrcp.pop %v2224
    %v2228 = vmul.f32 1.0, %v2227
    %v2229 = vtanh.pop %v2199
    %v2230 = vtanh.pop %v2203
    %v2231 = vxor.u32 %v2200, 2147483648
    %v2232 = vxor.u32 %v2204, 2147483648
    %v2233 = vmul.f32 %v2231, 1.442695
    %v2234 = vpow.pop %v2233
    %v2235 = vmul.f32 %v2232, 1.442695
    %v2236 = vpow.pop %v2235
    %v2237 = vadd.f32 %v2234, 1.0
    %v2238 = vadd.f32 %v2236, 1.0
    %v2239 = vrcp.pop %v2237
    %v2240 = vmul.f32 1.0, %v2239
    %v2241 = vrcp.pop %v2238
    %v2242 = vmul.f32 1.0, %v2241
    %v2243 = vmul.f32 %v2226, %v2091
    %v2244 = vmul.f32 %v2228, %v2092
    %v2245 = vmul.f32 %v2214, %v2229
    %v2246 = vmul.f32 %v2216, %v2230
    %v2247 = vadd.f32 %v2243, %v2245
    %v2248 = vadd.f32 %v2244, %v2246
    %v2249 = vtanh.pop %v2247
    %v2250 = vtanh.pop %v2248
    %v2251 = vmul.f32 %v2240, %v2249
    %v2252 = vmul.f32 %v2242, %v2250
    %v2253 = vpack.c.bf16 %v2252, %v2251
    %s2254 = scalar_lea.vmem [#allocation3], 48
    %2255 = vst [vmem:[%s2254] sm:$0xff] %v2253
    %s2256 = smul.u32 14, 4
    %s2257 = smul.addr %s2256, 8
    %s2258 = scalar_lea.vmem [#allocation2], %s2257
    %v2259 = vld [vmem:[%s2258] sm:$0xff]
    %v2260 = vld [vmem:[%s2258 + $0x8] sm:$0xff]
    %v2261 = vld [vmem:[%s2258 + $0x10] sm:$0xff]
    %v2262 = vld [vmem:[%s2258 + $0x18] sm:$0xff]
    %v2263 = vld [vmem:[%s2258 + $0x20] sm:$0xff]
    %v2264 = vld [vmem:[%s2258 + $0x28] sm:$0xff]
    %v2265 = vld [vmem:[%s2258 + $0x30] sm:$0xff]
    %v2266 = vld [vmem:[%s2258 + $0x38] sm:$0xff]
    %2267 = vmatprep.subr.bf16.mxu0 %v1113
    %2268 = vmatpush1.bf16.msra.mxu0 %v1112
    %2269 = vmatprep.subr.bf16.mxu0 %v1117
    %2270 = vmatpush1.bf16.msra.mxu0 %v1116
    %2271 = vmatprep.subr.bf16.mxu0 %v1121
    %2272 = vmatpush1.bf16.msra.mxu0 %v1120
    %2273 = vmatprep.subr.bf16.mxu0 %v1125
    %2274 = vmatpush1.bf16.msra.mxu0 %v1124
    %2275 = vmatprep.subr.bf16.mxu0 %v1129
    %2276 = vmatpush1.bf16.msra.mxu0 %v1128
    %2277 = vmatprep.subr.bf16.mxu0 %v1133
    %2278 = vmatpush1.bf16.msra.mxu0 %v1132
    %2279 = vmatprep.subr.bf16.mxu0 %v1137
    %2280 = vmatpush1.bf16.msra.mxu0 %v1136
    %2281 = vmatprep.subr.bf16.mxu0 %v1141
    %2282 = vmatpush1.bf16.msra.mxu0 %v1140
    %2283 = vmatprep.subr.bf16.mxu0 0
    %2284 = vmatpush1.bf16.msra.mxu0 0
    %2285 = vmatprep.subr.bf16.mxu0 0
    %2286 = vmatpush1.bf16.msra.mxu0 0
    %2287 = vmatprep.subr.bf16.mxu0 0
    %2288 = vmatpush1.bf16.msra.mxu0 0
    %2289 = vmatprep.subr.bf16.mxu0 0
    %2290 = vmatpush1.bf16.msra.mxu0 0
    %2291 = vmatprep.subr.bf16.mxu0 0
    %2292 = vmatpush1.bf16.msra.mxu0 0
    %2293 = vmatprep.subr.bf16.mxu0 0
    %2294 = vmatpush1.bf16.msra.mxu0 0
    %2295 = vmatprep.subr.bf16.mxu0 0
    %2296 = vmatpush1.bf16.msra.mxu0 0
    %2297 = vmatprep.subr.bf16.mxu0 0
    %2298 = vmatpush1.bf16.msra.mxu0 0
    %2299 = vmatprep.mubr.bf16.mxu0 0
    %2300 = vmatmul.mubr.bf16.gmra.mrb[0].mxu0 %v2253
    %v2301 = vpop.f32.mrb[0].mxu0
    %v2302 = vadd.f32 0.0, %v2301
    %v2303 = vpop.f32.mrb[0].mxu0
    %v2304 = vadd.f32 0.0, %v2303
    %v2305 = vpop.f32.mrb[0].mxu0
    %v2306 = vadd.f32 0.0, %v2305
    %v2307 = vpop.f32.mrb[0].mxu0
    %v2308 = vadd.f32 0.0, %v2307
    %2309 = vdwg.mxu0
    %2310 = vmatprep.subr.bf16.mxu0 %v1115
    %2311 = vmatpush1.bf16.msra.mxu0 %v1114
    %2312 = vmatprep.subr.bf16.mxu0 %v1119
    %2313 = vmatpush1.bf16.msra.mxu0 %v1118
    %2314 = vmatprep.subr.bf16.mxu0 %v1123
    %2315 = vmatpush1.bf16.msra.mxu0 %v1122
    %2316 = vmatprep.subr.bf16.mxu0 %v1127
    %2317 = vmatpush1.bf16.msra.mxu0 %v1126
    %2318 = vmatprep.subr.bf16.mxu0 %v1131
    %2319 = vmatpush1.bf16.msra.mxu0 %v1130
    %2320 = vmatprep.subr.bf16.mxu0 %v1135
    %2321 = vmatpush1.bf16.msra.mxu0 %v1134
    %2322 = vmatprep.subr.bf16.mxu0 %v1139
    %2323 = vmatpush1.bf16.msra.mxu0 %v1138
    %2324 = vmatprep.subr.bf16.mxu0 %v1143
    %2325 = vmatpush1.bf16.msra.mxu0 %v1142
    %2326 = vmatprep.subr.bf16.mxu0 0
    %2327 = vmatpush1.bf16.msra.mxu0 0
    %2328 = vmatprep.subr.bf16.mxu0 0
    %2329 = vmatpush1.bf16.msra.mxu0 0
    %2330 = vmatprep.subr.bf16.mxu0 0
    %2331 = vmatpush1.bf16.msra.mxu0 0
    %2332 = vmatprep.subr.bf16.mxu0 0
    %2333 = vmatpush1.bf16.msra.mxu0 0
    %2334 = vmatprep.subr.bf16.mxu0 0
    %2335 = vmatpush1.bf16.msra.mxu0 0
    %2336 = vmatprep.subr.bf16.mxu0 0
    %2337 = vmatpush1.bf16.msra.mxu0 0
    %2338 = vmatprep.subr.bf16.mxu0 0
    %2339 = vmatpush1.bf16.msra.mxu0 0
    %2340 = vmatprep.subr.bf16.mxu0 0
    %2341 = vmatpush1.bf16.msra.mxu0 0
    %2342 = vmatprep.mubr.bf16.mxu0 0
    %2343 = vmatmul.mubr.bf16.gmra.mrb[0].mxu0 %v2253
    %v2344 = vpop.f32.mrb[0].mxu0
    %v2345 = vadd.f32 0.0, %v2344
    %v2346 = vpop.f32.mrb[0].mxu0
    %v2347 = vadd.f32 0.0, %v2346
    %v2348 = vpop.f32.mrb[0].mxu0
    %v2349 = vadd.f32 0.0, %v2348
    %v2350 = vpop.f32.mrb[0].mxu0
    %v2351 = vadd.f32 0.0, %v2350
    %2352 = vdwg.mxu0
    %v2353 = vadd.f32 %v2259, %v2302
    %v2354 = vadd.f32 %v2260, %v2304
    %v2355 = vadd.f32 %v2261, %v2345
    %v2356 = vadd.f32 %v2262, %v2347
    %v2357 = vadd.f32 %v2263, %v2306
    %v2358 = vadd.f32 %v2264, %v2308
    %v2359 = vadd.f32 %v2265, %v2349
    %v2360 = vadd.f32 %v2266, %v2351
    %v2361 = vxor.u32 %v2353, 2147483648
    %v2362 = vxor.u32 %v2357, 2147483648
    %v2363 = vmul.f32 %v2361, 1.442695
    %v2364 = vpow.pop %v2363
    %v2365 = vmul.f32 %v2362, 1.442695
    %v2366 = vpow.pop %v2365
    %v2367 = vadd.f32 %v2364, 1.0
    %v2368 = vadd.f32 %v2366, 1.0
    %v2369 = vrcp.pop %v2367
    %v2370 = vmul.f32 1.0, %v2369
    %v2371 = vrcp.pop %v2368
    %v2372 = vmul.f32 1.0, %v2371
    %v2373 = vxor.u32 %v2354, 2147483648
    %v2374 = vxor.u32 %v2358, 2147483648
    %v2375 = vmul.f32 %v2373, 1.442695
    %v2376 = vpow.pop %v2375
    %v2377 = vmul.f32 %v2374, 1.442695
    %v2378 = vpow.pop %v2377
    %v2379 = vadd.f32 %v2376, 1.0
    %v2380 = vadd.f32 %v2378, 1.0
    %v2381 = vrcp.pop %v2379
    %v2382 = vmul.f32 1.0, %v2381
    %v2383 = vrcp.pop %v2380
    %v2384 = vmul.f32 1.0, %v2383
    %v2385 = vtanh.pop %v2355
    %v2386 = vtanh.pop %v2359
    %v2387 = vxor.u32 %v2356, 2147483648
    %v2388 = vxor.u32 %v2360, 2147483648
    %v2389 = vmul.f32 %v2387, 1.442695
    %v2390 = vpow.pop %v2389
    %v2391 = vmul.f32 %v2388, 1.442695
    %v2392 = vpow.pop %v2391
    %v2393 = vadd.f32 %v2390, 1.0
    %v2394 = vadd.f32 %v2392, 1.0
    %v2395 = vrcp.pop %v2393
    %v2396 = vmul.f32 1.0, %v2395
    %v2397 = vrcp.pop %v2394
    %v2398 = vmul.f32 1.0, %v2397
    %v2399 = vmul.f32 %v2382, %v2247
    %v2400 = vmul.f32 %v2384, %v2248
    %v2401 = vmul.f32 %v2370, %v2385
    %v2402 = vmul.f32 %v2372, %v2386
    %v2403 = vadd.f32 %v2399, %v2401
    %v2404 = vadd.f32 %v2400, %v2402
    %v2405 = vtanh.pop %v2403
    %v2406 = vtanh.pop %v2404
    %v2407 = vmul.f32 %v2396, %v2405
    %v2408 = vmul.f32 %v2398, %v2406
    %v2409 = vpack.c.bf16 %v2408, %v2407
    %s2410 = scalar_lea.vmem [#allocation3], 56
    %2411 = vst [vmem:[%s2410] sm:$0xff] %v2409
    %s2412 = smul.u32 16, 4
    %s2413 = smul.addr %s2412, 8
    %s2414 = scalar_lea.vmem [#allocation2], %s2413
    %v2415 = vld [vmem:[%s2414] sm:$0xff]
    %v2416 = vld [vmem:[%s2414 + $0x8] sm:$0xff]
    %v2417 = vld [vmem:[%s2414 + $0x10] sm:$0xff]
    %v2418 = vld [vmem:[%s2414 + $0x18] sm:$0xff]
    %v2419 = vld [vmem:[%s2414 + $0x20] sm:$0xff]
    %v2420 = vld [vmem:[%s2414 + $0x28] sm:$0xff]
    %v2421 = vld [vmem:[%s2414 + $0x30] sm:$0xff]
    %v2422 = vld [vmem:[%s2414 + $0x38] sm:$0xff]
    %2423 = vmatprep.subr.bf16.mxu0 %v1113
    %2424 = vmatpush1.bf16.msra.mxu0 %v1112
    %2425 = vmatprep.subr.bf16.mxu0 %v1117
    %2426 = vmatpush1.bf16.msra.mxu0 %v1116
    %2427 = vmatprep.subr.bf16.mxu0 %v1121
    %2428 = vmatpush1.bf16.msra.mxu0 %v1120
    %2429 = vmatprep.subr.bf16.mxu0 %v1125
    %2430 = vmatpush1.bf16.msra.mxu0 %v1124
    %2431 = vmatprep.subr.bf16.mxu0 %v1129
    %2432 = vmatpush1.bf16.msra.mxu0 %v1128
    %2433 = vmatprep.subr.bf16.mxu0 %v1133
    %2434 = vmatpush1.bf16.msra.mxu0 %v1132
    %2435 = vmatprep.subr.bf16.mxu0 %v1137
    %2436 = vmatpush1.bf16.msra.mxu0 %v1136
    %2437 = vmatprep.subr.bf16.mxu0 %v1141
    %2438 = vmatpush1.bf16.msra.mxu0 %v1140
    %2439 = vmatprep.subr.bf16.mxu0 0
    %2440 = vmatpush1.bf16.msra.mxu0 0
    %2441 = vmatprep.subr.bf16.mxu0 0
    %2442 = vmatpush1.bf16.msra.mxu0 0
    %2443 = vmatprep.subr.bf16.mxu0 0
    %2444 = vmatpush1.bf16.msra.mxu0 0
    %2445 = vmatprep.subr.bf16.mxu0 0
    %2446 = vmatpush1.bf16.msra.mxu0 0
    %2447 = vmatprep.subr.bf16.mxu0 0
    %2448 = vmatpush1.bf16.msra.mxu0 0
    %2449 = vmatprep.subr.bf16.mxu0 0
    %2450 = vmatpush1.bf16.msra.mxu0 0
    %2451 = vmatprep.subr.bf16.mxu0 0
    %2452 = vmatpush1.bf16.msra.mxu0 0
    %2453 = vmatprep.subr.bf16.mxu0 0
    %2454 = vmatpush1.bf16.msra.mxu0 0
    %2455 = vmatprep.mubr.bf16.mxu0 0
    %2456 = vmatmul.mubr.bf16.gmra.mrb[0].mxu0 %v2409
    %v2457 = vpop.f32.mrb[0].mxu0
    %v2458 = vadd.f32 0.0, %v2457
    %v2459 = vpop.f32.mrb[0].mxu0
    %v2460 = vadd.f32 0.0, %v2459
    %v2461 = vpop.f32.mrb[0].mxu0
    %v2462 = vadd.f32 0.0, %v2461
    %v2463 = vpop.f32.mrb[0].mxu0
    %v2464 = vadd.f32 0.0, %v2463
    %2465 = vdwg.mxu0
    %2466 = vmatprep.subr.bf16.mxu0 %v1115
    %2467 = vmatpush1.bf16.msra.mxu0 %v1114
    %2468 = vmatprep.subr.bf16.mxu0 %v1119
    %2469 = vmatpush1.bf16.msra.mxu0 %v1118
    %2470 = vmatprep.subr.bf16.mxu0 %v1123
    %2471 = vmatpush1.bf16.msra.mxu0 %v1122
    %2472 = vmatprep.subr.bf16.mxu0 %v1127
    %2473 = vmatpush1.bf16.msra.mxu0 %v1126
    %2474 = vmatprep.subr.bf16.mxu0 %v1131
    %2475 = vmatpush1.bf16.msra.mxu0 %v1130
    %2476 = vmatprep.subr.bf16.mxu0 %v1135
    %2477 = vmatpush1.bf16.msra.mxu0 %v1134
    %2478 = vmatprep.subr.bf16.mxu0 %v1139
    %2479 = vmatpush1.bf16.msra.mxu0 %v1138
    %2480 = vmatprep.subr.bf16.mxu0 %v1143
    %2481 = vmatpush1.bf16.msra.mxu0 %v1142
    %2482 = vmatprep.subr.bf16.mxu0 0
    %2483 = vmatpush1.bf16.msra.mxu0 0
    %2484 = vmatprep.subr.bf16.mxu0 0
    %2485 = vmatpush1.bf16.msra.mxu0 0
    %2486 = vmatprep.subr.bf16.mxu0 0
    %2487 = vmatpush1.bf16.msra.mxu0 0
    %2488 = vmatprep.subr.bf16.mxu0 0
    %2489 = vmatpush1.bf16.msra.mxu0 0
    %2490 = vmatprep.subr.bf16.mxu0 0
    %2491 = vmatpush1.bf16.msra.mxu0 0
    %2492 = vmatprep.subr.bf16.mxu0 0
    %2493 = vmatpush1.bf16.msra.mxu0 0
    %2494 = vmatprep.subr.bf16.mxu0 0
    %2495 = vmatpush1.bf16.msra.mxu0 0
    %2496 = vmatprep.subr.bf16.mxu0 0
    %2497 = vmatpush1.bf16.msra.mxu0 0
    %2498 = vmatprep.mubr.bf16.mxu0 0
    %2499 = vmatmul.mubr.bf16.gmra.mrb[0].mxu0 %v2409
    %v2500 = vpop.f32.mrb[0].mxu0
    %v2501 = vadd.f32 0.0, %v2500
    %v2502 = vpop.f32.mrb[0].mxu0
    %v2503 = vadd.f32 0.0, %v2502
    %v2504 = vpop.f32.mrb[0].mxu0
    %v2505 = vadd.f32 0.0, %v2504
    %v2506 = vpop.f32.mrb[0].mxu0
    %v2507 = vadd.f32 0.0, %v2506
    %2508 = vdwg.mxu0
    %v2509 = vadd.f32 %v2415, %v2458
    %v2510 = vadd.f32 %v2416, %v2460
    %v2511 = vadd.f32 %v2417, %v2501
    %v2512 = vadd.f32 %v2418, %v2503
    %v2513 = vadd.f32 %v2419, %v2462
    %v2514 = vadd.f32 %v2420, %v2464
    %v2515 = vadd.f32 %v2421, %v2505
    %v2516 = vadd.f32 %v2422, %v2507
    %v2517 = vxor.u32 %v2509, 2147483648
    %v2518 = vxor.u32 %v2513, 2147483648
    %v2519 = vmul.f32 %v2517, 1.442695
    %v2520 = vpow.pop %v2519
    %v2521 = vmul.f32 %v2518, 1.442695
    %v2522 = vpow.pop %v2521
    %v2523 = vadd.f32 %v2520, 1.0
    %v2524 = vadd.f32 %v2522, 1.0
    %v2525 = vrcp.pop %v2523
    %v2526 = vmul.f32 1.0, %v2525
    %v2527 = vrcp.pop %v2524
    %v2528 = vmul.f32 1.0, %v2527
    %v2529 = vxor.u32 %v2510, 2147483648
    %v2530 = vxor.u32 %v2514, 2147483648
    %v2531 = vmul.f32 %v2529, 1.442695
    %v2532 = vpow.pop %v2531
    %v2533 = vmul.f32 %v2530, 1.442695
    %v2534 = vpow.pop %v2533
    %v2535 = vadd.f32 %v2532, 1.0
    %v2536 = vadd.f32 %v2534, 1.0
    %v2537 = vrcp.pop %v2535
    %v2538 = vmul.f32 1.0, %v2537
    %v2539 = vrcp.pop %v2536
    %v2540 = vmul.f32 1.0, %v2539
    %v2541 = vtanh.pop %v2511
    %v2542 = vtanh.pop %v2515
    %v2543 = vxor.u32 %v2512, 2147483648
    %v2544 = vxor.u32 %v2516, 2147483648
    %v2545 = vmul.f32 %v2543, 1.442695
    %v2546 = vpow.pop %v2545
    %v2547 = vmul.f32 %v2544, 1.442695
    %v2548 = vpow.pop %v2547
    %v2549 = vadd.f32 %v2546, 1.0
    %v2550 = vadd.f32 %v2548, 1.0
    %v2551 = vrcp.pop %v2549
    %v2552 = vmul.f32 1.0, %v2551
    %v2553 = vrcp.pop %v2550
    %v2554 = vmul.f32 1.0, %v2553
    %v2555 = vmul.f32 %v2538, %v2403
    %v2556 = vmul.f32 %v2540, %v2404
    %v2557 = vmul.f32 %v2526, %v2541
    %v2558 = vmul.f32 %v2528, %v2542
    %v2559 = vadd.f32 %v2555, %v2557
    %v2560 = vadd.f32 %v2556, %v2558
    %v2561 = vtanh.pop %v2559
    %v2562 = vtanh.pop %v2560
    %v2563 = vmul.f32 %v2552, %v2561
    %v2564 = vmul.f32 %v2554, %v2562
    %v2565 = vpack.c.bf16 %v2564, %v2563
    %s2566 = scalar_lea.vmem [#allocation3], 64
    %2567 = vst [vmem:[%s2566] sm:$0xff] %v2565
    %v2568 = vld [vmem:[%s11] sm:$0xff]
    %v2569 = vld [vmem:[%s11 + $0x8] sm:$0xff]
    %v2570 = vld [vmem:[%s11 + $0x10] sm:$0xff]
    %v2571 = vld [vmem:[%s11 + $0x18] sm:$0xff]
    %v2572 = vld [vmem:[%s11 + $0x20] sm:$0xff]
    %v2573 = vld [vmem:[%s11 + $0x28] sm:$0xff]
    %v2574 = vld [vmem:[%s11 + $0x30] sm:$0xff]
    %v2575 = vld [vmem:[%s11 + $0x38] sm:$0xff]
    %v2576 = vld [vmem:[%s11 + $0x40] sm:$0xff]
    %v2577 = vld [vmem:[%s11 + $0x48] sm:$0xff]
    %v2578 = vld [vmem:[%s11 + $0x50] sm:$0xff]
    %v2579 = vld [vmem:[%s11 + $0x58] sm:$0xff]
    %v2580 = vld [vmem:[%s11 + $0x60] sm:$0xff]
    %v2581 = vld [vmem:[%s11 + $0x68] sm:$0xff]
    %v2582 = vld [vmem:[%s11 + $0x70] sm:$0xff]
    %v2583 = vld [vmem:[%s11 + $0x78] sm:$0xff]
    %v2584 = vld [vmem:[%s11 + $0x80] sm:$0xff]
    %v2585 = vld [vmem:[%s11 + $0x88] sm:$0xff]
    %v2586 = vld [vmem:[%s11 + $0x90] sm:$0xff]
    %v2587 = vld [vmem:[%s11 + $0x98] sm:$0xff]
    %v2588 = vld [vmem:[%s11 + $0xa0] sm:$0xff]
    %v2589 = vld [vmem:[%s11 + $0xa8] sm:$0xff]
    %v2590 = vld [vmem:[%s11 + $0xb0] sm:$0xff]
    %v2591 = vld [vmem:[%s11 + $0xb8] sm:$0xff]
    %v2592 = vld [vmem:[%s11 + $0xc0] sm:$0xff]
    %v2593 = vld [vmem:[%s11 + $0xc8] sm:$0xff]
    %v2594 = vld [vmem:[%s11 + $0xd0] sm:$0xff]
    %v2595 = vld [vmem:[%s11 + $0xd8] sm:$0xff]
    %v2596 = vld [vmem:[%s11 + $0xe0] sm:$0xff]
    %v2597 = vld [vmem:[%s11 + $0xe8] sm:$0xff]
    %v2598 = vld [vmem:[%s11 + $0xf0] sm:$0xff]
    %v2599 = vld [vmem:[%s11 + $0xf8] sm:$0xff]
    %v2600 = vld [vmem:[%s13] sm:$0xf]
    %v2601 = vld [vmem:[#allocation3] sm:$0xff]
    %v2602 = vld [vmem:[#allocation3 + $0x8] sm:$0xff]
    %v2603 = vld [vmem:[#allocation3 + $0x10] sm:$0xff]
    %v2604 = vld [vmem:[#allocation3 + $0x18] sm:$0xff]
    %v2605 = vld [vmem:[#allocation3 + $0x20] sm:$0xff]
    %v2606 = vld [vmem:[#allocation3 + $0x28] sm:$0xff]
    %v2607 = vld [vmem:[#allocation3 + $0x30] sm:$0xff]
    %v2608 = vld [vmem:[#allocation3 + $0x38] sm:$0xff]
    %v2609 = vld [vmem:[#allocation3 + $0x40] sm:$0xff]
    %v2611 = vlaneseq
    %v2612 = vshrl.u32 %v2611, 7
    %v2613 = vsub.s32 0, %v2612
    %v2614 = vrot.slane %v2600, %v2613
    %v2615 = vlaneseq
    %v2616 = vshrl.u32 %v2615, 7
    %v2617 = vsub.s32 1, %v2616
    %v2618 = vrot.slane %v2600, %v2617
    %v2619 = vlaneseq
    %v2620 = vshrl.u32 %v2619, 7
    %v2621 = vsub.s32 2, %v2620
    %v2622 = vrot.slane %v2600, %v2621
    %v2623 = vlaneseq
    %v2624 = vshrl.u32 %v2623, 7
    %v2625 = vsub.s32 3, %v2624
    %v2626 = vrot.slane %v2600, %v2625
    %v2663 = vunpack.c.l.b16 %v2568
    %v2664 = vunpack.c.h.b16 %v2568
    %v2665 = vunpack.c.l.b16 %v2569
    %v2666 = vunpack.c.h.b16 %v2569
    %v2667 = vunpack.c.l.b16 %v2570
    %v2668 = vunpack.c.h.b16 %v2570
    %v2669 = vunpack.c.l.b16 %v2571
    %v2670 = vunpack.c.h.b16 %v2571
    %v2671 = vunpack.c.l.b16 %v2572
    %v2672 = vunpack.c.h.b16 %v2572
    %v2673 = vunpack.c.l.b16 %v2573
    %v2674 = vunpack.c.h.b16 %v2573
    %v2675 = vunpack.c.l.b16 %v2574
    %v2676 = vunpack.c.h.b16 %v2574
    %v2677 = vunpack.c.l.b16 %v2575
    %v2678 = vunpack.c.h.b16 %v2575
    %v2679 = vunpack.c.l.b16 %v2576
    %v2680 = vunpack.c.h.b16 %v2576
    %v2681 = vunpack.c.l.b16 %v2577
    %v2682 = vunpack.c.h.b16 %v2577
    %v2683 = vunpack.c.l.b16 %v2578
    %v2684 = vunpack.c.h.b16 %v2578
    %v2685 = vunpack.c.l.b16 %v2579
    %v2686 = vunpack.c.h.b16 %v2579
    %v2687 = vunpack.c.l.b16 %v2580
    %v2688 = vunpack.c.h.b16 %v2580
    %v2689 = vunpack.c.l.b16 %v2581
    %v2690 = vunpack.c.h.b16 %v2581
    %v2691 = vunpack.c.l.b16 %v2582
    %v2692 = vunpack.c.h.b16 %v2582
    %v2693 = vunpack.c.l.b16 %v2583
    %v2694 = vunpack.c.h.b16 %v2583
    %v2695 = vunpack.c.l.b16 %v2584
    %v2696 = vunpack.c.h.b16 %v2584
    %v2697 = vunpack.c.l.b16 %v2585
    %v2698 = vunpack.c.h.b16 %v2585
    %v2699 = vunpack.c.l.b16 %v2586
    %v2700 = vunpack.c.h.b16 %v2586
    %v2701 = vunpack.c.l.b16 %v2587
    %v2702 = vunpack.c.h.b16 %v2587
    %v2703 = vunpack.c.l.b16 %v2588
    %v2704 = vunpack.c.h.b16 %v2588
    %v2705 = vunpack.c.l.b16 %v2589
    %v2706 = vunpack.c.h.b16 %v2589
    %v2707 = vunpack.c.l.b16 %v2590
    %v2708 = vunpack.c.h.b16 %v2590
    %v2709 = vunpack.c.l.b16 %v2591
    %v2710 = vunpack.c.h.b16 %v2591
    %v2711 = vunpack.c.l.b16 %v2592
    %v2712 = vunpack.c.h.b16 %v2592
    %v2713 = vunpack.c.l.b16 %v2593
    %v2714 = vunpack.c.h.b16 %v2593
    %v2715 = vunpack.c.l.b16 %v2594
    %v2716 = vunpack.c.h.b16 %v2594
    %v2717 = vunpack.c.l.b16 %v2595
    %v2718 = vunpack.c.h.b16 %v2595
    %v2719 = vunpack.c.l.b16 %v2596
    %v2720 = vunpack.c.h.b16 %v2596
    %v2721 = vunpack.c.l.b16 %v2597
    %v2722 = vunpack.c.h.b16 %v2597
    %v2723 = vunpack.c.l.b16 %v2598
    %v2724 = vunpack.c.h.b16 %v2598
    %v2725 = vunpack.c.l.b16 %v2599
    %v2726 = vunpack.c.h.b16 %v2599
    %v2727 = vpack.c.b16 %v2667, %v2663
    %v2728 = vpack.c.b16 %v2668, %v2664
    %v2729 = vpack.c.b16 %v2669, %v2665
    %v2730 = vpack.c.b16 %v2670, %v2666
    %v2731 = vpack.c.b16 %v2675, %v2671
    %v2732 = vpack.c.b16 %v2676, %v2672
    %v2733 = vpack.c.b16 %v2677, %v2673
    %v2734 = vpack.c.b16 %v2678, %v2674
    %v2735 = vpack.c.b16 %v2683, %v2679
    %v2736 = vpack.c.b16 %v2684, %v2680
    %v2737 = vpack.c.b16 %v2685, %v2681
    %v2738 = vpack.c.b16 %v2686, %v2682
    %v2739 = vpack.c.b16 %v2691, %v2687
    %v2740 = vpack.c.b16 %v2692, %v2688
    %v2741 = vpack.c.b16 %v2693, %v2689
    %v2742 = vpack.c.b16 %v2694, %v2690
    %v2743 = vpack.c.b16 %v2699, %v2695
    %v2744 = vpack.c.b16 %v2700, %v2696
    %v2745 = vpack.c.b16 %v2701, %v2697
    %v2746 = vpack.c.b16 %v2702, %v2698
    %v2747 = vpack.c.b16 %v2707, %v2703
    %v2748 = vpack.c.b16 %v2708, %v2704
    %v2749 = vpack.c.b16 %v2709, %v2705
    %v2750 = vpack.c.b16 %v2710, %v2706
    %v2751 = vpack.c.b16 %v2715, %v2711
    %v2752 = vpack.c.b16 %v2716, %v2712
    %v2753 = vpack.c.b16 %v2717, %v2713
    %v2754 = vpack.c.b16 %v2718, %v2714
    %v2755 = vpack.c.b16 %v2723, %v2719
    %v2756 = vpack.c.b16 %v2724, %v2720
    %v2757 = vpack.c.b16 %v2725, %v2721
    %v2758 = vpack.c.b16 %v2726, %v2722
    %2791 = vmatprep.subr.bf16.mxu0 %v2728
    %2792 = vmatpush1.bf16.msra.mxu0 %v2727
    %2793 = vmatprep.subr.bf16.mxu0 %v2732
    %2794 = vmatpush1.bf16.msra.mxu0 %v2731
    %2795 = vmatprep.subr.bf16.mxu0 %v2736
    %2796 = vmatpush1.bf16.msra.mxu0 %v2735
    %2797 = vmatprep.subr.bf16.mxu0 %v2740
    %2798 = vmatpush1.bf16.msra.mxu0 %v2739
    %2799 = vmatprep.subr.bf16.mxu0 %v2744
    %2800 = vmatpush1.bf16.msra.mxu0 %v2743
    %2801 = vmatprep.subr.bf16.mxu0 %v2748
    %2802 = vmatpush1.bf16.msra.mxu0 %v2747
    %2803 = vmatprep.subr.bf16.mxu0 %v2752
    %2804 = vmatpush1.bf16.msra.mxu0 %v2751
    %2805 = vmatprep.subr.bf16.mxu0 %v2756
    %2806 = vmatpush1.bf16.msra.mxu0 %v2755
    %2807 = vmatprep.subr.bf16.mxu0 0
    %2808 = vmatpush1.bf16.msra.mxu0 0
    %2809 = vmatprep.subr.bf16.mxu0 0
    %2810 = vmatpush1.bf16.msra.mxu0 0
    %2811 = vmatprep.subr.bf16.mxu0 0
    %2812 = vmatpush1.bf16.msra.mxu0 0
    %2813 = vmatprep.subr.bf16.mxu0 0
    %2814 = vmatpush1.bf16.msra.mxu0 0
    %2815 = vmatprep.subr.bf16.mxu0 0
    %2816 = vmatpush1.bf16.msra.mxu0 0
    %2817 = vmatprep.subr.bf16.mxu0 0
    %2818 = vmatpush1.bf16.msra.mxu0 0
    %2819 = vmatprep.subr.bf16.mxu0 0
    %2820 = vmatpush1.bf16.msra.mxu0 0
    %2821 = vmatprep.subr.bf16.mxu0 0
    %2822 = vmatpush1.bf16.msra.mxu0 0
    %2823 = vmatprep.mubr.bf16.mxu0 0
    %2824 = vmatmul.mubr.bf16.gmra.mrb[0].mxu0 %v2601
    %v2825 = vpop.f32.mrb[0].mxu0
    %v2826 = vadd.f32 %v2614, %v2825
    %v2827 = vpop.f32.mrb[0].mxu0
    %v2828 = vadd.f32 %v2618, %v2827
    %v2829 = vpop.f32.mrb[0].mxu0
    %v2830 = vadd.f32 %v2614, %v2829
    %v2831 = vpop.f32.mrb[0].mxu0
    %v2832 = vadd.f32 %v2618, %v2831
    %2833 = vmatprep.mubr.bf16.mxu0 0
    %2834 = vmatmul.mubr.bf16.gmra.mrb[0].mxu0 %v2602
    %v2835 = vpop.f32.mrb[0].mxu0
    %v2836 = vadd.f32 %v2614, %v2835
    %v2837 = vpop.f32.mrb[0].mxu0
    %v2838 = vadd.f32 %v2618, %v2837
    %v2839 = vpop.f32.mrb[0].mxu0
    %v2840 = vadd.f32 %v2614, %v2839
    %v2841 = vpop.f32.mrb[0].mxu0
    %v2842 = vadd.f32 %v2618, %v2841
    %2843 = vmatprep.mubr.bf16.mxu0 0
    %2844 = vmatmul.mubr.bf16.gmra.mrb[0].mxu0 %v2603
    %v2845 = vpop.f32.mrb[0].mxu0
    %v2846 = vadd.f32 %v2614, %v2845
    %v2847 = vpop.f32.mrb[0].mxu0
    %v2848 = vadd.f32 %v2618, %v2847
    %v2849 = vpop.f32.mrb[0].mxu0
    %v2850 = vadd.f32 %v2614, %v2849
    %v2851 = vpop.f32.mrb[0].mxu0
    %v2852 = vadd.f32 %v2618, %v2851
    %2853 = vmatprep.mubr.bf16.mxu0 0
    %2854 = vmatmul.mubr.bf16.gmra.mrb[0].mxu0 %v2604
    %v2855 = vpop.f32.mrb[0].mxu0
    %v2856 = vadd.f32 %v2614, %v2855
    %v2857 = vpop.f32.mrb[0].mxu0
    %v2858 = vadd.f32 %v2618, %v2857
    %v2859 = vpop.f32.mrb[0].mxu0
    %v2860 = vadd.f32 %v2614, %v2859
    %v2861 = vpop.f32.mrb[0].mxu0
    %v2862 = vadd.f32 %v2618, %v2861
    %2863 = vmatprep.mubr.bf16.mxu0 0
    %2864 = vmatmul.mubr.bf16.gmra.mrb[0].mxu0 %v2605
    %v2865 = vpop.f32.mrb[0].mxu0
    %v2866 = vadd.f32 %v2614, %v2865
    %v2867 = vpop.f32.mrb[0].mxu0
    %v2868 = vadd.f32 %v2618, %v2867
    %v2869 = vpop.f32.mrb[0].mxu0
    %v2870 = vadd.f32 %v2614, %v2869
    %v2871 = vpop.f32.mrb[0].mxu0
    %v2872 = vadd.f32 %v2618, %v2871
    %2873 = vmatprep.mubr.bf16.mxu0 0
    %2874 = vmatmul.mubr.bf16.gmra.mrb[0].mxu0 %v2606
    %v2875 = vpop.f32.mrb[0].mxu0
    %v2876 = vadd.f32 %v2614, %v2875
    %v2877 = vpop.f32.mrb[0].mxu0
    %v2878 = vadd.f32 %v2618, %v2877
    %v2879 = vpop.f32.mrb[0].mxu0
    %v2880 = vadd.f32 %v2614, %v2879
    %v2881 = vpop.f32.mrb[0].mxu0
    %v2882 = vadd.f32 %v2618, %v2881
    %2883 = vmatprep.mubr.bf16.mxu0 0
    %2884 = vmatmul.mubr.bf16.gmra.mrb[0].mxu0 %v2607
    %v2885 = vpop.f32.mrb[0].mxu0
    %v2886 = vadd.f32 %v2614, %v2885
    %v2887 = vpop.f32.mrb[0].mxu0
    %v2888 = vadd.f32 %v2618, %v2887
    %v2889 = vpop.f32.mrb[0].mxu0
    %v2890 = vadd.f32 %v2614, %v2889
    %v2891 = vpop.f32.mrb[0].mxu0
    %v2892 = vadd.f32 %v2618, %v2891
    %2893 = vmatprep.mubr.bf16.mxu0 0
    %2894 = vmatmul.mubr.bf16.gmra.mrb[0].mxu0 %v2608
    %v2895 = vpop.f32.mrb[0].mxu0
    %v2896 = vadd.f32 %v2614, %v2895
    %v2897 = vpop.f32.mrb[0].mxu0
    %v2898 = vadd.f32 %v2618, %v2897
    %v2899 = vpop.f32.mrb[0].mxu0
    %v2900 = vadd.f32 %v2614, %v2899
    %v2901 = vpop.f32.mrb[0].mxu0
    %v2902 = vadd.f32 %v2618, %v2901
    %2903 = vmatprep.mubr.bf16.mxu0 0
    %2904 = vmatmul.mubr.bf16.gmra.mrb[0].mxu0 %v2609
    %v2905 = vpop.f32.mrb[0].mxu0
    %v2906 = vadd.f32 %v2614, %v2905
    %v2907 = vpop.f32.mrb[0].mxu0
    %v2908 = vadd.f32 %v2618, %v2907
    %v2909 = vpop.f32.mrb[0].mxu0
    %v2910 = vadd.f32 %v2614, %v2909
    %v2911 = vpop.f32.mrb[0].mxu0
    %v2912 = vadd.f32 %v2618, %v2911
    %2913 = vdwg.mxu0
    %2914 = vmatprep.subr.bf16.mxu0 %v2730
    %2915 = vmatpush1.bf16.msra.mxu0 %v2729
    %2916 = vmatprep.subr.bf16.mxu0 %v2734
    %2917 = vmatpush1.bf16.msra.mxu0 %v2733
    %2918 = vmatprep.subr.bf16.mxu0 %v2738
    %2919 = vmatpush1.bf16.msra.mxu0 %v2737
    %2920 = vmatprep.subr.bf16.mxu0 %v2742
    %2921 = vmatpush1.bf16.msra.mxu0 %v2741
    %2922 = vmatprep.subr.bf16.mxu0 %v2746
    %2923 = vmatpush1.bf16.msra.mxu0 %v2745
    %2924 = vmatprep.subr.bf16.mxu0 %v2750
    %2925 = vmatpush1.bf16.msra.mxu0 %v2749
    %2926 = vmatprep.subr.bf16.mxu0 %v2754
    %2927 = vmatpush1.bf16.msra.mxu0 %v2753
    %2928 = vmatprep.subr.bf16.mxu0 %v2758
    %2929 = vmatpush1.bf16.msra.mxu0 %v2757
    %2930 = vmatprep.subr.bf16.mxu0 0
    %2931 = vmatpush1.bf16.msra.mxu0 0
    %2932 = vmatprep.subr.bf16.mxu0 0
    %2933 = vmatpush1.bf16.msra.mxu0 0
    %2934 = vmatprep.subr.bf16.mxu0 0
    %2935 = vmatpush1.bf16.msra.mxu0 0
    %2936 = vmatprep.subr.bf16.mxu0 0
    %2937 = vmatpush1.bf16.msra.mxu0 0
    %2938 = vmatprep.subr.bf16.mxu0 0
    %2939 = vmatpush1.bf16.msra.mxu0 0
    %2940 = vmatprep.subr.bf16.mxu0 0
    %2941 = vmatpush1.bf16.msra.mxu0 0
    %2942 = vmatprep.subr.bf16.mxu0 0
    %2943 = vmatpush1.bf16.msra.mxu0 0
    %2944 = vmatprep.subr.bf16.mxu0 0
    %2945 = vmatpush1.bf16.msra.mxu0 0
    %2946 = vmatprep.mubr.bf16.mxu0 0
    %2947 = vmatmul.mubr.bf16.gmra.mrb[0].mxu0 %v2601
    %v2948 = vpop.f32.mrb[0].mxu0
    %v2949 = vadd.f32 %v2622, %v2948
    %v2950 = vpop.f32.mrb[0].mxu0
    %v2951 = vadd.f32 %v2626, %v2950
    %v2952 = vpop.f32.mrb[0].mxu0
    %v2953 = vadd.f32 %v2622, %v2952
    %v2954 = vpop.f32.mrb[0].mxu0
    %v2955 = vadd.f32 %v2626, %v2954
    %2956 = vmatprep.mubr.bf16.mxu0 0
    %2957 = vmatmul.mubr.bf16.gmra.mrb[0].mxu0 %v2602
    %v2958 = vpop.f32.mrb[0].mxu0
    %v2959 = vadd.f32 %v2622, %v2958
    %v2960 = vpop.f32.mrb[0].mxu0
    %v2961 = vadd.f32 %v2626, %v2960
    %v2962 = vpop.f32.mrb[0].mxu0
    %v2963 = vadd.f32 %v2622, %v2962
    %v2964 = vpop.f32.mrb[0].mxu0
    %v2965 = vadd.f32 %v2626, %v2964
    %2966 = vmatprep.mubr.bf16.mxu0 0
    %2967 = vmatmul.mubr.bf16.gmra.mrb[0].mxu0 %v2603
    %v2968 = vpop.f32.mrb[0].mxu0
    %v2969 = vadd.f32 %v2622, %v2968
    %v2970 = vpop.f32.mrb[0].mxu0
    %v2971 = vadd.f32 %v2626, %v2970
    %v2972 = vpop.f32.mrb[0].mxu0
    %v2973 = vadd.f32 %v2622, %v2972
    %v2974 = vpop.f32.mrb[0].mxu0
    %v2975 = vadd.f32 %v2626, %v2974
    %2976 = vmatprep.mubr.bf16.mxu0 0
    %2977 = vmatmul.mubr.bf16.gmra.mrb[0].mxu0 %v2604
    %v2978 = vpop.f32.mrb[0].mxu0
    %v2979 = vadd.f32 %v2622, %v2978
    %v2980 = vpop.f32.mrb[0].mxu0
    %v2981 = vadd.f32 %v2626, %v2980
    %v2982 = vpop.f32.mrb[0].mxu0
    %v2983 = vadd.f32 %v2622, %v2982
    %v2984 = vpop.f32.mrb[0].mxu0
    %v2985 = vadd.f32 %v2626, %v2984
    %2986 = vmatprep.mubr.bf16.mxu0 0
    %2987 = vmatmul.mubr.bf16.gmra.mrb[0].mxu0 %v2605
    %v2988 = vpop.f32.mrb[0].mxu0
    %v2989 = vadd.f32 %v2622, %v2988
    %v2990 = vpop.f32.mrb[0].mxu0
    %v2991 = vadd.f32 %v2626, %v2990
    %v2992 = vpop.f32.mrb[0].mxu0
    %v2993 = vadd.f32 %v2622, %v2992
    %v2994 = vpop.f32.mrb[0].mxu0
    %v2995 = vadd.f32 %v2626, %v2994
    %2996 = vmatprep.mubr.bf16.mxu0 0
    %2997 = vmatmul.mubr.bf16.gmra.mrb[0].mxu0 %v2606
    %v2998 = vpop.f32.mrb[0].mxu0
    %v2999 = vadd.f32 %v2622, %v2998
    %v3000 = vpop.f32.mrb[0].mxu0
    %v3001 = vadd.f32 %v2626, %v3000
    %v3002 = vpop.f32.mrb[0].mxu0
    %v3003 = vadd.f32 %v2622, %v3002
    %v3004 = vpop.f32.mrb[0].mxu0
    %v3005 = vadd.f32 %v2626, %v3004
    %3006 = vmatprep.mubr.bf16.mxu0 0
    %3007 = vmatmul.mubr.bf16.gmra.mrb[0].mxu0 %v2607
    %v3008 = vpop.f32.mrb[0].mxu0
    %v3009 = vadd.f32 %v2622, %v3008
    %v3010 = vpop.f32.mrb[0].mxu0
    %v3011 = vadd.f32 %v2626, %v3010
    %v3012 = vpop.f32.mrb[0].mxu0
    %v3013 = vadd.f32 %v2622, %v3012
    %v3014 = vpop.f32.mrb[0].mxu0
    %v3015 = vadd.f32 %v2626, %v3014
    %3016 = vmatprep.mubr.bf16.mxu0 0
    %3017 = vmatmul.mubr.bf16.gmra.mrb[0].mxu0 %v2608
    %v3018 = vpop.f32.mrb[0].mxu0
    %v3019 = vadd.f32 %v2622, %v3018
    %v3020 = vpop.f32.mrb[0].mxu0
    %v3021 = vadd.f32 %v2626, %v3020
    %v3022 = vpop.f32.mrb[0].mxu0
    %v3023 = vadd.f32 %v2622, %v3022
    %v3024 = vpop.f32.mrb[0].mxu0
    %v3025 = vadd.f32 %v2626, %v3024
    %3026 = vmatprep.mubr.bf16.mxu0 0
    %3027 = vmatmul.mubr.bf16.gmra.mrb[0].mxu0 %v2609
    %v3028 = vpop.f32.mrb[0].mxu0
    %v3029 = vadd.f32 %v2622, %v3028
    %v3030 = vpop.f32.mrb[0].mxu0
    %v3031 = vadd.f32 %v2626, %v3030
    %v3032 = vpop.f32.mrb[0].mxu0
    %v3033 = vadd.f32 %v2622, %v3032
    %v3034 = vpop.f32.mrb[0].mxu0
    %v3035 = vadd.f32 %v2626, %v3034
    %3036 = vdwg.mxu0
    %3037 = vst [vmem:[#allocation2] sm:$0xff] %v2826
    %3038 = vst [vmem:[#allocation2 + $0x8] sm:$0xff] %v2828
    %3039 = vst [vmem:[#allocation2 + $0x10] sm:$0xff] %v2949
    %3040 = vst [vmem:[#allocation2 + $0x18] sm:$0xff] %v2951
    %3041 = vst [vmem:[#allocation2 + $0x20] sm:$0xff] %v2830
    %3042 = vst [vmem:[#allocation2 + $0x28] sm:$0xff] %v2832
    %3043 = vst [vmem:[#allocation2 + $0x30] sm:$0xff] %v2953
    %3044 = vst [vmem:[#allocation2 + $0x38] sm:$0xff] %v2955
    %3045 = vst [vmem:[#allocation2 + $0x40] sm:$0xff] %v2836
    %3046 = vst [vmem:[#allocation2 + $0x48] sm:$0xff] %v2838
    %3047 = vst [vmem:[#allocation2 + $0x50] sm:$0xff] %v2959
    %3048 = vst [vmem:[#allocation2 + $0x58] sm:$0xff] %v2961
    %3049 = vst [vmem:[#allocation2 + $0x60] sm:$0xff] %v2840
    %3050 = vst [vmem:[#allocation2 + $0x68] sm:$0xff] %v2842
    %3051 = vst [vmem:[#allocation2 + $0x70] sm:$0xff] %v2963
    %3052 = vst [vmem:[#allocation2 + $0x78] sm:$0xff] %v2965
    %3053 = vst [vmem:[#allocation2 + $0x80] sm:$0xff] %v2846
    %3054 = vst [vmem:[#allocation2 + $0x88] sm:$0xff] %v2848
    %3055 = vst [vmem:[#allocation2 + $0x90] sm:$0xff] %v2969
    %3056 = vst [vmem:[#allocation2 + $0x98] sm:$0xff] %v2971
    %3057 = vst [vmem:[#allocation2 + $0xa0] sm:$0xff] %v2850
    %3058 = vst [vmem:[#allocation2 + $0xa8] sm:$0xff] %v2852
    %3059 = vst [vmem:[#allocation2 + $0xb0] sm:$0xff] %v2973
    %3060 = vst [vmem:[#allocation2 + $0xb8] sm:$0xff] %v2975
    %3061 = vst [vmem:[#allocation2 + $0xc0] sm:$0xff] %v2856
    %3062 = vst [vmem:[#allocation2 + $0xc8] sm:$0xff] %v2858
    %3063 = vst [vmem:[#allocation2 + $0xd0] sm:$0xff] %v2979
    %3064 = vst [vmem:[#allocation2 + $0xd8] sm:$0xff] %v2981
    %3065 = vst [vmem:[#allocation2 + $0xe0] sm:$0xff] %v2860
    %3066 = vst [vmem:[#allocation2 + $0xe8] sm:$0xff] %v2862
    %3067 = vst [vmem:[#allocation2 + $0xf0] sm:$0xff] %v2983
    %3068 = vst [vmem:[#allocation2 + $0xf8] sm:$0xff] %v2985
    %3069 = vst [vmem:[#allocation2 + $0x100] sm:$0xff] %v2866
    %3070 = vst [vmem:[#allocation2 + $0x108] sm:$0xff] %v2868
    %3071 = vst [vmem:[#allocation2 + $0x110] sm:$0xff] %v2989
    %3072 = vst [vmem:[#allocation2 + $0x118] sm:$0xff] %v2991
    %3073 = vst [vmem:[#allocation2 + $0x120] sm:$0xff] %v2870
    %3074 = vst [vmem:[#allocation2 + $0x128] sm:$0xff] %v2872
    %3075 = vst [vmem:[#allocation2 + $0x130] sm:$0xff] %v2993
    %3076 = vst [vmem:[#allocation2 + $0x138] sm:$0xff] %v2995
    %3077 = vst [vmem:[#allocation2 + $0x140] sm:$0xff] %v2876
    %3078 = vst [vmem:[#allocation2 + $0x148] sm:$0xff] %v2878
    %3079 = vst [vmem:[#allocation2 + $0x150] sm:$0xff] %v2999
    %3080 = vst [vmem:[#allocation2 + $0x158] sm:$0xff] %v3001
    %3081 = vst [vmem:[#allocation2 + $0x160] sm:$0xff] %v2880
    %3082 = vst [vmem:[#allocation2 + $0x168] sm:$0xff] %v2882
    %3083 = vst [vmem:[#allocation2 + $0x170] sm:$0xff] %v3003
    %3084 = vst [vmem:[#allocation2 + $0x178] sm:$0xff] %v3005
    %3085 = vst [vmem:[#allocation2 + $0x180] sm:$0xff] %v2886
    %3086 = vst [vmem:[#allocation2 + $0x188] sm:$0xff] %v2888
    %3087 = vst [vmem:[#allocation2 + $0x190] sm:$0xff] %v3009
    %3088 = vst [vmem:[#allocation2 + $0x198] sm:$0xff] %v3011
    %3089 = vst [vmem:[#allocation2 + $0x1a0] sm:$0xff] %v2890
    %3090 = vst [vmem:[#allocation2 + $0x1a8] sm:$0xff] %v2892
    %3091 = vst [vmem:[#allocation2 + $0x1b0] sm:$0xff] %v3013
    %3092 = vst [vmem:[#allocation2 + $0x1b8] sm:$0xff] %v3015
    %3093 = vst [vmem:[#allocation2 + $0x1c0] sm:$0xff] %v2896
    %3094 = vst [vmem:[#allocation2 + $0x1c8] sm:$0xff] %v2898
    %3095 = vst [vmem:[#allocation2 + $0x1d0] sm:$0xff] %v3019
    %3096 = vst [vmem:[#allocation2 + $0x1d8] sm:$0xff] %v3021
    %3097 = vst [vmem:[#allocation2 + $0x1e0] sm:$0xff] %v2900
    %3098 = vst [vmem:[#allocation2 + $0x1e8] sm:$0xff] %v2902
    %3099 = vst [vmem:[#allocation2 + $0x1f0] sm:$0xff] %v3023
    %3100 = vst [vmem:[#allocation2 + $0x1f8] sm:$0xff] %v3025
    %3101 = vst [vmem:[#allocation2 + $0x200] sm:$0xff] %v2906
    %3102 = vst [vmem:[#allocation2 + $0x208] sm:$0xff] %v2908
    %3103 = vst [vmem:[#allocation2 + $0x210] sm:$0xff] %v3029
    %3104 = vst [vmem:[#allocation2 + $0x218] sm:$0xff] %v3031
    %3105 = vst [vmem:[#allocation2 + $0x220] sm:$0xff] %v2910
    %3106 = vst [vmem:[#allocation2 + $0x228] sm:$0xff] %v2912
    %3107 = vst [vmem:[#allocation2 + $0x230] sm:$0xff] %v3033
    %3108 = vst [vmem:[#allocation2 + $0x238] sm:$0xff] %v3035
    %v3109 = vld [vmem:[%s12] sm:$0xff]
    %v3110 = vld [vmem:[%s12 + $0x8] sm:$0xff]
    %v3111 = vld [vmem:[%s12 + $0x10] sm:$0xff]
    %v3112 = vld [vmem:[%s12 + $0x18] sm:$0xff]
    %v3113 = vld [vmem:[%s12 + $0x20] sm:$0xff]
    %v3114 = vld [vmem:[%s12 + $0x28] sm:$0xff]
    %v3115 = vld [vmem:[%s12 + $0x30] sm:$0xff]
    %v3116 = vld [vmem:[%s12 + $0x38] sm:$0xff]
    %v3117 = vld [vmem:[%s12 + $0x40] sm:$0xff]
    %v3118 = vld [vmem:[%s12 + $0x48] sm:$0xff]
    %v3119 = vld [vmem:[%s12 + $0x50] sm:$0xff]
    %v3120 = vld [vmem:[%s12 + $0x58] sm:$0xff]
    %v3121 = vld [vmem:[%s12 + $0x60] sm:$0xff]
    %v3122 = vld [vmem:[%s12 + $0x68] sm:$0xff]
    %v3123 = vld [vmem:[%s12 + $0x70] sm:$0xff]
    %v3124 = vld [vmem:[%s12 + $0x78] sm:$0xff]
    %v3125 = vld [vmem:[%s12 + $0x80] sm:$0xff]
    %v3126 = vld [vmem:[%s12 + $0x88] sm:$0xff]
    %v3127 = vld [vmem:[%s12 + $0x90] sm:$0xff]
    %v3128 = vld [vmem:[%s12 + $0x98] sm:$0xff]
    %v3129 = vld [vmem:[%s12 + $0xa0] sm:$0xff]
    %v3130 = vld [vmem:[%s12 + $0xa8] sm:$0xff]
    %v3131 = vld [vmem:[%s12 + $0xb0] sm:$0xff]
    %v3132 = vld [vmem:[%s12 + $0xb8] sm:$0xff]
    %v3133 = vld [vmem:[%s12 + $0xc0] sm:$0xff]
    %v3134 = vld [vmem:[%s12 + $0xc8] sm:$0xff]
    %v3135 = vld [vmem:[%s12 + $0xd0] sm:$0xff]
    %v3136 = vld [vmem:[%s12 + $0xd8] sm:$0xff]
    %v3137 = vld [vmem:[%s12 + $0xe0] sm:$0xff]
    %v3138 = vld [vmem:[%s12 + $0xe8] sm:$0xff]
    %v3139 = vld [vmem:[%s12 + $0xf0] sm:$0xff]
    %v3140 = vld [vmem:[%s12 + $0xf8] sm:$0xff]
    %v3141 = vld [vmem:[%s1007] sm:$0xff]
    %v3142 = vld [vmem:[%s1007 + $0x8] sm:$0xff]
    %v3143 = vld [vmem:[%s1007 + $0x10] sm:$0xff]
    %v3144 = vld [vmem:[%s1007 + $0x18] sm:$0xff]
    %v3145 = vld [vmem:[%s1007 + $0x20] sm:$0xff]
    %v3146 = vld [vmem:[%s1007 + $0x28] sm:$0xff]
    %v3147 = vld [vmem:[%s1007 + $0x30] sm:$0xff]
    %v3148 = vld [vmem:[%s1007 + $0x38] sm:$0xff]
    %v3181 = vunpack.c.l.b16 %v3109
    %v3182 = vunpack.c.h.b16 %v3109
    %v3183 = vunpack.c.l.b16 %v3110
    %v3184 = vunpack.c.h.b16 %v3110
    %v3185 = vunpack.c.l.b16 %v3111
    %v3186 = vunpack.c.h.b16 %v3111
    %v3187 = vunpack.c.l.b16 %v3112
    %v3188 = vunpack.c.h.b16 %v3112
    %v3189 = vunpack.c.l.b16 %v3113
    %v3190 = vunpack.c.h.b16 %v3113
    %v3191 = vunpack.c.l.b16 %v3114
    %v3192 = vunpack.c.h.b16 %v3114
    %v3193 = vunpack.c.l.b16 %v3115
    %v3194 = vunpack.c.h.b16 %v3115
    %v3195 = vunpack.c.l.b16 %v3116
    %v3196 = vunpack.c.h.b16 %v3116
    %v3197 = vunpack.c.l.b16 %v3117
    %v3198 = vunpack.c.h.b16 %v3117
    %v3199 = vunpack.c.l.b16 %v3118
    %v3200 = vunpack.c.h.b16 %v3118
    %v3201 = vunpack.c.l.b16 %v3119
    %v3202 = vunpack.c.h.b16 %v3119
    %v3203 = vunpack.c.l.b16 %v3120
    %v3204 = vunpack.c.h.b16 %v3120
    %v3205 = vunpack.c.l.b16 %v3121
    %v3206 = vunpack.c.h.b16 %v3121
    %v3207 = vunpack.c.l.b16 %v3122
    %v3208 = vunpack.c.h.b16 %v3122
    %v3209 = vunpack.c.l.b16 %v3123
    %v3210 = vunpack.c.h.b16 %v3123
    %v3211 = vunpack.c.l.b16 %v3124
    %v3212 = vunpack.c.h.b16 %v3124
    %v3213 = vunpack.c.l.b16 %v3125
    %v3214 = vunpack.c.h.b16 %v3125
    %v3215 = vunpack.c.l.b16 %v3126
    %v3216 = vunpack.c.h.b16 %v3126
    %v3217 = vunpack.c.l.b16 %v3127
    %v3218 = vunpack.c.h.b16 %v3127
    %v3219 = vunpack.c.l.b16 %v3128
    %v3220 = vunpack.c.h.b16 %v3128
    %v3221 = vunpack.c.l.b16 %v3129
    %v3222 = vunpack.c.h.b16 %v3129
    %v3223 = vunpack.c.l.b16 %v3130
    %v3224 = vunpack.c.h.b16 %v3130
    %v3225 = vunpack.c.l.b16 %v3131
    %v3226 = vunpack.c.h.b16 %v3131
    %v3227 = vunpack.c.l.b16 %v3132
    %v3228 = vunpack.c.h.b16 %v3132
    %v3229 = vunpack.c.l.b16 %v3133
    %v3230 = vunpack.c.h.b16 %v3133
    %v3231 = vunpack.c.l.b16 %v3134
    %v3232 = vunpack.c.h.b16 %v3134
    %v3233 = vunpack.c.l.b16 %v3135
    %v3234 = vunpack.c.h.b16 %v3135
    %v3235 = vunpack.c.l.b16 %v3136
    %v3236 = vunpack.c.h.b16 %v3136
    %v3237 = vunpack.c.l.b16 %v3137
    %v3238 = vunpack.c.h.b16 %v3137
    %v3239 = vunpack.c.l.b16 %v3138
    %v3240 = vunpack.c.h.b16 %v3138
    %v3241 = vunpack.c.l.b16 %v3139
    %v3242 = vunpack.c.h.b16 %v3139
    %v3243 = vunpack.c.l.b16 %v3140
    %v3244 = vunpack.c.h.b16 %v3140
    %v3245 = vpack.c.b16 %v3185, %v3181
    %v3246 = vpack.c.b16 %v3186, %v3182
    %v3247 = vpack.c.b16 %v3187, %v3183
    %v3248 = vpack.c.b16 %v3188, %v3184
    %v3249 = vpack.c.b16 %v3193, %v3189
    %v3250 = vpack.c.b16 %v3194, %v3190
    %v3251 = vpack.c.b16 %v3195, %v3191
    %v3252 = vpack.c.b16 %v3196, %v3192
    %v3253 = vpack.c.b16 %v3201, %v3197
    %v3254 = vpack.c.b16 %v3202, %v3198
    %v3255 = vpack.c.b16 %v3203, %v3199
    %v3256 = vpack.c.b16 %v3204, %v3200
    %v3257 = vpack.c.b16 %v3209, %v3205
    %v3258 = vpack.c.b16 %v3210, %v3206
    %v3259 = vpack.c.b16 %v3211, %v3207
    %v3260 = vpack.c.b16 %v3212, %v3208
    %v3261 = vpack.c.b16 %v3217, %v3213
    %v3262 = vpack.c.b16 %v3218, %v3214
    %v3263 = vpack.c.b16 %v3219, %v3215
    %v3264 = vpack.c.b16 %v3220, %v3216
    %v3265 = vpack.c.b16 %v3225, %v3221
    %v3266 = vpack.c.b16 %v3226, %v3222
    %v3267 = vpack.c.b16 %v3227, %v3223
    %v3268 = vpack.c.b16 %v3228, %v3224
    %v3269 = vpack.c.b16 %v3233, %v3229
    %v3270 = vpack.c.b16 %v3234, %v3230
    %v3271 = vpack.c.b16 %v3235, %v3231
    %v3272 = vpack.c.b16 %v3236, %v3232
    %v3273 = vpack.c.b16 %v3241, %v3237
    %v3274 = vpack.c.b16 %v3242, %v3238
    %v3275 = vpack.c.b16 %v3243, %v3239
    %v3276 = vpack.c.b16 %v3244, %v3240
    %3309 = vmatprep.subr.bf16.mxu0 %v3246
    %3310 = vmatpush1.bf16.msra.mxu0 %v3245
    %3311 = vmatprep.subr.bf16.mxu0 %v3250
    %3312 = vmatpush1.bf16.msra.mxu0 %v3249
    %3313 = vmatprep.subr.bf16.mxu0 %v3254
    %3314 = vmatpush1.bf16.msra.mxu0 %v3253
    %3315 = vmatprep.subr.bf16.mxu0 %v3258
    %3316 = vmatpush1.bf16.msra.mxu0 %v3257
    %3317 = vmatprep.subr.bf16.mxu0 %v3262
    %3318 = vmatpush1.bf16.msra.mxu0 %v3261
    %3319 = vmatprep.subr.bf16.mxu0 %v3266
    %3320 = vmatpush1.bf16.msra.mxu0 %v3265
    %3321 = vmatprep.subr.bf16.mxu0 %v3270
    %3322 = vmatpush1.bf16.msra.mxu0 %v3269
    %3323 = vmatprep.subr.bf16.mxu0 %v3274
    %3324 = vmatpush1.bf16.msra.mxu0 %v3273
    %3325 = vmatprep.subr.bf16.mxu0 0
    %3326 = vmatpush1.bf16.msra.mxu0 0
    %3327 = vmatprep.subr.bf16.mxu0 0
    %3328 = vmatpush1.bf16.msra.mxu0 0
    %3329 = vmatprep.subr.bf16.mxu0 0
    %3330 = vmatpush1.bf16.msra.mxu0 0
    %3331 = vmatprep.subr.bf16.mxu0 0
    %3332 = vmatpush1.bf16.msra.mxu0 0
    %3333 = vmatprep.subr.bf16.mxu0 0
    %3334 = vmatpush1.bf16.msra.mxu0 0
    %3335 = vmatprep.subr.bf16.mxu0 0
    %3336 = vmatpush1.bf16.msra.mxu0 0
    %3337 = vmatprep.subr.bf16.mxu0 0
    %3338 = vmatpush1.bf16.msra.mxu0 0
    %3339 = vmatprep.subr.bf16.mxu0 0
    %3340 = vmatpush1.bf16.msra.mxu0 0
    %3341 = vmatprep.mubr.bf16.mxu0 0
    %3342 = vmatmul.mubr.bf16.gmra.mrb[0].mxu0 0
    %v3343 = vpop.f32.mrb[0].mxu0
    %v3344 = vadd.f32 0.0, %v3343
    %v3345 = vpop.f32.mrb[0].mxu0
    %v3346 = vadd.f32 0.0, %v3345
    %v3347 = vpop.f32.mrb[0].mxu0
    %v3348 = vadd.f32 0.0, %v3347
    %v3349 = vpop.f32.mrb[0].mxu0
    %v3350 = vadd.f32 0.0, %v3349
    %3351 = vdwg.mxu0
    %3352 = vmatprep.subr.bf16.mxu0 %v3248
    %3353 = vmatpush1.bf16.msra.mxu0 %v3247
    %3354 = vmatprep.subr.bf16.mxu0 %v3252
    %3355 = vmatpush1.bf16.msra.mxu0 %v3251
    %3356 = vmatprep.subr.bf16.mxu0 %v3256
    %3357 = vmatpush1.bf16.msra.mxu0 %v3255
    %3358 = vmatprep.subr.bf16.mxu0 %v3260
    %3359 = vmatpush1.bf16.msra.mxu0 %v3259
    %3360 = vmatprep.subr.bf16.mxu0 %v3264
    %3361 = vmatpush1.bf16.msra.mxu0 %v3263
    %3362 = vmatprep.subr.bf16.mxu0 %v3268
    %3363 = vmatpush1.bf16.msra.mxu0 %v3267
    %3364 = vmatprep.subr.bf16.mxu0 %v3272
    %3365 = vmatpush1.bf16.msra.mxu0 %v3271
    %3366 = vmatprep.subr.bf16.mxu0 %v3276
    %3367 = vmatpush1.bf16.msra.mxu0 %v3275
    %3368 = vmatprep.subr.bf16.mxu0 0
    %3369 = vmatpush1.bf16.msra.mxu0 0
    %3370 = vmatprep.subr.bf16.mxu0 0
    %3371 = vmatpush1.bf16.msra.mxu0 0
    %3372 = vmatprep.subr.bf16.mxu0 0
    %3373 = vmatpush1.bf16.msra.mxu0 0
    %3374 = vmatprep.subr.bf16.mxu0 0
    %3375 = vmatpush1.bf16.msra.mxu0 0
    %3376 = vmatprep.subr.bf16.mxu0 0
    %3377 = vmatpush1.bf16.msra.mxu0 0
    %3378 = vmatprep.subr.bf16.mxu0 0
    %3379 = vmatpush1.bf16.msra.mxu0 0
    %3380 = vmatprep.subr.bf16.mxu0 0
    %3381 = vmatpush1.bf16.msra.mxu0 0
    %3382 = vmatprep.subr.bf16.mxu0 0
    %3383 = vmatpush1.bf16.msra.mxu0 0
    %3384 = vmatprep.mubr.bf16.mxu0 0
    %3385 = vmatmul.mubr.bf16.gmra.mrb[0].mxu0 0
    %v3386 = vpop.f32.mrb[0].mxu0
    %v3387 = vadd.f32 0.0, %v3386
    %v3388 = vpop.f32.mrb[0].mxu0
    %v3389 = vadd.f32 0.0, %v3388
    %v3390 = vpop.f32.mrb[0].mxu0
    %v3391 = vadd.f32 0.0, %v3390
    %v3392 = vpop.f32.mrb[0].mxu0
    %v3393 = vadd.f32 0.0, %v3392
    %3394 = vdwg.mxu0
    %v3395 = vadd.f32 %v3141, %v3344
    %v3396 = vadd.f32 %v3142, %v3346
    %v3397 = vadd.f32 %v3143, %v3387
    %v3398 = vadd.f32 %v3144, %v3389
    %v3399 = vadd.f32 %v3145, %v3348
    %v3400 = vadd.f32 %v3146, %v3350
    %v3401 = vadd.f32 %v3147, %v3391
    %v3402 = vadd.f32 %v3148, %v3393
    %v3403 = vxor.u32 %v3395, 2147483648
    %v3404 = vxor.u32 %v3399, 2147483648
    %v3405 = vmul.f32 %v3403, 1.442695
    %v3406 = vpow.pop %v3405
    %v3407 = vmul.f32 %v3404, 1.442695
    %v3408 = vpow.pop %v3407
    %v3409 = vadd.f32 %v3406, 1.0
    %v3410 = vadd.f32 %v3408, 1.0
    %v3411 = vrcp.pop %v3409
    %v3412 = vmul.f32 1.0, %v3411
    %v3413 = vrcp.pop %v3410
    %v3414 = vmul.f32 1.0, %v3413
    %v3415 = vxor.u32 %v3396, 2147483648
    %v3416 = vxor.u32 %v3400, 2147483648
    %v3417 = vmul.f32 %v3415, 1.442695
    %v3418 = vpow.pop %v3417
    %v3419 = vmul.f32 %v3416, 1.442695
    %v3420 = vpow.pop %v3419
    %v3421 = vadd.f32 %v3418, 1.0
    %v3422 = vadd.f32 %v3420, 1.0
    %v3423 = vrcp.pop %v3421
    %v3424 = vmul.f32 1.0, %v3423
    %v3425 = vrcp.pop %v3422
    %v3426 = vmul.f32 1.0, %v3425
    %v3427 = vtanh.pop %v3397
    %v3428 = vtanh.pop %v3401
    %v3429 = vxor.u32 %v3398, 2147483648
    %v3430 = vxor.u32 %v3402, 2147483648
    %v3431 = vmul.f32 %v3429, 1.442695
    %v3432 = vpow.pop %v3431
    %v3433 = vmul.f32 %v3430, 1.442695
    %v3434 = vpow.pop %v3433
    %v3435 = vadd.f32 %v3432, 1.0
    %v3436 = vadd.f32 %v3434, 1.0
    %v3437 = vrcp.pop %v3435
    %v3438 = vmul.f32 1.0, %v3437
    %v3439 = vrcp.pop %v3436
    %v3440 = vmul.f32 1.0, %v3439
    %v3441 = vmul.f32 %v3424, 0.0
    %v3442 = vmul.f32 %v3426, 0.0
    %v3443 = vmul.f32 %v3412, %v3427
    %v3444 = vmul.f32 %v3414, %v3428
    %v3445 = vadd.f32 %v3441, %v3443
    %v3446 = vadd.f32 %v3442, %v3444
    %v3447 = vtanh.pop %v3445
    %v3448 = vtanh.pop %v3446
    %v3449 = vmul.f32 %v3438, %v3447
    %v3450 = vmul.f32 %v3440, %v3448
    %v3451 = vpack.c.bf16 %v3450, %v3449
    %v3453 = vunpack.c.l.b16 %v3451
    %v3454 = vunpack.c.h.b16 %v3451
    %v3455 = vpack.c.b16 %v3453, %v3453
    %v3456 = vpack.c.b16 %v3454, %v3454
    %3459 = vst [vmem:[%s14] sm:$0xf] %v3455
    %3460 = vst [vmem:[%s14 + $0x4] sm:$0xf] %v3456
    %v3461 = vld [vmem:[%s1322] sm:$0xff]
    %v3462 = vld [vmem:[%s1322 + $0x8] sm:$0xff]
    %v3463 = vld [vmem:[%s1322 + $0x10] sm:$0xff]
    %v3464 = vld [vmem:[%s1322 + $0x18] sm:$0xff]
    %v3465 = vld [vmem:[%s1322 + $0x20] sm:$0xff]
    %v3466 = vld [vmem:[%s1322 + $0x28] sm:$0xff]
    %v3467 = vld [vmem:[%s1322 + $0x30] sm:$0xff]
    %v3468 = vld [vmem:[%s1322 + $0x38] sm:$0xff]
    %3469 = vmatprep.subr.bf16.mxu0 %v3246
    %3470 = vmatpush1.bf16.msra.mxu0 %v3245
    %3471 = vmatprep.subr.bf16.mxu0 %v3250
    %3472 = vmatpush1.bf16.msra.mxu0 %v3249
    %3473 = vmatprep.subr.bf16.mxu0 %v3254
    %3474 = vmatpush1.bf16.msra.mxu0 %v3253
    %3475 = vmatprep.subr.bf16.mxu0 %v3258
    %3476 = vmatpush1.bf16.msra.mxu0 %v3257
    %3477 = vmatprep.subr.bf16.mxu0 %v3262
    %3478 = vmatpush1.bf16.msra.mxu0 %v3261
    %3479 = vmatprep.subr.bf16.mxu0 %v3266
    %3480 = vmatpush1.bf16.msra.mxu0 %v3265
    %3481 = vmatprep.subr.bf16.mxu0 %v3270
    %3482 = vmatpush1.bf16.msra.mxu0 %v3269
    %3483 = vmatprep.subr.bf16.mxu0 %v3274
    %3484 = vmatpush1.bf16.msra.mxu0 %v3273
    %3485 = vmatprep.subr.bf16.mxu0 0
    %3486 = vmatpush1.bf16.msra.mxu0 0
    %3487 = vmatprep.subr.bf16.mxu0 0
    %3488 = vmatpush1.bf16.msra.mxu0 0
    %3489 = vmatprep.subr.bf16.mxu0 0
    %3490 = vmatpush1.bf16.msra.mxu0 0
    %3491 = vmatprep.subr.bf16.mxu0 0
    %3492 = vmatpush1.bf16.msra.mxu0 0
    %3493 = vmatprep.subr.bf16.mxu0 0
    %3494 = vmatpush1.bf16.msra.mxu0 0
    %3495 = vmatprep.subr.bf16.mxu0 0
    %3496 = vmatpush1.bf16.msra.mxu0 0
    %3497 = vmatprep.subr.bf16.mxu0 0
    %3498 = vmatpush1.bf16.msra.mxu0 0
    %3499 = vmatprep.subr.bf16.mxu0 0
    %3500 = vmatpush1.bf16.msra.mxu0 0
    %3501 = vmatprep.mubr.bf16.mxu0 0
    %3502 = vmatmul.mubr.bf16.gmra.mrb[0].mxu0 %v3451
    %v3503 = vpop.f32.mrb[0].mxu0
    %v3504 = vadd.f32 0.0, %v3503
    %v3505 = vpop.f32.mrb[0].mxu0
    %v3506 = vadd.f32 0.0, %v3505
    %v3507 = vpop.f32.mrb[0].mxu0
    %v3508 = vadd.f32 0.0, %v3507
    %v3509 = vpop.f32.mrb[0].mxu0
    %v3510 = vadd.f32 0.0, %v3509
    %3511 = vdwg.mxu0
    %3512 = vmatprep.subr.bf16.mxu0 %v3248
    %3513 = vmatpush1.bf16.msra.mxu0 %v3247
    %3514 = vmatprep.subr.bf16.mxu0 %v3252
    %3515 = vmatpush1.bf16.msra.mxu0 %v3251
    %3516 = vmatprep.subr.bf16.mxu0 %v3256
    %3517 = vmatpush1.bf16.msra.mxu0 %v3255
    %3518 = vmatprep.subr.bf16.mxu0 %v3260
    %3519 = vmatpush1.bf16.msra.mxu0 %v3259
    %3520 = vmatprep.subr.bf16.mxu0 %v3264
    %3521 = vmatpush1.bf16.msra.mxu0 %v3263
    %3522 = vmatprep.subr.bf16.mxu0 %v3268
    %3523 = vmatpush1.bf16.msra.mxu0 %v3267
    %3524 = vmatprep.subr.bf16.mxu0 %v3272
    %3525 = vmatpush1.bf16.msra.mxu0 %v3271
    %3526 = vmatprep.subr.bf16.mxu0 %v3276
    %3527 = vmatpush1.bf16.msra.mxu0 %v3275
    %3528 = vmatprep.subr.bf16.mxu0 0
    %3529 = vmatpush1.bf16.msra.mxu0 0
    %3530 = vmatprep.subr.bf16.mxu0 0
    %3531 = vmatpush1.bf16.msra.mxu0 0
    %3532 = vmatprep.subr.bf16.mxu0 0
    %3533 = vmatpush1.bf16.msra.mxu0 0
    %3534 = vmatprep.subr.bf16.mxu0 0
    %3535 = vmatpush1.bf16.msra.mxu0 0
    %3536 = vmatprep.subr.bf16.mxu0 0
    %3537 = vmatpush1.bf16.msra.mxu0 0
    %3538 = vmatprep.subr.bf16.mxu0 0
    %3539 = vmatpush1.bf16.msra.mxu0 0
    %3540 = vmatprep.subr.bf16.mxu0 0
    %3541 = vmatpush1.bf16.msra.mxu0 0
    %3542 = vmatprep.subr.bf16.mxu0 0
    %3543 = vmatpush1.bf16.msra.mxu0 0
    %3544 = vmatprep.mubr.bf16.mxu0 0
    %3545 = vmatmul.mubr.bf16.gmra.mrb[0].mxu0 %v3451
    %v3546 = vpop.f32.mrb[0].mxu0
    %v3547 = vadd.f32 0.0, %v3546
    %v3548 = vpop.f32.mrb[0].mxu0
    %v3549 = vadd.f32 0.0, %v3548
    %v3550 = vpop.f32.mrb[0].mxu0
    %v3551 = vadd.f32 0.0, %v3550
    %v3552 = vpop.f32.mrb[0].mxu0
    %v3553 = vadd.f32 0.0, %v3552
    %3554 = vdwg.mxu0
    %v3555 = vadd.f32 %v3461, %v3504
    %v3556 = vadd.f32 %v3462, %v3506
    %v3557 = vadd.f32 %v3463, %v3547
    %v3558 = vadd.f32 %v3464, %v3549
    %v3559 = vadd.f32 %v3465, %v3508
    %v3560 = vadd.f32 %v3466, %v3510
    %v3561 = vadd.f32 %v3467, %v3551
    %v3562 = vadd.f32 %v3468, %v3553
    %v3563 = vxor.u32 %v3555, 2147483648
    %v3564 = vxor.u32 %v3559, 2147483648
    %v3565 = vmul.f32 %v3563, 1.442695
    %v3566 = vpow.pop %v3565
    %v3567 = vmul.f32 %v3564, 1.442695
    %v3568 = vpow.pop %v3567
    %v3569 = vadd.f32 %v3566, 1.0
    %v3570 = vadd.f32 %v3568, 1.0
    %v3571 = vrcp.pop %v3569
    %v3572 = vmul.f32 1.0, %v3571
    %v3573 = vrcp.pop %v3570
    %v3574 = vmul.f32 1.0, %v3573
    %v3575 = vxor.u32 %v3556, 2147483648
    %v3576 = vxor.u32 %v3560, 2147483648
    %v3577 = vmul.f32 %v3575, 1.442695
    %v3578 = vpow.pop %v3577
    %v3579 = vmul.f32 %v3576, 1.442695
    %v3580 = vpow.pop %v3579
    %v3581 = vadd.f32 %v3578, 1.0
    %v3582 = vadd.f32 %v3580, 1.0
    %v3583 = vrcp.pop %v3581
    %v3584 = vmul.f32 1.0, %v3583
    %v3585 = vrcp.pop %v3582
    %v3586 = vmul.f32 1.0, %v3585
    %v3587 = vtanh.pop %v3557
    %v3588 = vtanh.pop %v3561
    %v3589 = vxor.u32 %v3558, 2147483648
    %v3590 = vxor.u32 %v3562, 2147483648
    %v3591 = vmul.f32 %v3589, 1.442695
    %v3592 = vpow.pop %v3591
    %v3593 = vmul.f32 %v3590, 1.442695
    %v3594 = vpow.pop %v3593
    %v3595 = vadd.f32 %v3592, 1.0
    %v3596 = vadd.f32 %v3594, 1.0
    %v3597 = vrcp.pop %v3595
    %v3598 = vmul.f32 1.0, %v3597
    %v3599 = vrcp.pop %v3596
    %v3600 = vmul.f32 1.0, %v3599
    %v3601 = vmul.f32 %v3584, %v3445
    %v3602 = vmul.f32 %v3586, %v3446
    %v3603 = vmul.f32 %v3572, %v3587
    %v3604 = vmul.f32 %v3574, %v3588
    %v3605 = vadd.f32 %v3601, %v3603
    %v3606 = vadd.f32 %v3602, %v3604
    %v3607 = vtanh.pop %v3605
    %v3608 = vtanh.pop %v3606
    %v3609 = vmul.f32 %v3598, %v3607
    %v3610 = vmul.f32 %v3600, %v3608
    %v3611 = vpack.c.bf16 %v3610, %v3609
    %v3613 = vunpack.c.l.b16 %v3611
    %v3614 = vunpack.c.h.b16 %v3611
    %v3615 = vpack.c.b16 %v3613, %v3613
    %v3616 = vpack.c.b16 %v3614, %v3614
    %s3619 = scalar_lea.vmem %s14, 8
    %3620 = vst [vmem:[%s3619] sm:$0xf] %v3615
    %3621 = vst [vmem:[%s3619 + $0x4] sm:$0xf] %v3616
    %v3622 = vld [vmem:[%s1478] sm:$0xff]
    %v3623 = vld [vmem:[%s1478 + $0x8] sm:$0xff]
    %v3624 = vld [vmem:[%s1478 + $0x10] sm:$0xff]
    %v3625 = vld [vmem:[%s1478 + $0x18] sm:$0xff]
    %v3626 = vld [vmem:[%s1478 + $0x20] sm:$0xff]
    %v3627 = vld [vmem:[%s1478 + $0x28] sm:$0xff]
    %v3628 = vld [vmem:[%s1478 + $0x30] sm:$0xff]
    %v3629 = vld [vmem:[%s1478 + $0x38] sm:$0xff]
    %3630 = vmatprep.subr.bf16.mxu0 %v3246
    %3631 = vmatpush1.bf16.msra.mxu0 %v3245
    %3632 = vmatprep.subr.bf16.mxu0 %v3250
    %3633 = vmatpush1.bf16.msra.mxu0 %v3249
    %3634 = vmatprep.subr.bf16.mxu0 %v3254
    %3635 = vmatpush1.bf16.msra.mxu0 %v3253
    %3636 = vmatprep.subr.bf16.mxu0 %v3258
    %3637 = vmatpush1.bf16.msra.mxu0 %v3257
    %3638 = vmatprep.subr.bf16.mxu0 %v3262
    %3639 = vmatpush1.bf16.msra.mxu0 %v3261
    %3640 = vmatprep.subr.bf16.mxu0 %v3266
    %3641 = vmatpush1.bf16.msra.mxu0 %v3265
    %3642 = vmatprep.subr.bf16.mxu0 %v3270
    %3643 = vmatpush1.bf16.msra.mxu0 %v3269
    %3644 = vmatprep.subr.bf16.mxu0 %v3274
    %3645 = vmatpush1.bf16.msra.mxu0 %v3273
    %3646 = vmatprep.subr.bf16.mxu0 0
    %3647 = vmatpush1.bf16.msra.mxu0 0
    %3648 = vmatprep.subr.bf16.mxu0 0
    %3649 = vmatpush1.bf16.msra.mxu0 0
    %3650 = vmatprep.subr.bf16.mxu0 0
    %3651 = vmatpush1.bf16.msra.mxu0 0
    %3652 = vmatprep.subr.bf16.mxu0 0
    %3653 = vmatpush1.bf16.msra.mxu0 0
    %3654 = vmatprep.subr.bf16.mxu0 0
    %3655 = vmatpush1.bf16.msra.mxu0 0
    %3656 = vmatprep.subr.bf16.mxu0 0
    %3657 = vmatpush1.bf16.msra.mxu0 0
    %3658 = vmatprep.subr.bf16.mxu0 0
    %3659 = vmatpush1.bf16.msra.mxu0 0
    %3660 = vmatprep.subr.bf16.mxu0 0
    %3661 = vmatpush1.bf16.msra.mxu0 0
    %3662 = vmatprep.mubr.bf16.mxu0 0
    %3663 = vmatmul.mubr.bf16.gmra.mrb[0].mxu0 %v3611
    %v3664 = vpop.f32.mrb[0].mxu0
    %v3665 = vadd.f32 0.0, %v3664
    %v3666 = vpop.f32.mrb[0].mxu0
    %v3667 = vadd.f32 0.0, %v3666
    %v3668 = vpop.f32.mrb[0].mxu0
    %v3669 = vadd.f32 0.0, %v3668
    %v3670 = vpop.f32.mrb[0].mxu0
    %v3671 = vadd.f32 0.0, %v3670
    %3672 = vdwg.mxu0
    %3673 = vmatprep.subr.bf16.mxu0 %v3248
    %3674 = vmatpush1.bf16.msra.mxu0 %v3247
    %3675 = vmatprep.subr.bf16.mxu0 %v3252
    %3676 = vmatpush1.bf16.msra.mxu0 %v3251
    %3677 = vmatprep.subr.bf16.mxu0 %v3256
    %3678 = vmatpush1.bf16.msra.mxu0 %v3255
    %3679 = vmatprep.subr.bf16.mxu0 %v3260
    %3680 = vmatpush1.bf16.msra.mxu0 %v3259
    %3681 = vmatprep.subr.bf16.mxu0 %v3264
    %3682 = vmatpush1.bf16.msra.mxu0 %v3263
    %3683 = vmatprep.subr.bf16.mxu0 %v3268
    %3684 = vmatpush1.bf16.msra.mxu0 %v3267
    %3685 = vmatprep.subr.bf16.mxu0 %v3272
    %3686 = vmatpush1.bf16.msra.mxu0 %v3271
    %3687 = vmatprep.subr.bf16.mxu0 %v3276
    %3688 = vmatpush1.bf16.msra.mxu0 %v3275
    %3689 = vmatprep.subr.bf16.mxu0 0
    %3690 = vmatpush1.bf16.msra.mxu0 0
    %3691 = vmatprep.subr.bf16.mxu0 0
    %3692 = vmatpush1.bf16.msra.mxu0 0
    %3693 = vmatprep.subr.bf16.mxu0 0
    %3694 = vmatpush1.bf16.msra.mxu0 0
    %3695 = vmatprep.subr.bf16.mxu0 0
    %3696 = vmatpush1.bf16.msra.mxu0 0
    %3697 = vmatprep.subr.bf16.mxu0 0
    %3698 = vmatpush1.bf16.msra.mxu0 0
    %3699 = vmatprep.subr.bf16.mxu0 0
    %3700 = vmatpush1.bf16.msra.mxu0 0
    %3701 = vmatprep.subr.bf16.mxu0 0
    %3702 = vmatpush1.bf16.msra.mxu0 0
    %3703 = vmatprep.subr.bf16.mxu0 0
    %3704 = vmatpush1.bf16.msra.mxu0 0
    %3705 = vmatprep.mubr.bf16.mxu0 0
    %3706 = vmatmul.mubr.bf16.gmra.mrb[0].mxu0 %v3611
    %v3707 = vpop.f32.mrb[0].mxu0
    %v3708 = vadd.f32 0.0, %v3707
    %v3709 = vpop.f32.mrb[0].mxu0
    %v3710 = vadd.f32 0.0, %v3709
    %v3711 = vpop.f32.mrb[0].mxu0
    %v3712 = vadd.f32 0.0, %v3711
    %v3713 = vpop.f32.mrb[0].mxu0
    %v3714 = vadd.f32 0.0, %v3713
    %3715 = vdwg.mxu0
    %v3716 = vadd.f32 %v3622, %v3665
    %v3717 = vadd.f32 %v3623, %v3667
    %v3718 = vadd.f32 %v3624, %v3708
    %v3719 = vadd.f32 %v3625, %v3710
    %v3720 = vadd.f32 %v3626, %v3669
    %v3721 = vadd.f32 %v3627, %v3671
    %v3722 = vadd.f32 %v3628, %v3712
    %v3723 = vadd.f32 %v3629, %v3714
    %v3724 = vxor.u32 %v3716, 2147483648
    %v3725 = vxor.u32 %v3720, 2147483648
    %v3726 = vmul.f32 %v3724, 1.442695
    %v3727 = vpow.pop %v3726
    %v3728 = vmul.f32 %v3725, 1.442695
    %v3729 = vpow.pop %v3728
    %v3730 = vadd.f32 %v3727, 1.0
    %v3731 = vadd.f32 %v3729, 1.0
    %v3732 = vrcp.pop %v3730
    %v3733 = vmul.f32 1.0, %v3732
    %v3734 = vrcp.pop %v3731
    %v3735 = vmul.f32 1.0, %v3734
    %v3736 = vxor.u32 %v3717, 2147483648
    %v3737 = vxor.u32 %v3721, 2147483648
    %v3738 = vmul.f32 %v3736, 1.442695
    %v3739 = vpow.pop %v3738
    %v3740 = vmul.f32 %v3737, 1.442695
    %v3741 = vpow.pop %v3740
    %v3742 = vadd.f32 %v3739, 1.0
    %v3743 = vadd.f32 %v3741, 1.0
    %v3744 = vrcp.pop %v3742
    %v3745 = vmul.f32 1.0, %v3744
    %v3746 = vrcp.pop %v3743
    %v3747 = vmul.f32 1.0, %v3746
    %v3748 = vtanh.pop %v3718
    %v3749 = vtanh.pop %v3722
    %v3750 = vxor.u32 %v3719, 2147483648
    %v3751 = vxor.u32 %v3723, 2147483648
    %v3752 = vmul.f32 %v3750, 1.442695
    %v3753 = vpow.pop %v3752
    %v3754 = vmul.f32 %v3751, 1.442695
    %v3755 = vpow.pop %v3754
    %v3756 = vadd.f32 %v3753, 1.0
    %v3757 = vadd.f32 %v3755, 1.0
    %v3758 = vrcp.pop %v3756
    %v3759 = vmul.f32 1.0, %v3758
    %v3760 = vrcp.pop %v3757
    %v3761 = vmul.f32 1.0, %v3760
    %v3762 = vmul.f32 %v3745, %v3605
    %v3763 = vmul.f32 %v3747, %v3606
    %v3764 = vmul.f32 %v3733, %v3748
    %v3765 = vmul.f32 %v3735, %v3749
    %v3766 = vadd.f32 %v3762, %v3764
    %v3767 = vadd.f32 %v3763, %v3765
    %v3768 = vtanh.pop %v3766
    %v3769 = vtanh.pop %v3767
    %v3770 = vmul.f32 %v3759, %v3768
    %v3771 = vmul.f32 %v3761, %v3769
    %v3772 = vpack.c.bf16 %v3771, %v3770
    %v3774 = vunpack.c.l.b16 %v3772
    %v3775 = vunpack.c.h.b16 %v3772
    %v3776 = vpack.c.b16 %v3774, %v3774
    %v3777 = vpack.c.b16 %v3775, %v3775
    %s3780 = scalar_lea.vmem %s14, 16
    %3781 = vst [vmem:[%s3780] sm:$0xf] %v3776
    %3782 = vst [vmem:[%s3780 + $0x4] sm:$0xf] %v3777
    %v3783 = vld [vmem:[%s1634] sm:$0xff]
    %v3784 = vld [vmem:[%s1634 + $0x8] sm:$0xff]
    %v3785 = vld [vmem:[%s1634 + $0x10] sm:$0xff]
    %v3786 = vld [vmem:[%s1634 + $0x18] sm:$0xff]
    %v3787 = vld [vmem:[%s1634 + $0x20] sm:$0xff]
    %v3788 = vld [vmem:[%s1634 + $0x28] sm:$0xff]
    %v3789 = vld [vmem:[%s1634 + $0x30] sm:$0xff]
    %v3790 = vld [vmem:[%s1634 + $0x38] sm:$0xff]
    %3791 = vmatprep.subr.bf16.mxu0 %v3246
    %3792 = vmatpush1.bf16.msra.mxu0 %v3245
    %3793 = vmatprep.subr.bf16.mxu0 %v3250
    %3794 = vmatpush1.bf16.msra.mxu0 %v3249
    %3795 = vmatprep.subr.bf16.mxu0 %v3254
    %3796 = vmatpush1.bf16.msra.mxu0 %v3253
    %3797 = vmatprep.subr.bf16.mxu0 %v3258
    %3798 = vmatpush1.bf16.msra.mxu0 %v3257
    %3799 = vmatprep.subr.bf16.mxu0 %v3262
    %3800 = vmatpush1.bf16.msra.mxu0 %v3261
    %3801 = vmatprep.subr.bf16.mxu0 %v3266
    %3802 = vmatpush1.bf16.msra.mxu0 %v3265
    %3803 = vmatprep.subr.bf16.mxu0 %v3270
    %3804 = vmatpush1.bf16.msra.mxu0 %v3269
    %3805 = vmatprep.subr.bf16.mxu0 %v3274
    %3806 = vmatpush1.bf16.msra.mxu0 %v3273
    %3807 = vmatprep.subr.bf16.mxu0 0
    %3808 = vmatpush1.bf16.msra.mxu0 0
    %3809 = vmatprep.subr.bf16.mxu0 0
    %3810 = vmatpush1.bf16.msra.mxu0 0
    %3811 = vmatprep.subr.bf16.mxu0 0
    %3812 = vmatpush1.bf16.msra.mxu0 0
    %3813 = vmatprep.subr.bf16.mxu0 0
    %3814 = vmatpush1.bf16.msra.mxu0 0
    %3815 = vmatprep.subr.bf16.mxu0 0
    %3816 = vmatpush1.bf16.msra.mxu0 0
    %3817 = vmatprep.subr.bf16.mxu0 0
    %3818 = vmatpush1.bf16.msra.mxu0 0
    %3819 = vmatprep.subr.bf16.mxu0 0
    %3820 = vmatpush1.bf16.msra.mxu0 0
    %3821 = vmatprep.subr.bf16.mxu0 0
    %3822 = vmatpush1.bf16.msra.mxu0 0
    %3823 = vmatprep.mubr.bf16.mxu0 0
    %3824 = vmatmul.mubr.bf16.gmra.mrb[0].mxu0 %v3772
    %v3825 = vpop.f32.mrb[0].mxu0
    %v3826 = vadd.f32 0.0, %v3825
    %v3827 = vpop.f32.mrb[0].mxu0
    %v3828 = vadd.f32 0.0, %v3827
    %v3829 = vpop.f32.mrb[0].mxu0
    %v3830 = vadd.f32 0.0, %v3829
    %v3831 = vpop.f32.mrb[0].mxu0
    %v3832 = vadd.f32 0.0, %v3831
    %3833 = vdwg.mxu0
    %3834 = vmatprep.subr.bf16.mxu0 %v3248
    %3835 = vmatpush1.bf16.msra.mxu0 %v3247
    %3836 = vmatprep.subr.bf16.mxu0 %v3252
    %3837 = vmatpush1.bf16.msra.mxu0 %v3251
    %3838 = vmatprep.subr.bf16.mxu0 %v3256
    %3839 = vmatpush1.bf16.msra.mxu0 %v3255
    %3840 = vmatprep.subr.bf16.mxu0 %v3260
    %3841 = vmatpush1.bf16.msra.mxu0 %v3259
    %3842 = vmatprep.subr.bf16.mxu0 %v3264
    %3843 = vmatpush1.bf16.msra.mxu0 %v3263
    %3844 = vmatprep.subr.bf16.mxu0 %v3268
    %3845 = vmatpush1.bf16.msra.mxu0 %v3267
    %3846 = vmatprep.subr.bf16.mxu0 %v3272
    %3847 = vmatpush1.bf16.msra.mxu0 %v3271
    %3848 = vmatprep.subr.bf16.mxu0 %v3276
    %3849 = vmatpush1.bf16.msra.mxu0 %v3275
    %3850 = vmatprep.subr.bf16.mxu0 0
    %3851 = vmatpush1.bf16.msra.mxu0 0
    %3852 = vmatprep.subr.bf16.mxu0 0
    %3853 = vmatpush1.bf16.msra.mxu0 0
    %3854 = vmatprep.subr.bf16.mxu0 0
    %3855 = vmatpush1.bf16.msra.mxu0 0
    %3856 = vmatprep.subr.bf16.mxu0 0
    %3857 = vmatpush1.bf16.msra.mxu0 0
    %3858 = vmatprep.subr.bf16.mxu0 0
    %3859 = vmatpush1.bf16.msra.mxu0 0
    %3860 = vmatprep.subr.bf16.mxu0 0
    %3861 = vmatpush1.bf16.msra.mxu0 0
    %3862 = vmatprep.subr.bf16.mxu0 0
    %3863 = vmatpush1.bf16.msra.mxu0 0
    %3864 = vmatprep.subr.bf16.mxu0 0
    %3865 = vmatpush1.bf16.msra.mxu0 0
    %3866 = vmatprep.mubr.bf16.mxu0 0
    %3867 = vmatmul.mubr.bf16.gmra.mrb[0].mxu0 %v3772
    %v3868 = vpop.f32.mrb[0].mxu0
    %v3869 = vadd.f32 0.0, %v3868
    %v3870 = vpop.f32.mrb[0].mxu0
    %v3871 = vadd.f32 0.0, %v3870
    %v3872 = vpop.f32.mrb[0].mxu0
    %v3873 = vadd.f32 0.0, %v3872
    %v3874 = vpop.f32.mrb[0].mxu0
    %v3875 = vadd.f32 0.0, %v3874
    %3876 = vdwg.mxu0
    %v3877 = vadd.f32 %v3783, %v3826
    %v3878 = vadd.f32 %v3784, %v3828
    %v3879 = vadd.f32 %v3785, %v3869
    %v3880 = vadd.f32 %v3786, %v3871
    %v3881 = vadd.f32 %v3787, %v3830
    %v3882 = vadd.f32 %v3788, %v3832
    %v3883 = vadd.f32 %v3789, %v3873
    %v3884 = vadd.f32 %v3790, %v3875
    %v3885 = vxor.u32 %v3877, 2147483648
    %v3886 = vxor.u32 %v3881, 2147483648
    %v3887 = vmul.f32 %v3885, 1.442695
    %v3888 = vpow.pop %v3887
    %v3889 = vmul.f32 %v3886, 1.442695
    %v3890 = vpow.pop %v3889
    %v3891 = vadd.f32 %v3888, 1.0
    %v3892 = vadd.f32 %v3890, 1.0
    %v3893 = vrcp.pop %v3891
    %v3894 = vmul.f32 1.0, %v3893
    %v3895 = vrcp.pop %v3892
    %v3896 = vmul.f32 1.0, %v3895
    %v3897 = vxor.u32 %v3878, 2147483648
    %v3898 = vxor.u32 %v3882, 2147483648
    %v3899 = vmul.f32 %v3897, 1.442695
    %v3900 = vpow.pop %v3899
    %v3901 = vmul.f32 %v3898, 1.442695
    %v3902 = vpow.pop %v3901
    %v3903 = vadd.f32 %v3900, 1.0
    %v3904 = vadd.f32 %v3902, 1.0
    %v3905 = vrcp.pop %v3903
    %v3906 = vmul.f32 1.0, %v3905
    %v3907 = vrcp.pop %v3904
    %v3908 = vmul.f32 1.0, %v3907
    %v3909 = vtanh.pop %v3879
    %v3910 = vtanh.pop %v3883
    %v3911 = vxor.u32 %v3880, 2147483648
    %v3912 = vxor.u32 %v3884, 2147483648
    %v3913 = vmul.f32 %v3911, 1.442695
    %v3914 = vpow.pop %v3913
    %v3915 = vmul.f32 %v3912, 1.442695
    %v3916 = vpow.pop %v3915
    %v3917 = vadd.f32 %v3914, 1.0
    %v3918 = vadd.f32 %v3916, 1.0
    %v3919 = vrcp.pop %v3917
    %v3920 = vmul.f32 1.0, %v3919
    %v3921 = vrcp.pop %v3918
    %v3922 = vmul.f32 1.0, %v3921
    %v3923 = vmul.f32 %v3906, %v3766
    %v3924 = vmul.f32 %v3908, %v3767
    %v3925 = vmul.f32 %v3894, %v3909
    %v3926 = vmul.f32 %v3896, %v3910
    %v3927 = vadd.f32 %v3923, %v3925
    %v3928 = vadd.f32 %v3924, %v3926
    %v3929 = vtanh.pop %v3927
    %v3930 = vtanh.pop %v3928
    %v3931 = vmul.f32 %v3920, %v3929
    %v3932 = vmul.f32 %v3922, %v3930
    %v3933 = vpack.c.bf16 %v3932, %v3931
    %v3935 = vunpack.c.l.b16 %v3933
    %v3936 = vunpack.c.h.b16 %v3933
    %v3937 = vpack.c.b16 %v3935, %v3935
    %v3938 = vpack.c.b16 %v3936, %v3936
    %s3941 = scalar_lea.vmem %s14, 24
    %3942 = vst [vmem:[%s3941] sm:$0xf] %v3937
    %3943 = vst [vmem:[%s3941 + $0x4] sm:$0xf] %v3938
    %v3944 = vld [vmem:[%s1790] sm:$0xff]
    %v3945 = vld [vmem:[%s1790 + $0x8] sm:$0xff]
    %v3946 = vld [vmem:[%s1790 + $0x10] sm:$0xff]
    %v3947 = vld [vmem:[%s1790 + $0x18] sm:$0xff]
    %v3948 = vld [vmem:[%s1790 + $0x20] sm:$0xff]
    %v3949 = vld [vmem:[%s1790 + $0x28] sm:$0xff]
    %v3950 = vld [vmem:[%s1790 + $0x30] sm:$0xff]
    %v3951 = vld [vmem:[%s1790 + $0x38] sm:$0xff]
    %3952 = vmatprep.subr.bf16.mxu0 %v3246
    %3953 = vmatpush1.bf16.msra.mxu0 %v3245
    %3954 = vmatprep.subr.bf16.mxu0 %v3250
    %3955 = vmatpush1.bf16.msra.mxu0 %v3249
    %3956 = vmatprep.subr.bf16.mxu0 %v3254
    %3957 = vmatpush1.bf16.msra.mxu0 %v3253
    %3958 = vmatprep.subr.bf16.mxu0 %v3258
    %3959 = vmatpush1.bf16.msra.mxu0 %v3257
    %3960 = vmatprep.subr.bf16.mxu0 %v3262
    %3961 = vmatpush1.bf16.msra.mxu0 %v3261
    %3962 = vmatprep.subr.bf16.mxu0 %v3266
    %3963 = vmatpush1.bf16.msra.mxu0 %v3265
    %3964 = vmatprep.subr.bf16.mxu0 %v3270
    %3965 = vmatpush1.bf16.msra.mxu0 %v3269
    %3966 = vmatprep.subr.bf16.mxu0 %v3274
    %3967 = vmatpush1.bf16.msra.mxu0 %v3273
    %3968 = vmatprep.subr.bf16.mxu0 0
    %3969 = vmatpush1.bf16.msra.mxu0 0
    %3970 = vmatprep.subr.bf16.mxu0 0
    %3971 = vmatpush1.bf16.msra.mxu0 0
    %3972 = vmatprep.subr.bf16.mxu0 0
    %3973 = vmatpush1.bf16.msra.mxu0 0
    %3974 = vmatprep.subr.bf16.mxu0 0
    %3975 = vmatpush1.bf16.msra.mxu0 0
    %3976 = vmatprep.subr.bf16.mxu0 0
    %3977 = vmatpush1.bf16.msra.mxu0 0
    %3978 = vmatprep.subr.bf16.mxu0 0
    %3979 = vmatpush1.bf16.msra.mxu0 0
    %3980 = vmatprep.subr.bf16.mxu0 0
    %3981 = vmatpush1.bf16.msra.mxu0 0
    %3982 = vmatprep.subr.bf16.mxu0 0
    %3983 = vmatpush1.bf16.msra.mxu0 0
    %3984 = vmatprep.mubr.bf16.mxu0 0
    %3985 = vmatmul.mubr.bf16.gmra.mrb[0].mxu0 %v3933
    %v3986 = vpop.f32.mrb[0].mxu0
    %v3987 = vadd.f32 0.0, %v3986
    %v3988 = vpop.f32.mrb[0].mxu0
    %v3989 = vadd.f32 0.0, %v3988
    %v3990 = vpop.f32.mrb[0].mxu0
    %v3991 = vadd.f32 0.0, %v3990
    %v3992 = vpop.f32.mrb[0].mxu0
    %v3993 = vadd.f32 0.0, %v3992
    %3994 = vdwg.mxu0
    %3995 = vmatprep.subr.bf16.mxu0 %v3248
    %3996 = vmatpush1.bf16.msra.mxu0 %v3247
    %3997 = vmatprep.subr.bf16.mxu0 %v3252
    %3998 = vmatpush1.bf16.msra.mxu0 %v3251
    %3999 = vmatprep.subr.bf16.mxu0 %v3256
    %4000 = vmatpush1.bf16.msra.mxu0 %v3255
    %4001 = vmatprep.subr.bf16.mxu0 %v3260
    %4002 = vmatpush1.bf16.msra.mxu0 %v3259
    %4003 = vmatprep.subr.bf16.mxu0 %v3264
    %4004 = vmatpush1.bf16.msra.mxu0 %v3263
    %4005 = vmatprep.subr.bf16.mxu0 %v3268
    %4006 = vmatpush1.bf16.msra.mxu0 %v3267
    %4007 = vmatprep.subr.bf16.mxu0 %v3272
    %4008 = vmatpush1.bf16.msra.mxu0 %v3271
    %4009 = vmatprep.subr.bf16.mxu0 %v3276
    %4010 = vmatpush1.bf16.msra.mxu0 %v3275
    %4011 = vmatprep.subr.bf16.mxu0 0
    %4012 = vmatpush1.bf16.msra.mxu0 0
    %4013 = vmatprep.subr.bf16.mxu0 0
    %4014 = vmatpush1.bf16.msra.mxu0 0
    %4015 = vmatprep.subr.bf16.mxu0 0
    %4016 = vmatpush1.bf16.msra.mxu0 0
    %4017 = vmatprep.subr.bf16.mxu0 0
    %4018 = vmatpush1.bf16.msra.mxu0 0
    %4019 = vmatprep.subr.bf16.mxu0 0
    %4020 = vmatpush1.bf16.msra.mxu0 0
    %4021 = vmatprep.subr.bf16.mxu0 0
    %4022 = vmatpush1.bf16.msra.mxu0 0
    %4023 = vmatprep.subr.bf16.mxu0 0
    %4024 = vmatpush1.bf16.msra.mxu0 0
    %4025 = vmatprep.subr.bf16.mxu0 0
    %4026 = vmatpush1.bf16.msra.mxu0 0
    %4027 = vmatprep.mubr.bf16.mxu0 0
    %4028 = vmatmul.mubr.bf16.gmra.mrb[0].mxu0 %v3933
    %v4029 = vpop.f32.mrb[0].mxu0
    %v4030 = vadd.f32 0.0, %v4029
    %v4031 = vpop.f32.mrb[0].mxu0
    %v4032 = vadd.f32 0.0, %v4031
    %v4033 = vpop.f32.mrb[0].mxu0
    %v4034 = vadd.f32 0.0, %v4033
    %v4035 = vpop.f32.mrb[0].mxu0
    %v4036 = vadd.f32 0.0, %v4035
    %4037 = vdwg.mxu0
    %v4038 = vadd.f32 %v3944, %v3987
    %v4039 = vadd.f32 %v3945, %v3989
    %v4040 = vadd.f32 %v3946, %v4030
    %v4041 = vadd.f32 %v3947, %v4032
    %v4042 = vadd.f32 %v3948, %v3991
    %v4043 = vadd.f32 %v3949, %v3993
    %v4044 = vadd.f32 %v3950, %v4034
    %v4045 = vadd.f32 %v3951, %v4036
    %v4046 = vxor.u32 %v4038, 2147483648
    %v4047 = vxor.u32 %v4042, 2147483648
    %v4048 = vmul.f32 %v4046, 1.442695
    %v4049 = vpow.pop %v4048
    %v4050 = vmul.f32 %v4047, 1.442695
    %v4051 = vpow.pop %v4050
    %v4052 = vadd.f32 %v4049, 1.0
    %v4053 = vadd.f32 %v4051, 1.0
    %v4054 = vrcp.pop %v4052
    %v4055 = vmul.f32 1.0, %v4054
    %v4056 = vrcp.pop %v4053
    %v4057 = vmul.f32 1.0, %v4056
    %v4058 = vxor.u32 %v4039, 2147483648
    %v4059 = vxor.u32 %v4043, 2147483648
    %v4060 = vmul.f32 %v4058, 1.442695
    %v4061 = vpow.pop %v4060
    %v4062 = vmul.f32 %v4059, 1.442695
    %v4063 = vpow.pop %v4062
    %v4064 = vadd.f32 %v4061, 1.0
    %v4065 = vadd.f32 %v4063, 1.0
    %v4066 = vrcp.pop %v4064
    %v4067 = vmul.f32 1.0, %v4066
    %v4068 = vrcp.pop %v4065
    %v4069 = vmul.f32 1.0, %v4068
    %v4070 = vtanh.pop %v4040
    %v4071 = vtanh.pop %v4044
    %v4072 = vxor.u32 %v4041, 2147483648
    %v4073 = vxor.u32 %v4045, 2147483648
    %v4074 = vmul.f32 %v4072, 1.442695
    %v4075 = vpow.pop %v4074
    %v4076 = vmul.f32 %v4073, 1.442695
    %v4077 = vpow.pop %v4076
    %v4078 = vadd.f32 %v4075, 1.0
    %v4079 = vadd.f32 %v4077, 1.0
    %v4080 = vrcp.pop %v4078
    %v4081 = vmul.f32 1.0, %v4080
    %v4082 = vrcp.pop %v4079
    %v4083 = vmul.f32 1.0, %v4082
    %v4084 = vmul.f32 %v4067, %v3927
    %v4085 = vmul.f32 %v4069, %v3928
    %v4086 = vmul.f32 %v4055, %v4070
    %v4087 = vmul.f32 %v4057, %v4071
    %v4088 = vadd.f32 %v4084, %v4086
    %v4089 = vadd.f32 %v4085, %v4087
    %v4090 = vtanh.pop %v4088
    %v4091 = vtanh.pop %v4089
    %v4092 = vmul.f32 %v4081, %v4090
    %v4093 = vmul.f32 %v4083, %v4091
    %v4094 = vpack.c.bf16 %v4093, %v4092
    %v4096 = vunpack.c.l.b16 %v4094
    %v4097 = vunpack.c.h.b16 %v4094
    %v4098 = vpack.c.b16 %v4096, %v4096
    %v4099 = vpack.c.b16 %v4097, %v4097
    %s4102 = scalar_lea.vmem %s14, 32
    %4103 = vst [vmem:[%s4102] sm:$0xf] %v4098
    %4104 = vst [vmem:[%s4102 + $0x4] sm:$0xf] %v4099
    %v4105 = vld [vmem:[%s1946] sm:$0xff]
    %v4106 = vld [vmem:[%s1946 + $0x8] sm:$0xff]
    %v4107 = vld [vmem:[%s1946 + $0x10] sm:$0xff]
    %v4108 = vld [vmem:[%s1946 + $0x18] sm:$0xff]
    %v4109 = vld [vmem:[%s1946 + $0x20] sm:$0xff]
    %v4110 = vld [vmem:[%s1946 + $0x28] sm:$0xff]
    %v4111 = vld [vmem:[%s1946 + $0x30] sm:$0xff]
    %v4112 = vld [vmem:[%s1946 + $0x38] sm:$0xff]
    %4113 = vmatprep.subr.bf16.mxu0 %v3246
    %4114 = vmatpush1.bf16.msra.mxu0 %v3245
    %4115 = vmatprep.subr.bf16.mxu0 %v3250
    %4116 = vmatpush1.bf16.msra.mxu0 %v3249
    %4117 = vmatprep.subr.bf16.mxu0 %v3254
    %4118 = vmatpush1.bf16.msra.mxu0 %v3253
    %4119 = vmatprep.subr.bf16.mxu0 %v3258
    %4120 = vmatpush1.bf16.msra.mxu0 %v3257
    %4121 = vmatprep.subr.bf16.mxu0 %v3262
    %4122 = vmatpush1.bf16.msra.mxu0 %v3261
    %4123 = vmatprep.subr.bf16.mxu0 %v3266
    %4124 = vmatpush1.bf16.msra.mxu0 %v3265
    %4125 = vmatprep.subr.bf16.mxu0 %v3270
    %4126 = vmatpush1.bf16.msra.mxu0 %v3269
    %4127 = vmatprep.subr.bf16.mxu0 %v3274
    %4128 = vmatpush1.bf16.msra.mxu0 %v3273
    %4129 = vmatprep.subr.bf16.mxu0 0
    %4130 = vmatpush1.bf16.msra.mxu0 0
    %4131 = vmatprep.subr.bf16.mxu0 0
    %4132 = vmatpush1.bf16.msra.mxu0 0
    %4133 = vmatprep.subr.bf16.mxu0 0
    %4134 = vmatpush1.bf16.msra.mxu0 0
    %4135 = vmatprep.subr.bf16.mxu0 0
    %4136 = vmatpush1.bf16.msra.mxu0 0
    %4137 = vmatprep.subr.bf16.mxu0 0
    %4138 = vmatpush1.bf16.msra.mxu0 0
    %4139 = vmatprep.subr.bf16.mxu0 0
    %4140 = vmatpush1.bf16.msra.mxu0 0
    %4141 = vmatprep.subr.bf16.mxu0 0
    %4142 = vmatpush1.bf16.msra.mxu0 0
    %4143 = vmatprep.subr.bf16.mxu0 0
    %4144 = vmatpush1.bf16.msra.mxu0 0
    %4145 = vmatprep.mubr.bf16.mxu0 0
    %4146 = vmatmul.mubr.bf16.gmra.mrb[0].mxu0 %v4094
    %v4147 = vpop.f32.mrb[0].mxu0
    %v4148 = vadd.f32 0.0, %v4147
    %v4149 = vpop.f32.mrb[0].mxu0
    %v4150 = vadd.f32 0.0, %v4149
    %v4151 = vpop.f32.mrb[0].mxu0
    %v4152 = vadd.f32 0.0, %v4151
    %v4153 = vpop.f32.mrb[0].mxu0
    %v4154 = vadd.f32 0.0, %v4153
    %4155 = vdwg.mxu0
    %4156 = vmatprep.subr.bf16.mxu0 %v3248
    %4157 = vmatpush1.bf16.msra.mxu0 %v3247
    %4158 = vmatprep.subr.bf16.mxu0 %v3252
    %4159 = vmatpush1.bf16.msra.mxu0 %v3251
    %4160 = vmatprep.subr.bf16.mxu0 %v3256
    %4161 = vmatpush1.bf16.msra.mxu0 %v3255
    %4162 = vmatprep.subr.bf16.mxu0 %v3260
    %4163 = vmatpush1.bf16.msra.mxu0 %v3259
    %4164 = vmatprep.subr.bf16.mxu0 %v3264
    %4165 = vmatpush1.bf16.msra.mxu0 %v3263
    %4166 = vmatprep.subr.bf16.mxu0 %v3268
    %4167 = vmatpush1.bf16.msra.mxu0 %v3267
    %4168 = vmatprep.subr.bf16.mxu0 %v3272
    %4169 = vmatpush1.bf16.msra.mxu0 %v3271
    %4170 = vmatprep.subr.bf16.mxu0 %v3276
    %4171 = vmatpush1.bf16.msra.mxu0 %v3275
    %4172 = vmatprep.subr.bf16.mxu0 0
    %4173 = vmatpush1.bf16.msra.mxu0 0
    %4174 = vmatprep.subr.bf16.mxu0 0
    %4175 = vmatpush1.bf16.msra.mxu0 0
    %4176 = vmatprep.subr.bf16.mxu0 0
    %4177 = vmatpush1.bf16.msra.mxu0 0
    %4178 = vmatprep.subr.bf16.mxu0 0
    %4179 = vmatpush1.bf16.msra.mxu0 0
    %4180 = vmatprep.subr.bf16.mxu0 0
    %4181 = vmatpush1.bf16.msra.mxu0 0
    %4182 = vmatprep.subr.bf16.mxu0 0
    %4183 = vmatpush1.bf16.msra.mxu0 0
    %4184 = vmatprep.subr.bf16.mxu0 0
    %4185 = vmatpush1.bf16.msra.mxu0 0
    %4186 = vmatprep.subr.bf16.mxu0 0
    %4187 = vmatpush1.bf16.msra.mxu0 0
    %4188 = vmatprep.mubr.bf16.mxu0 0
    %4189 = vmatmul.mubr.bf16.gmra.mrb[0].mxu0 %v4094
    %v4190 = vpop.f32.mrb[0].mxu0
    %v4191 = vadd.f32 0.0, %v4190
    %v4192 = vpop.f32.mrb[0].mxu0
    %v4193 = vadd.f32 0.0, %v4192
    %v4194 = vpop.f32.mrb[0].mxu0
    %v4195 = vadd.f32 0.0, %v4194
    %v4196 = vpop.f32.mrb[0].mxu0
    %v4197 = vadd.f32 0.0, %v4196
    %4198 = vdwg.mxu0
    %v4199 = vadd.f32 %v4105, %v4148
    %v4200 = vadd.f32 %v4106, %v4150
    %v4201 = vadd.f32 %v4107, %v4191
    %v4202 = vadd.f32 %v4108, %v4193
    %v4203 = vadd.f32 %v4109, %v4152
    %v4204 = vadd.f32 %v4110, %v4154
    %v4205 = vadd.f32 %v4111, %v4195
    %v4206 = vadd.f32 %v4112, %v4197
    %v4207 = vxor.u32 %v4199, 2147483648
    %v4208 = vxor.u32 %v4203, 2147483648
    %v4209 = vmul.f32 %v4207, 1.442695
    %v4210 = vpow.pop %v4209
    %v4211 = vmul.f32 %v4208, 1.442695
    %v4212 = vpow.pop %v4211
    %v4213 = vadd.f32 %v4210, 1.0
    %v4214 = vadd.f32 %v4212, 1.0
    %v4215 = vrcp.pop %v4213
    %v4216 = vmul.f32 1.0, %v4215
    %v4217 = vrcp.pop %v4214
    %v4218 = vmul.f32 1.0, %v4217
    %v4219 = vxor.u32 %v4200, 2147483648
    %v4220 = vxor.u32 %v4204, 2147483648
    %v4221 = vmul.f32 %v4219, 1.442695
    %v4222 = vpow.pop %v4221
    %v4223 = vmul.f32 %v4220, 1.442695
    %v4224 = vpow.pop %v4223
    %v4225 = vadd.f32 %v4222, 1.0
    %v4226 = vadd.f32 %v4224, 1.0
    %v4227 = vrcp.pop %v4225
    %v4228 = vmul.f32 1.0, %v4227
    %v4229 = vrcp.pop %v4226
    %v4230 = vmul.f32 1.0, %v4229
    %v4231 = vtanh.pop %v4201
    %v4232 = vtanh.pop %v4205
    %v4233 = vxor.u32 %v4202, 2147483648
    %v4234 = vxor.u32 %v4206, 2147483648
    %v4235 = vmul.f32 %v4233, 1.442695
    %v4236 = vpow.pop %v4235
    %v4237 = vmul.f32 %v4234, 1.442695
    %v4238 = vpow.pop %v4237
    %v4239 = vadd.f32 %v4236, 1.0
    %v4240 = vadd.f32 %v4238, 1.0
    %v4241 = vrcp.pop %v4239
    %v4242 = vmul.f32 1.0, %v4241
    %v4243 = vrcp.pop %v4240
    %v4244 = vmul.f32 1.0, %v4243
    %v4245 = vmul.f32 %v4228, %v4088
    %v4246 = vmul.f32 %v4230, %v4089
    %v4247 = vmul.f32 %v4216, %v4231
    %v4248 = vmul.f32 %v4218, %v4232
    %v4249 = vadd.f32 %v4245, %v4247
    %v4250 = vadd.f32 %v4246, %v4248
    %v4251 = vtanh.pop %v4249
    %v4252 = vtanh.pop %v4250
    %v4253 = vmul.f32 %v4242, %v4251
    %v4254 = vmul.f32 %v4244, %v4252
    %v4255 = vpack.c.bf16 %v4254, %v4253
    %v4257 = vunpack.c.l.b16 %v4255
    %v4258 = vunpack.c.h.b16 %v4255
    %v4259 = vpack.c.b16 %v4257, %v4257
    %v4260 = vpack.c.b16 %v4258, %v4258
    %s4263 = scalar_lea.vmem %s14, 40
    %4264 = vst [vmem:[%s4263] sm:$0xf] %v4259
    %4265 = vst [vmem:[%s4263 + $0x4] sm:$0xf] %v4260
    %v4266 = vld [vmem:[%s2102] sm:$0xff]
    %v4267 = vld [vmem:[%s2102 + $0x8] sm:$0xff]
    %v4268 = vld [vmem:[%s2102 + $0x10] sm:$0xff]
    %v4269 = vld [vmem:[%s2102 + $0x18] sm:$0xff]
    %v4270 = vld [vmem:[%s2102 + $0x20] sm:$0xff]
    %v4271 = vld [vmem:[%s2102 + $0x28] sm:$0xff]
    %v4272 = vld [vmem:[%s2102 + $0x30] sm:$0xff]
    %v4273 = vld [vmem:[%s2102 + $0x38] sm:$0xff]
    %4274 = vmatprep.subr.bf16.mxu0 %v3246
    %4275 = vmatpush1.bf16.msra.mxu0 %v3245
    %4276 = vmatprep.subr.bf16.mxu0 %v3250
    %4277 = vmatpush1.bf16.msra.mxu0 %v3249
    %4278 = vmatprep.subr.bf16.mxu0 %v3254
    %4279 = vmatpush1.bf16.msra.mxu0 %v3253
    %4280 = vmatprep.subr.bf16.mxu0 %v3258
    %4281 = vmatpush1.bf16.msra.mxu0 %v3257
    %4282 = vmatprep.subr.bf16.mxu0 %v3262
    %4283 = vmatpush1.bf16.msra.mxu0 %v3261
    %4284 = vmatprep.subr.bf16.mxu0 %v3266
    %4285 = vmatpush1.bf16.msra.mxu0 %v3265
    %4286 = vmatprep.subr.bf16.mxu0 %v3270
    %4287 = vmatpush1.bf16.msra.mxu0 %v3269
    %4288 = vmatprep.subr.bf16.mxu0 %v3274
    %4289 = vmatpush1.bf16.msra.mxu0 %v3273
    %4290 = vmatprep.subr.bf16.mxu0 0
    %4291 = vmatpush1.bf16.msra.mxu0 0
    %4292 = vmatprep.subr.bf16.mxu0 0
    %4293 = vmatpush1.bf16.msra.mxu0 0
    %4294 = vmatprep.subr.bf16.mxu0 0
    %4295 = vmatpush1.bf16.msra.mxu0 0
    %4296 = vmatprep.subr.bf16.mxu0 0
    %4297 = vmatpush1.bf16.msra.mxu0 0
    %4298 = vmatprep.subr.bf16.mxu0 0
    %4299 = vmatpush1.bf16.msra.mxu0 0
    %4300 = vmatprep.subr.bf16.mxu0 0
    %4301 = vmatpush1.bf16.msra.mxu0 0
    %4302 = vmatprep.subr.bf16.mxu0 0
    %4303 = vmatpush1.bf16.msra.mxu0 0
    %4304 = vmatprep.subr.bf16.mxu0 0
    %4305 = vmatpush1.bf16.msra.mxu0 0
    %4306 = vmatprep.mubr.bf16.mxu0 0
    %4307 = vmatmul.mubr.bf16.gmra.mrb[0].mxu0 %v4255
    %v4308 = vpop.f32.mrb[0].mxu0
    %v4309 = vadd.f32 0.0, %v4308
    %v4310 = vpop.f32.mrb[0].mxu0
    %v4311 = vadd.f32 0.0, %v4310
    %v4312 = vpop.f32.mrb[0].mxu0
    %v4313 = vadd.f32 0.0, %v4312
    %v4314 = vpop.f32.mrb[0].mxu0
    %v4315 = vadd.f32 0.0, %v4314
    %4316 = vdwg.mxu0
    %4317 = vmatprep.subr.bf16.mxu0 %v3248
    %4318 = vmatpush1.bf16.msra.mxu0 %v3247
    %4319 = vmatprep.subr.bf16.mxu0 %v3252
    %4320 = vmatpush1.bf16.msra.mxu0 %v3251
    %4321 = vmatprep.subr.bf16.mxu0 %v3256
    %4322 = vmatpush1.bf16.msra.mxu0 %v3255
    %4323 = vmatprep.subr.bf16.mxu0 %v3260
    %4324 = vmatpush1.bf16.msra.mxu0 %v3259
    %4325 = vmatprep.subr.bf16.mxu0 %v3264
    %4326 = vmatpush1.bf16.msra.mxu0 %v3263
    %4327 = vmatprep.subr.bf16.mxu0 %v3268
    %4328 = vmatpush1.bf16.msra.mxu0 %v3267
    %4329 = vmatprep.subr.bf16.mxu0 %v3272
    %4330 = vmatpush1.bf16.msra.mxu0 %v3271
    %4331 = vmatprep.subr.bf16.mxu0 %v3276
    %4332 = vmatpush1.bf16.msra.mxu0 %v3275
    %4333 = vmatprep.subr.bf16.mxu0 0
    %4334 = vmatpush1.bf16.msra.mxu0 0
    %4335 = vmatprep.subr.bf16.mxu0 0
    %4336 = vmatpush1.bf16.msra.mxu0 0
    %4337 = vmatprep.subr.bf16.mxu0 0
    %4338 = vmatpush1.bf16.msra.mxu0 0
    %4339 = vmatprep.subr.bf16.mxu0 0
    %4340 = vmatpush1.bf16.msra.mxu0 0
    %4341 = vmatprep.subr.bf16.mxu0 0
    %4342 = vmatpush1.bf16.msra.mxu0 0
    %4343 = vmatprep.subr.bf16.mxu0 0
    %4344 = vmatpush1.bf16.msra.mxu0 0
    %4345 = vmatprep.subr.bf16.mxu0 0
    %4346 = vmatpush1.bf16.msra.mxu0 0
    %4347 = vmatprep.subr.bf16.mxu0 0
    %4348 = vmatpush1.bf16.msra.mxu0 0
    %4349 = vmatprep.mubr.bf16.mxu0 0
    %4350 = vmatmul.mubr.bf16.gmra.mrb[0].mxu0 %v4255
    %v4351 = vpop.f32.mrb[0].mxu0
    %v4352 = vadd.f32 0.0, %v4351
    %v4353 = vpop.f32.mrb[0].mxu0
    %v4354 = vadd.f32 0.0, %v4353
    %v4355 = vpop.f32.mrb[0].mxu0
    %v4356 = vadd.f32 0.0, %v4355
    %v4357 = vpop.f32.mrb[0].mxu0
    %v4358 = vadd.f32 0.0, %v4357
    %4359 = vdwg.mxu0
    %v4360 = vadd.f32 %v4266, %v4309
    %v4361 = vadd.f32 %v4267, %v4311
    %v4362 = vadd.f32 %v4268, %v4352
    %v4363 = vadd.f32 %v4269, %v4354
    %v4364 = vadd.f32 %v4270, %v4313
    %v4365 = vadd.f32 %v4271, %v4315
    %v4366 = vadd.f32 %v4272, %v4356
    %v4367 = vadd.f32 %v4273, %v4358
    %v4368 = vxor.u32 %v4360, 2147483648
    %v4369 = vxor.u32 %v4364, 2147483648
    %v4370 = vmul.f32 %v4368, 1.442695
    %v4371 = vpow.pop %v4370
    %v4372 = vmul.f32 %v4369, 1.442695
    %v4373 = vpow.pop %v4372
    %v4374 = vadd.f32 %v4371, 1.0
    %v4375 = vadd.f32 %v4373, 1.0
    %v4376 = vrcp.pop %v4374
    %v4377 = vmul.f32 1.0, %v4376
    %v4378 = vrcp.pop %v4375
    %v4379 = vmul.f32 1.0, %v4378
    %v4380 = vxor.u32 %v4361, 2147483648
    %v4381 = vxor.u32 %v4365, 2147483648
    %v4382 = vmul.f32 %v4380, 1.442695
    %v4383 = vpow.pop %v4382
    %v4384 = vmul.f32 %v4381, 1.442695
    %v4385 = vpow.pop %v4384
    %v4386 = vadd.f32 %v4383, 1.0
    %v4387 = vadd.f32 %v4385, 1.0
    %v4388 = vrcp.pop %v4386
    %v4389 = vmul.f32 1.0, %v4388
    %v4390 = vrcp.pop %v4387
    %v4391 = vmul.f32 1.0, %v4390
    %v4392 = vtanh.pop %v4362
    %v4393 = vtanh.pop %v4366
    %v4394 = vxor.u32 %v4363, 2147483648
    %v4395 = vxor.u32 %v4367, 2147483648
    %v4396 = vmul.f32 %v4394, 1.442695
    %v4397 = vpow.pop %v4396
    %v4398 = vmul.f32 %v4395, 1.442695
    %v4399 = vpow.pop %v4398
    %v4400 = vadd.f32 %v4397, 1.0
    %v4401 = vadd.f32 %v4399, 1.0
    %v4402 = vrcp.pop %v4400
    %v4403 = vmul.f32 1.0, %v4402
    %v4404 = vrcp.pop %v4401
    %v4405 = vmul.f32 1.0, %v4404
    %v4406 = vmul.f32 %v4389, %v4249
    %v4407 = vmul.f32 %v4391, %v4250
    %v4408 = vmul.f32 %v4377, %v4392
    %v4409 = vmul.f32 %v4379, %v4393
    %v4410 = vadd.f32 %v4406, %v4408
    %v4411 = vadd.f32 %v4407, %v4409
    %v4412 = vtanh.pop %v4410
    %v4413 = vtanh.pop %v4411
    %v4414 = vmul.f32 %v4403, %v4412
    %v4415 = vmul.f32 %v4405, %v4413
    %v4416 = vpack.c.bf16 %v4415, %v4414
    %v4418 = vunpack.c.l.b16 %v4416
    %v4419 = vunpack.c.h.b16 %v4416
    %v4420 = vpack.c.b16 %v4418, %v4418
    %v4421 = vpack.c.b16 %v4419, %v4419
    %s4424 = scalar_lea.vmem %s14, 48
    %4425 = vst [vmem:[%s4424] sm:$0xf] %v4420
    %4426 = vst [vmem:[%s4424 + $0x4] sm:$0xf] %v4421
    %v4427 = vld [vmem:[%s2258] sm:$0xff]
    %v4428 = vld [vmem:[%s2258 + $0x8] sm:$0xff]
    %v4429 = vld [vmem:[%s2258 + $0x10] sm:$0xff]
    %v4430 = vld [vmem:[%s2258 + $0x18] sm:$0xff]
    %v4431 = vld [vmem:[%s2258 + $0x20] sm:$0xff]
    %v4432 = vld [vmem:[%s2258 + $0x28] sm:$0xff]
    %v4433 = vld [vmem:[%s2258 + $0x30] sm:$0xff]
    %v4434 = vld [vmem:[%s2258 + $0x38] sm:$0xff]
    %4435 = vmatprep.subr.bf16.mxu0 %v3246
    %4436 = vmatpush1.bf16.msra.mxu0 %v3245
    %4437 = vmatprep.subr.bf16.mxu0 %v3250
    %4438 = vmatpush1.bf16.msra.mxu0 %v3249
    %4439 = vmatprep.subr.bf16.mxu0 %v3254
    %4440 = vmatpush1.bf16.msra.mxu0 %v3253
    %4441 = vmatprep.subr.bf16.mxu0 %v3258
    %4442 = vmatpush1.bf16.msra.mxu0 %v3257
    %4443 = vmatprep.subr.bf16.mxu0 %v3262
    %4444 = vmatpush1.bf16.msra.mxu0 %v3261
    %4445 = vmatprep.subr.bf16.mxu0 %v3266
    %4446 = vmatpush1.bf16.msra.mxu0 %v3265
    %4447 = vmatprep.subr.bf16.mxu0 %v3270
    %4448 = vmatpush1.bf16.msra.mxu0 %v3269
    %4449 = vmatprep.subr.bf16.mxu0 %v3274
    %4450 = vmatpush1.bf16.msra.mxu0 %v3273
    %4451 = vmatprep.subr.bf16.mxu0 0
    %4452 = vmatpush1.bf16.msra.mxu0 0
    %4453 = vmatprep.subr.bf16.mxu0 0
    %4454 = vmatpush1.bf16.msra.mxu0 0
    %4455 = vmatprep.subr.bf16.mxu0 0
    %4456 = vmatpush1.bf16.msra.mxu0 0
    %4457 = vmatprep.subr.bf16.mxu0 0
    %4458 = vmatpush1.bf16.msra.mxu0 0
    %4459 = vmatprep.subr.bf16.mxu0 0
    %4460 = vmatpush1.bf16.msra.mxu0 0
    %4461 = vmatprep.subr.bf16.mxu0 0
    %4462 = vmatpush1.bf16.msra.mxu0 0
    %4463 = vmatprep.subr.bf16.mxu0 0
    %4464 = vmatpush1.bf16.msra.mxu0 0
    %4465 = vmatprep.subr.bf16.mxu0 0
    %4466 = vmatpush1.bf16.msra.mxu0 0
    %4467 = vmatprep.mubr.bf16.mxu0 0
    %4468 = vmatmul.mubr.bf16.gmra.mrb[0].mxu0 %v4416
    %v4469 = vpop.f32.mrb[0].mxu0
    %v4470 = vadd.f32 0.0, %v4469
    %v4471 = vpop.f32.mrb[0].mxu0
    %v4472 = vadd.f32 0.0, %v4471
    %v4473 = vpop.f32.mrb[0].mxu0
    %v4474 = vadd.f32 0.0, %v4473
    %v4475 = vpop.f32.mrb[0].mxu0
    %v4476 = vadd.f32 0.0, %v4475
    %4477 = vdwg.mxu0
    %4478 = vmatprep.subr.bf16.mxu0 %v3248
    %4479 = vmatpush1.bf16.msra.mxu0 %v3247
    %4480 = vmatprep.subr.bf16.mxu0 %v3252
    %4481 = vmatpush1.bf16.msra.mxu0 %v3251
    %4482 = vmatprep.subr.bf16.mxu0 %v3256
    %4483 = vmatpush1.bf16.msra.mxu0 %v3255
    %4484 = vmatprep.subr.bf16.mxu0 %v3260
    %4485 = vmatpush1.bf16.msra.mxu0 %v3259
    %4486 = vmatprep.subr.bf16.mxu0 %v3264
    %4487 = vmatpush1.bf16.msra.mxu0 %v3263
    %4488 = vmatprep.subr.bf16.mxu0 %v3268
    %4489 = vmatpush1.bf16.msra.mxu0 %v3267
    %4490 = vmatprep.subr.bf16.mxu0 %v3272
    %4491 = vmatpush1.bf16.msra.mxu0 %v3271
    %4492 = vmatprep.subr.bf16.mxu0 %v3276
    %4493 = vmatpush1.bf16.msra.mxu0 %v3275
    %4494 = vmatprep.subr.bf16.mxu0 0
    %4495 = vmatpush1.bf16.msra.mxu0 0
    %4496 = vmatprep.subr.bf16.mxu0 0
    %4497 = vmatpush1.bf16.msra.mxu0 0
    %4498 = vmatprep.subr.bf16.mxu0 0
    %4499 = vmatpush1.bf16.msra.mxu0 0
    %4500 = vmatprep.subr.bf16.mxu0 0
    %4501 = vmatpush1.bf16.msra.mxu0 0
    %4502 = vmatprep.subr.bf16.mxu0 0
    %4503 = vmatpush1.bf16.msra.mxu0 0
    %4504 = vmatprep.subr.bf16.mxu0 0
    %4505 = vmatpush1.bf16.msra.mxu0 0
    %4506 = vmatprep.subr.bf16.mxu0 0
    %4507 = vmatpush1.bf16.msra.mxu0 0
    %4508 = vmatprep.subr.bf16.mxu0 0
    %4509 = vmatpush1.bf16.msra.mxu0 0
    %4510 = vmatprep.mubr.bf16.mxu0 0
    %4511 = vmatmul.mubr.bf16.gmra.mrb[0].mxu0 %v4416
    %v4512 = vpop.f32.mrb[0].mxu0
    %v4513 = vadd.f32 0.0, %v4512
    %v4514 = vpop.f32.mrb[0].mxu0
    %v4515 = vadd.f32 0.0, %v4514
    %v4516 = vpop.f32.mrb[0].mxu0
    %v4517 = vadd.f32 0.0, %v4516
    %v4518 = vpop.f32.mrb[0].mxu0
    %v4519 = vadd.f32 0.0, %v4518
    %4520 = vdwg.mxu0
    %v4521 = vadd.f32 %v4427, %v4470
    %v4522 = vadd.f32 %v4428, %v4472
    %v4523 = vadd.f32 %v4429, %v4513
    %v4524 = vadd.f32 %v4430, %v4515
    %v4525 = vadd.f32 %v4431, %v4474
    %v4526 = vadd.f32 %v4432, %v4476
    %v4527 = vadd.f32 %v4433, %v4517
    %v4528 = vadd.f32 %v4434, %v4519
    %v4529 = vxor.u32 %v4521, 2147483648
    %v4530 = vxor.u32 %v4525, 2147483648
    %v4531 = vmul.f32 %v4529, 1.442695
    %v4532 = vpow.pop %v4531
    %v4533 = vmul.f32 %v4530, 1.442695
    %v4534 = vpow.pop %v4533
    %v4535 = vadd.f32 %v4532, 1.0
    %v4536 = vadd.f32 %v4534, 1.0
    %v4537 = vrcp.pop %v4535
    %v4538 = vmul.f32 1.0, %v4537
    %v4539 = vrcp.pop %v4536
    %v4540 = vmul.f32 1.0, %v4539
    %v4541 = vxor.u32 %v4522, 2147483648
    %v4542 = vxor.u32 %v4526, 2147483648
    %v4543 = vmul.f32 %v4541, 1.442695
    %v4544 = vpow.pop %v4543
    %v4545 = vmul.f32 %v4542, 1.442695
    %v4546 = vpow.pop %v4545
    %v4547 = vadd.f32 %v4544, 1.0
    %v4548 = vadd.f32 %v4546, 1.0
    %v4549 = vrcp.pop %v4547
    %v4550 = vmul.f32 1.0, %v4549
    %v4551 = vrcp.pop %v4548
    %v4552 = vmul.f32 1.0, %v4551
    %v4553 = vtanh.pop %v4523
    %v4554 = vtanh.pop %v4527
    %v4555 = vxor.u32 %v4524, 2147483648
    %v4556 = vxor.u32 %v4528, 2147483648
    %v4557 = vmul.f32 %v4555, 1.442695
    %v4558 = vpow.pop %v4557
    %v4559 = vmul.f32 %v4556, 1.442695
    %v4560 = vpow.pop %v4559
    %v4561 = vadd.f32 %v4558, 1.0
    %v4562 = vadd.f32 %v4560, 1.0
    %v4563 = vrcp.pop %v4561
    %v4564 = vmul.f32 1.0, %v4563
    %v4565 = vrcp.pop %v4562
    %v4566 = vmul.f32 1.0, %v4565
    %v4567 = vmul.f32 %v4550, %v4410
    %v4568 = vmul.f32 %v4552, %v4411
    %v4569 = vmul.f32 %v4538, %v4553
    %v4570 = vmul.f32 %v4540, %v4554
    %v4571 = vadd.f32 %v4567, %v4569
    %v4572 = vadd.f32 %v4568, %v4570
    %v4573 = vtanh.pop %v4571
    %v4574 = vtanh.pop %v4572
    %v4575 = vmul.f32 %v4564, %v4573
    %v4576 = vmul.f32 %v4566, %v4574
    %v4577 = vpack.c.bf16 %v4576, %v4575
    %v4579 = vunpack.c.l.b16 %v4577
    %v4580 = vunpack.c.h.b16 %v4577
    %v4581 = vpack.c.b16 %v4579, %v4579
    %v4582 = vpack.c.b16 %v4580, %v4580
    %s4585 = scalar_lea.vmem %s14, 56
    %4586 = vst [vmem:[%s4585] sm:$0xf] %v4581
    %4587 = vst [vmem:[%s4585 + $0x4] sm:$0xf] %v4582
    %v4588 = vld [vmem:[%s2414] sm:$0xff]
    %v4589 = vld [vmem:[%s2414 + $0x8] sm:$0xff]
    %v4590 = vld [vmem:[%s2414 + $0x10] sm:$0xff]
    %v4591 = vld [vmem:[%s2414 + $0x18] sm:$0xff]
    %v4592 = vld [vmem:[%s2414 + $0x20] sm:$0xff]
    %v4593 = vld [vmem:[%s2414 + $0x28] sm:$0xff]
    %v4594 = vld [vmem:[%s2414 + $0x30] sm:$0xff]
    %v4595 = vld [vmem:[%s2414 + $0x38] sm:$0xff]
    %4596 = vmatprep.subr.bf16.mxu0 %v3246
    %4597 = vmatpush1.bf16.msra.mxu0 %v3245
    %4598 = vmatprep.subr.bf16.mxu0 %v3250
    %4599 = vmatpush1.bf16.msra.mxu0 %v3249
    %4600 = vmatprep.subr.bf16.mxu0 %v3254
    %4601 = vmatpush1.bf16.msra.mxu0 %v3253
    %4602 = vmatprep.subr.bf16.mxu0 %v3258
    %4603 = vmatpush1.bf16.msra.mxu0 %v3257
    %4604 = vmatprep.subr.bf16.mxu0 %v3262
    %4605 = vmatpush1.bf16.msra.mxu0 %v3261
    %4606 = vmatprep.subr.bf16.mxu0 %v3266
    %4607 = vmatpush1.bf16.msra.mxu0 %v3265
    %4608 = vmatprep.subr.bf16.mxu0 %v3270
    %4609 = vmatpush1.bf16.msra.mxu0 %v3269
    %4610 = vmatprep.subr.bf16.mxu0 %v3274
    %4611 = vmatpush1.bf16.msra.mxu0 %v3273
    %4612 = vmatprep.subr.bf16.mxu0 0
    %4613 = vmatpush1.bf16.msra.mxu0 0
    %4614 = vmatprep.subr.bf16.mxu0 0
    %4615 = vmatpush1.bf16.msra.mxu0 0
    %4616 = vmatprep.subr.bf16.mxu0 0
    %4617 = vmatpush1.bf16.msra.mxu0 0
    %4618 = vmatprep.subr.bf16.mxu0 0
    %4619 = vmatpush1.bf16.msra.mxu0 0
    %4620 = vmatprep.subr.bf16.mxu0 0
    %4621 = vmatpush1.bf16.msra.mxu0 0
    %4622 = vmatprep.subr.bf16.mxu0 0
    %4623 = vmatpush1.bf16.msra.mxu0 0
    %4624 = vmatprep.subr.bf16.mxu0 0
    %4625 = vmatpush1.bf16.msra.mxu0 0
    %4626 = vmatprep.subr.bf16.mxu0 0
    %4627 = vmatpush1.bf16.msra.mxu0 0
    %4628 = vmatprep.mubr.bf16.mxu0 0
    %4629 = vmatmul.mubr.bf16.gmra.mrb[0].mxu0 %v4577
    %v4630 = vpop.f32.mrb[0].mxu0
    %v4631 = vadd.f32 0.0, %v4630
    %v4632 = vpop.f32.mrb[0].mxu0
    %v4633 = vadd.f32 0.0, %v4632
    %v4634 = vpop.f32.mrb[0].mxu0
    %v4635 = vadd.f32 0.0, %v4634
    %v4636 = vpop.f32.mrb[0].mxu0
    %v4637 = vadd.f32 0.0, %v4636
    %4638 = vdwg.mxu0
    %4639 = vmatprep.subr.bf16.mxu0 %v3248
    %4640 = vmatpush1.bf16.msra.mxu0 %v3247
    %4641 = vmatprep.subr.bf16.mxu0 %v3252
    %4642 = vmatpush1.bf16.msra.mxu0 %v3251
    %4643 = vmatprep.subr.bf16.mxu0 %v3256
    %4644 = vmatpush1.bf16.msra.mxu0 %v3255
    %4645 = vmatprep.subr.bf16.mxu0 %v3260
    %4646 = vmatpush1.bf16.msra.mxu0 %v3259
    %4647 = vmatprep.subr.bf16.mxu0 %v3264
    %4648 = vmatpush1.bf16.msra.mxu0 %v3263
    %4649 = vmatprep.subr.bf16.mxu0 %v3268
    %4650 = vmatpush1.bf16.msra.mxu0 %v3267
    %4651 = vmatprep.subr.bf16.mxu0 %v3272
    %4652 = vmatpush1.bf16.msra.mxu0 %v3271
    %4653 = vmatprep.subr.bf16.mxu0 %v3276
    %4654 = vmatpush1.bf16.msra.mxu0 %v3275
    %4655 = vmatprep.subr.bf16.mxu0 0
    %4656 = vmatpush1.bf16.msra.mxu0 0
    %4657 = vmatprep.subr.bf16.mxu0 0
    %4658 = vmatpush1.bf16.msra.mxu0 0
    %4659 = vmatprep.subr.bf16.mxu0 0
    %4660 = vmatpush1.bf16.msra.mxu0 0
    %4661 = vmatprep.subr.bf16.mxu0 0
    %4662 = vmatpush1.bf16.msra.mxu0 0
    %4663 = vmatprep.subr.bf16.mxu0 0
    %4664 = vmatpush1.bf16.msra.mxu0 0
    %4665 = vmatprep.subr.bf16.mxu0 0
    %4666 = vmatpush1.bf16.msra.mxu0 0
    %4667 = vmatprep.subr.bf16.mxu0 0
    %4668 = vmatpush1.bf16.msra.mxu0 0
    %4669 = vmatprep.subr.bf16.mxu0 0
    %4670 = vmatpush1.bf16.msra.mxu0 0
    %4671 = vmatprep.mubr.bf16.mxu0 0
    %4672 = vmatmul.mubr.bf16.gmra.mrb[0].mxu0 %v4577
    %v4673 = vpop.f32.mrb[0].mxu0
    %v4674 = vadd.f32 0.0, %v4673
    %v4675 = vpop.f32.mrb[0].mxu0
    %v4676 = vadd.f32 0.0, %v4675
    %v4677 = vpop.f32.mrb[0].mxu0
    %v4678 = vadd.f32 0.0, %v4677
    %v4679 = vpop.f32.mrb[0].mxu0
    %v4680 = vadd.f32 0.0, %v4679
    %4681 = vdwg.mxu0
    %v4682 = vadd.f32 %v4588, %v4631
    %v4683 = vadd.f32 %v4589, %v4633
    %v4684 = vadd.f32 %v4590, %v4674
    %v4685 = vadd.f32 %v4591, %v4676
    %v4686 = vadd.f32 %v4592, %v4635
    %v4687 = vadd.f32 %v4593, %v4637
    %v4688 = vadd.f32 %v4594, %v4678
    %v4689 = vadd.f32 %v4595, %v4680
    %v4690 = vxor.u32 %v4682, 2147483648
    %v4691 = vxor.u32 %v4686, 2147483648
    %v4692 = vmul.f32 %v4690, 1.442695
    %v4693 = vpow.pop %v4692
    %v4694 = vmul.f32 %v4691, 1.442695
    %v4695 = vpow.pop %v4694
    %v4696 = vadd.f32 %v4693, 1.0
    %v4697 = vadd.f32 %v4695, 1.0
    %v4698 = vrcp.pop %v4696
    %v4699 = vmul.f32 1.0, %v4698
    %v4700 = vrcp.pop %v4697
    %v4701 = vmul.f32 1.0, %v4700
    %v4702 = vxor.u32 %v4683, 2147483648
    %v4703 = vxor.u32 %v4687, 2147483648
    %v4704 = vmul.f32 %v4702, 1.442695
    %v4705 = vpow.pop %v4704
    %v4706 = vmul.f32 %v4703, 1.442695
    %v4707 = vpow.pop %v4706
    %v4708 = vadd.f32 %v4705, 1.0
    %v4709 = vadd.f32 %v4707, 1.0
    %v4710 = vrcp.pop %v4708
    %v4711 = vmul.f32 1.0, %v4710
    %v4712 = vrcp.pop %v4709
    %v4713 = vmul.f32 1.0, %v4712
    %v4714 = vtanh.pop %v4684
    %v4715 = vtanh.pop %v4688
    %v4716 = vxor.u32 %v4685, 2147483648
    %v4717 = vxor.u32 %v4689, 2147483648
    %v4718 = vmul.f32 %v4716, 1.442695
    %v4719 = vpow.pop %v4718
    %v4720 = vmul.f32 %v4717, 1.442695
    %v4721 = vpow.pop %v4720
    %v4722 = vadd.f32 %v4719, 1.0
    %v4723 = vadd.f32 %v4721, 1.0
    %v4724 = vrcp.pop %v4722
    %v4725 = vmul.f32 1.0, %v4724
    %v4726 = vrcp.pop %v4723
    %v4727 = vmul.f32 1.0, %v4726
    %v4728 = vmul.f32 %v4711, %v4571
    %v4729 = vmul.f32 %v4713, %v4572
    %v4730 = vmul.f32 %v4699, %v4714
    %v4731 = vmul.f32 %v4701, %v4715
    %v4732 = vadd.f32 %v4728, %v4730
    %v4733 = vadd.f32 %v4729, %v4731
    %v4734 = vtanh.pop %v4732
    %v4735 = vtanh.pop %v4733
    %v4736 = vmul.f32 %v4725, %v4734
    %v4737 = vmul.f32 %v4727, %v4735
    %v4738 = vpack.c.bf16 %v4737, %v4736
    %v4740 = vunpack.c.l.b16 %v4738
    %v4741 = vunpack.c.h.b16 %v4738
    %v4742 = vpack.c.b16 %v4740, %v4740
    %v4743 = vpack.c.b16 %v4741, %v4741
    %s4746 = scalar_lea.vmem %s14, 64
    %4747 = vst [vmem:[%s4746] sm:$0xf] %v4742
    %4748 = vst [vmem:[%s4746 + $0x4] sm:$0xf] %v4743
    // Predicated region
    $region62: #{conv_lstm_forward.2} parent=1 // pred_check
      _
    $region63: #{conv_lstm_forward.2} parent=1 // pred_check_branch
      %4750 = sbr.rel (0) target = $region65
    $region64: #{conv_lstm_forward.2} parent=1 // pred_region
      _
    $region65: #{conv_lstm_forward.2} parent=1 // pred_fallthru
      _
    // Predicated region
    $region66: #{conv_lstm_forward.2} parent=1 // pred_check
      _
    $region67: #{conv_lstm_forward.2} parent=1 // pred_check_branch
      %4752 = sbr.rel (0) target = $region69
    $region68: #{conv_lstm_forward.2} parent=1 // pred_region
      _
    $region69: #{conv_lstm_forward.2} parent=1 // pred_fallthru
      _
    %4753 = vsyncpa [#allocation5], 1

</llo_original>
